<compile_context>
chip_gen: v6e
topology: v6e:2x2x1
jax: 0.10.0
libtpu: 0.0.40
codegen_flags: <defaults>
</compile_context>

<pallas_src>
import jax
import jax.numpy as jnp
from jax import lax
from jax.experimental import pallas as pl
from jax.experimental.pallas import tpu as pltpu

# ---- model dimensions (small, BERT-shaped) ---------------------------------
B, S = 2, 8              # batch, sequence length
H, NH, DH = 32, 2, 16    # hidden, num heads, head dim
F = 64                   # FFN intermediate size
L = 2                    # number of transformer layers
NT = 2                   # number of towers (question, context)
VOCAB = 100
PAD_ID = 0
LN_EPS = 1e-12
NEG_INF = -1e9

# ---- weight-slab layout (shared by the host-side packer and the kernel) ----
WSLAB_W = 3 * NH * DH          # 96: widest row (fused QKV weight / bias)
OFF_WQKV = 0                   # (H, 3*NH*DH) fused QKV projection (Q pre-scaled)
OFF_WO   = OFF_WQKV + H        # (NH*DH, H)  attention output projection
OFF_W1   = OFF_WO + NH * DH    # (H, F)      FFN up-projection
OFF_W2   = OFF_W1 + H          # (F, H)      FFN down-projection
OFF_BQKV = OFF_W2 + F          # per-layer vectors, one slab row each:
OFF_BO   = OFF_BQKV + 1
OFF_LN1G = OFF_BO + 1
OFF_LN1B = OFF_LN1G + 1
OFF_B1   = OFF_LN1B + 1
OFF_B2   = OFF_B1 + 1
OFF_LN2G = OFF_B2 + 1
OFF_LN2B = OFF_LN2G + 1
LAYER_ROWS = OFF_LN2B + 1      # 168 rows per layer
HEAD_ROWS = 2                  # ln0_g, ln0_b
WSLAB_ROWS = HEAD_ROWS + L * LAYER_ROWS   # 338


def _layer_norm(x, g, b):
    mu = jnp.mean(x, axis=-1, keepdims=True)
    var = jnp.mean((x - mu) ** 2, axis=-1, keepdims=True)
    return (x - mu) * lax.rsqrt(var + LN_EPS) * g + b


# ---- the Pallas kernel: both BERT towers in one invocation -----------------
def bert2tower_kernel(x_ref, bias_ref, w_ref, out_ref):
    # NOTE: if this were scaled to real BERT dims (H>=768, S>=128), switch to a
    # grid over (towers, B*S tiles, layers) with bf16 weights streamed per layer
    # and an explicit vmem_limit_bytes (v7x has only 64 MiB physical VMEM).
    for t in range(NT):                           # static unroll over towers
        x2 = x_ref[t]                             # (B*S, H) embedded tokens
        bias = bias_ref[t]                        # (B, S) additive mask (0 / -1e9)
        # (NH*B, 1, S) mask matching the head-major attention batch (idx = h*B+b)
        bias_hb = jnp.concatenate([bias[:, None, :]] * NH, axis=0)

        def vec(r, n):                            # one padded slab row -> (1, n)
            return w_ref[t, r:r + 1, 0:n]

        # embedding LayerNorm
        x2 = _layer_norm(x2, vec(0, H), vec(1, H))

        for l in range(L):                        # static unroll over layers
            base = HEAD_ROWS + l * LAYER_ROWS
            wqkv = w_ref[t, base + OFF_WQKV: base + OFF_WQKV + H, :]          # (H, 96)
            wo   = w_ref[t, base + OFF_WO:   base + OFF_WO + NH * DH, 0:H]    # (32, H)
            w1   = w_ref[t, base + OFF_W1:   base + OFF_W1 + H, 0:F]          # (H, F)
            w2   = w_ref[t, base + OFF_W2:   base + OFF_W2 + F, 0:H]          # (F, H)

            # ---------------- self-attention ----------------
            # fused QKV projection; 1/sqrt(DH) is pre-folded into the Q columns.
            qkv = jnp.dot(x2, wqkv, preferred_element_type=jnp.float32) \
                + vec(base + OFF_BQKV, 3 * NH * DH)

            # fold heads into the batch dim: (NH*B, S, DH), batch index = h*B + b
            q = jnp.concatenate(
                [qkv[:, h * DH:(h + 1) * DH].reshape(B, S, DH)
                 for h in range(NH)], axis=0)
            k = jnp.concatenate(
                [qkv[:, (NH + h) * DH:(NH + h + 1) * DH].reshape(B, S, DH)
                 for h in range(NH)], axis=0)
            v = jnp.concatenate(
                [qkv[:, (2 * NH + h) * DH:(2 * NH + h + 1) * DH].reshape(B, S, DH)
                 for h in range(NH)], axis=0)

            # one batched score einsum / softmax / context einsum per layer
            s = jnp.einsum('bqd,bkd->bqk', q, k, preferred_element_type=jnp.float32)
            s = s + bias_hb
            s = s - jnp.max(s, axis=-1, keepdims=True)
            p = jnp.exp(s)
            p = p / jnp.sum(p, axis=-1, keepdims=True)          # exact softmax
            ctx = jnp.einsum('bqk,bkd->bqd', p, v, preferred_element_type=jnp.float32)

            # heads back onto lanes (head-major columns, matching wo's row order)
            ctx2 = jnp.concatenate(
                [ctx[h * B:(h + 1) * B].reshape(B * S, DH) for h in range(NH)], axis=-1)
            attn = jnp.dot(ctx2, wo, preferred_element_type=jnp.float32) \
                 + vec(base + OFF_BO, H)
            x2 = _layer_norm(x2 + attn, vec(base + OFF_LN1G, H), vec(base + OFF_LN1B, H))

            # ---------------- feed-forward ----------------
            hid = jnp.dot(x2, w1, preferred_element_type=jnp.float32) + vec(base + OFF_B1, F)
            hid = jax.nn.gelu(hid, approximate=True)
            ffn = jnp.dot(hid, w2, preferred_element_type=jnp.float32) + vec(base + OFF_B2, H)
            x2 = _layer_norm(x2 + ffn, vec(base + OFF_LN2G, H), vec(base + OFF_LN2B, H))

        # pooled [CLS] rows: a single strided sublane slice (no per-row concat)
        out_ref[t] = x2.reshape(B, S, H)[:, 0, :]               # (B, H)


def run_towers(x_emb, attn_bias, wslab):
    """x_emb: (NT, B*S, H) f32; attn_bias: (NT, B, S) f32 additive mask;
    wslab: (NT, WSLAB_ROWS, WSLAB_W) f32 packed weights. No grid: whole problem
    (~270 KB) resident in VMEM, 3 input DMAs total, both towers in one call."""
    return pl.pallas_call(
        bert2tower_kernel,
        out_shape=jax.ShapeDtypeStruct((NT, B, H), jnp.float32),
        in_specs=[pl.BlockSpec(memory_space=pltpu.MemorySpace.VMEM)] * 3,
        out_specs=pl.BlockSpec(memory_space=pltpu.MemorySpace.VMEM),
    )(x_emb, attn_bias, wslab)


# ---- parameter construction (deterministic, synthetic) ---------------------
def init_tower_params(key):
    ks = jax.random.split(key, 12)
    std = 0.02
    n = lambda k, shape: jax.random.normal(k, shape, jnp.float32) * std
    return {
        "word_emb": n(ks[0], (VOCAB, H)),
        "pos_emb": n(ks[1], (S, H)),
        "seg_emb": n(ks[2], (2, H)),
        "ln0_g": jnp.ones((H,), jnp.float32),
        "ln0_b": jnp.zeros((H,), jnp.float32),
        "wq": n(ks[3], (L, NH, H, DH)),
        "bq": jnp.zeros((L, NH, DH), jnp.float32),
        "wk": n(ks[4], (L, NH, H, DH)),
        "bk": jnp.zeros((L, NH, DH), jnp.float32),
        "wv": n(ks[5], (L, NH, H, DH)),
        "bv": jnp.zeros((L, NH, DH), jnp.float32),
        "wo": n(ks[6], (L, NH, DH, H)),
        "bo": jnp.zeros((L, H), jnp.float32),
        "ln1_g": jnp.ones((L, H), jnp.float32),
        "ln1_b": jnp.zeros((L, H), jnp.float32),
        "w1": n(ks[7], (L, H, F)),
        "b1": jnp.zeros((L, F), jnp.float32),
        "w2": n(ks[8], (L, F, H)),
        "b2": jnp.zeros((L, H), jnp.float32),
        "ln2_g": jnp.ones((L, H), jnp.float32),
        "ln2_b": jnp.zeros((L, H), jnp.float32),
    }


def pack_tower_slab(p):
    """Pack every weight of one tower into a single (WSLAB_ROWS, WSLAB_W) f32 slab.
    - wq/wk/wv (L,NH,H,DH) -> fused wqkv (L,H,3*NH*DH), head-major columns
    - attention scale 1/sqrt(DH) folded into the Q columns / Q bias
    - wo (L,NH,DH,H) -> (L, NH*DH, H)
    - narrower rows are zero-padded up to WSLAB_W columns."""
    scale = 1.0 / (DH ** 0.5)

    def merge(w):  # (L, NH, H, DH) -> (L, H, NH*DH), head-major columns
        return jnp.transpose(w, (0, 2, 1, 3)).reshape(L, H, NH * DH)

    wqkv = jnp.concatenate([merge(p["wq"]) * scale, merge(p["wk"]),
                            merge(p["wv"])], axis=-1)               # (L, H, 96)
    bqkv = jnp.concatenate([p["bq"].reshape(L, NH * DH) * scale,
                            p["bk"].reshape(L, NH * DH),
                            p["bv"].reshape(L, NH * DH)], axis=-1)  # (L, 96)
    wo = p["wo"].reshape(L, NH * DH, H)                              # (L, 32, H)

    def mat(a):   # 2-D -> zero-padded to (rows, WSLAB_W)
        return jnp.pad(a, ((0, 0), (0, WSLAB_W - a.shape[-1])))

    def row(v):   # 1-D -> (1, WSLAB_W)
        return mat(v.reshape(1, -1))

    blocks = [row(p["ln0_g"]), row(p["ln0_b"])]
    for l in range(L):
        blocks += [
            mat(wqkv[l]), mat(wo[l]), mat(p["w1"][l]), mat(p["w2"][l]),
            row(bqkv[l]), row(p["bo"][l]),
            row(p["ln1_g"][l]), row(p["ln1_b"][l]),
            row(p["b1"][l]), row(p["b2"][l]),
            row(p["ln2_g"][l]), row(p["ln2_b"][l]),
        ]
    slab = jnp.concatenate(blocks, axis=0)
    assert slab.shape == (WSLAB_ROWS, WSLAB_W)
    return slab


# ---- Bert2Tower.forward -----------------------------------------------------
def bert2tower_forward(question_ids, context_ids, q_params, ctx_params):
    # TODO(synk): token-id embedding gather is data-dependent; kept as plain-JAX
    # glue outside the kernel (no clean BlockSpec equivalent at these dims).
    def embed(ids, p):
        segments = jnp.zeros_like(ids)                 # question/context segments
        attn_mask = ids != PAD_ID                      # __get_attn_mask
        x = p["word_emb"][ids] + p["pos_emb"][None] + p["seg_emb"][segments]
        bias = jnp.where(attn_mask, 0.0, NEG_INF).astype(jnp.float32)
        return x.astype(jnp.float32).reshape(B * S, H), bias

    xq, bq_ = embed(question_ids, q_params)
    xc, bc_ = embed(context_ids, ctx_params)
    x_emb = jnp.stack([xq, xc], axis=0)                # (NT, B*S, H)
    bias = jnp.stack([bq_, bc_], axis=0)               # (NT, B, S)
    wslab = jnp.stack([pack_tower_slab(q_params),
                       pack_tower_slab(ctx_params)], axis=0)  # (NT, 338, 96)

    pooled = run_towers(x_emb, bias, wslab)            # (NT, B, H)
    return pooled[0], pooled[1]                        # P (question), Q (context)


# ---- pure-JAX reference (sanity check) --------------------------------------
def tower_ref(ids, p):
    hp = lax.Precision.HIGHEST
    segments = jnp.zeros_like(ids)
    mask = ids != PAD_ID
    x = p["word_emb"][ids] + p["pos_emb"][None] + p["seg_emb"][segments]
    bias = jnp.where(mask, 0.0, NEG_INF)[:, None, :]
    x = _layer_norm(x, p["ln0_g"], p["ln0_b"])
    scale = 1.0 / (DH ** 0.5)
    for l in range(L):
        attn = jnp.zeros_like(x)
        for h in range(NH):
            qh = jnp.einsum("bsh,hd->bsd", x, p["wq"][l, h], precision=hp) + p["bq"][l, h]
            kh = jnp.einsum("bsh,hd->bsd", x, p["wk"][l, h], precision=hp) + p["bk"][l, h]
            vh = jnp.einsum("bsh,hd->bsd", x, p["wv"][l, h], precision=hp) + p["bv"][l, h]
            s = jnp.einsum("bqd,bkd->bqk", qh, kh, precision=hp) * scale + bias
            pw = jax.nn.softmax(s, axis=-1)
            ctx = jnp.einsum("bqk,bkd->bqd", pw, vh, precision=hp)
            attn = attn + jnp.einsum("bsd,dh->bsh", ctx, p["wo"][l, h], precision=hp)
        attn = attn + p["bo"][l]
        x = _layer_norm(x + attn, p["ln1_g"][l], p["ln1_b"][l])
        hid = jax.nn.gelu(jnp.einsum("bsh,hf->bsf", x, p["w1"][l], precision=hp) + p["b1"][l],
                          approximate=True)
        ffn = jnp.einsum("bsf,fh->bsh", hid, p["w2"][l], precision=hp) + p["b2"][l]
        x = _layer_norm(x + ffn, p["ln2_g"][l], p["ln2_b"][l])
    return x[:, 0, :]


if __name__ == "__main__":
    key = jax.random.PRNGKey(0)
    k_qp, k_cp, k_qi, k_ci = jax.random.split(key, 4)

    q_params = init_tower_params(k_qp)
    ctx_params = init_tower_params(k_cp)

    question_ids = jax.random.randint(k_qi, (B, S), 1, VOCAB, dtype=jnp.int32)
    context_ids = jax.random.randint(k_ci, (B, S), 1, VOCAB, dtype=jnp.int32)
    # add some padding to exercise the attention mask (keep position 0 = CLS)
    question_ids = question_ids.at[0, 6:].set(PAD_ID)
    context_ids = context_ids.at[1, 5:].set(PAD_ID)

    P, Q = bert2tower_forward(question_ids, context_ids, q_params, ctx_params)
    P = jax.block_until_ready(P)
    Q = jax.block_until_ready(Q)

    P_ref = tower_ref(question_ids, q_params)
    Q_ref = tower_ref(context_ids, ctx_params)
    assert P.shape == (B, H) and Q.shape == (B, H)
    # Exact softmax normalization in the kernel -> tolerance tightened vs the
    # previous approx-reciprocal version (remaining delta is matmul/LN reorder).
    assert jnp.allclose(P, P_ref, atol=2e-3, rtol=2e-3)
    assert jnp.allclose(Q, Q_ref, atol=2e-3, rtol=2e-3)

    print("KERNEL_OK")
</pallas_src>

<mosaic_0001>
module attributes {stable_mosaic.version = 11 : i64} {
  func.func @bert2tower_kernel(%arg0: memref<2x16x32xf32, #tpu.memory_space<vmem>>, %arg1: memref<2x2x8xf32, #tpu.memory_space<vmem>>, %arg2: memref<2x338x96xf32, #tpu.memory_space<vmem>>, %arg3: memref<2x2x32xf32, #tpu.memory_space<vmem>>) attributes {dimension_semantics = [], scalar_prefetch = 0 : i64, scratch_operands = 0 : i64, tpu.core_type = #tpu.core_type<tc>} {
    %c0 = arith.constant 0 : index
    %c0_0 = arith.constant 0 : index
    %c0_1 = arith.constant 0 : index
    %0 = vector.load %arg0[%c0, %c0_0, %c0_1] : memref<2x16x32xf32, #tpu.memory_space<vmem>>, vector<1x16x32xf32>
    %1 = vector.shape_cast %0 : vector<1x16x32xf32> to vector<16x32xf32>
    %c0_2 = arith.constant 0 : index
    %c0_3 = arith.constant 0 : index
    %c0_4 = arith.constant 0 : index
    %2 = vector.load %arg1[%c0_2, %c0_3, %c0_4] : memref<2x2x8xf32, #tpu.memory_space<vmem>>, vector<1x2x8xf32>
    %3 = vector.shape_cast %2 : vector<1x2x8xf32> to vector<2x8xf32>
    %4 = vector.shape_cast %3 : vector<2x8xf32> to vector<2x1x8xf32>
    %5 = tpu.concatenate %4, %4 in 0 : vector<2x1x8xf32>, vector<2x1x8xf32> -> vector<4x1x8xf32>
    %c0_5 = arith.constant 0 : index
    %c0_6 = arith.constant 0 : index
    %c0_7 = arith.constant 0 : index
    %6 = vector.load %arg2[%c0_5, %c0_6, %c0_7] : memref<2x338x96xf32, #tpu.memory_space<vmem>>, vector<1x1x32xf32>
    %7 = vector.shape_cast %6 : vector<1x1x32xf32> to vector<1x32xf32>
    %c0_8 = arith.constant 0 : index
    %c1 = arith.constant 1 : index
    %c0_9 = arith.constant 0 : index
    %8 = vector.load %arg2[%c0_8, %c1, %c0_9] : memref<2x338x96xf32, #tpu.memory_space<vmem>>, vector<1x1x32xf32>
    %9 = vector.shape_cast %8 : vector<1x1x32xf32> to vector<1x32xf32>
    %cst = arith.constant dense<0.000000e+00> : vector<16xf32>
    %10 = vector.multi_reduction <add>, %1, %cst [1] : vector<16x32xf32> to vector<16xf32>
    %11 = vector.shape_cast %10 : vector<16xf32> to vector<16x1xf32>
    %cst_10 = arith.constant 3.200000e+01 : f32
    %12 = vector.broadcast %cst_10 : f32 to vector<16x1xf32>
    %13 = arith.divf %11, %12 : vector<16x1xf32>
    %14 = vector.broadcast %13 : vector<16x1xf32> to vector<16x32xf32>
    %15 = arith.subf %1, %14 : vector<16x32xf32>
    %16 = arith.mulf %15, %15 : vector<16x32xf32>
    %cst_11 = arith.constant dense<0.000000e+00> : vector<16xf32>
    %17 = vector.multi_reduction <add>, %16, %cst_11 [1] : vector<16x32xf32> to vector<16xf32>
    %18 = vector.shape_cast %17 : vector<16xf32> to vector<16x1xf32>
    %cst_12 = arith.constant 3.200000e+01 : f32
    %19 = vector.broadcast %cst_12 : f32 to vector<16x1xf32>
    %20 = arith.divf %18, %19 : vector<16x1xf32>
    %21 = vector.broadcast %13 : vector<16x1xf32> to vector<16x32xf32>
    %22 = arith.subf %1, %21 : vector<16x32xf32>
    %cst_13 = arith.constant 9.99999996E-13 : f32
    %23 = vector.broadcast %cst_13 : f32 to vector<16x1xf32>
    %24 = arith.addf %20, %23 : vector<16x1xf32>
    %25 = math.rsqrt %24 : vector<16x1xf32>
    %26 = vector.broadcast %25 : vector<16x1xf32> to vector<16x32xf32>
    %27 = arith.mulf %22, %26 : vector<16x32xf32>
    %28 = vector.broadcast %7 : vector<1x32xf32> to vector<16x32xf32>
    %29 = arith.mulf %27, %28 : vector<16x32xf32>
    %30 = vector.broadcast %9 : vector<1x32xf32> to vector<16x32xf32>
    %31 = arith.addf %29, %30 : vector<16x32xf32>
    %c0_14 = arith.constant 0 : index
    %c2 = arith.constant 2 : index
    %c0_15 = arith.constant 0 : index
    %32 = vector.load %arg2[%c0_14, %c2, %c0_15] : memref<2x338x96xf32, #tpu.memory_space<vmem>>, vector<1x32x96xf32>
    %33 = vector.shape_cast %32 : vector<1x32x96xf32> to vector<32x96xf32>
    %c0_16 = arith.constant 0 : index
    %c34 = arith.constant 34 : index
    %c0_17 = arith.constant 0 : index
    %34 = vector.load %arg2[%c0_16, %c34, %c0_17] : memref<2x338x96xf32, #tpu.memory_space<vmem>>, vector<1x32x32xf32>
    %35 = vector.shape_cast %34 : vector<1x32x32xf32> to vector<32x32xf32>
    %c0_18 = arith.constant 0 : index
    %c66 = arith.constant 66 : index
    %c0_19 = arith.constant 0 : index
    %36 = vector.load %arg2[%c0_18, %c66, %c0_19] : memref<2x338x96xf32, #tpu.memory_space<vmem>>, vector<1x32x64xf32>
    %37 = vector.shape_cast %36 : vector<1x32x64xf32> to vector<32x64xf32>
    %c0_20 = arith.constant 0 : index
    %c98 = arith.constant 98 : index
    %c0_21 = arith.constant 0 : index
    %38 = vector.load %arg2[%c0_20, %c98, %c0_21] : memref<2x338x96xf32, #tpu.memory_space<vmem>>, vector<1x64x32xf32>
    %39 = vector.shape_cast %38 : vector<1x64x32xf32> to vector<64x32xf32>
    %cst_22 = arith.constant dense<0.000000e+00> : vector<16x96xf32>
    %40 = tpu.matmul %31, %33, %cst_22 {dimension_numbers = #tpu.dot_dimension_numbers<[1], [0], [0], [1], [0, 0, 1, 1], [], []>} : vector<16x32xf32>, vector<32x96xf32>, vector<16x96xf32> -> vector<16x96xf32>
    %c0_23 = arith.constant 0 : index
    %c162 = arith.constant 162 : index
    %c0_24 = arith.constant 0 : index
    %41 = vector.load %arg2[%c0_23, %c162, %c0_24] : memref<2x338x96xf32, #tpu.memory_space<vmem>>, vector<1x1x96xf32>
    %42 = vector.shape_cast %41 : vector<1x1x96xf32> to vector<1x96xf32>
    %43 = vector.broadcast %42 : vector<1x96xf32> to vector<16x96xf32>
    %44 = arith.addf %40, %43 : vector<16x96xf32>
    %45 = vector.extract_strided_slice %44 {offsets = [0, 0], sizes = [16, 16], strides = [1, 1]} : vector<16x96xf32> to vector<16x16xf32>
    %46 = vector.shape_cast %45 : vector<16x16xf32> to vector<2x8x16xf32>
    %47 = vector.extract_strided_slice %44 {offsets = [0, 16], sizes = [16, 16], strides = [1, 1]} : vector<16x96xf32> to vector<16x16xf32>
    %48 = vector.shape_cast %47 : vector<16x16xf32> to vector<2x8x16xf32>
    %49 = tpu.concatenate %46, %48 in 0 : vector<2x8x16xf32>, vector<2x8x16xf32> -> vector<4x8x16xf32>
    %50 = vector.extract_strided_slice %44 {offsets = [0, 32], sizes = [16, 16], strides = [1, 1]} : vector<16x96xf32> to vector<16x16xf32>
    %51 = vector.shape_cast %50 : vector<16x16xf32> to vector<2x8x16xf32>
    %52 = vector.extract_strided_slice %44 {offsets = [0, 48], sizes = [16, 16], strides = [1, 1]} : vector<16x96xf32> to vector<16x16xf32>
    %53 = vector.shape_cast %52 : vector<16x16xf32> to vector<2x8x16xf32>
    %54 = tpu.concatenate %51, %53 in 0 : vector<2x8x16xf32>, vector<2x8x16xf32> -> vector<4x8x16xf32>
    %55 = vector.extract_strided_slice %44 {offsets = [0, 64], sizes = [16, 16], strides = [1, 1]} : vector<16x96xf32> to vector<16x16xf32>
    %56 = vector.shape_cast %55 : vector<16x16xf32> to vector<2x8x16xf32>
    %57 = vector.extract_strided_slice %44 {offsets = [0, 80], sizes = [16, 16], strides = [1, 1]} : vector<16x96xf32> to vector<16x16xf32>
    %58 = vector.shape_cast %57 : vector<16x16xf32> to vector<2x8x16xf32>
    %59 = tpu.concatenate %56, %58 in 0 : vector<2x8x16xf32>, vector<2x8x16xf32> -> vector<4x8x16xf32>
    "tpu.trace_start"() <{level = 10 : i32, message = "bqd,bkd->bqk"}> : () -> ()
    %cst_25 = arith.constant dense<0.000000e+00> : vector<4x8x8xf32>
    %60 = tpu.matmul %49, %54, %cst_25 {dimension_numbers = #tpu.dot_dimension_numbers<[2], [2], [1], [1], [0, 0, 0, 1, 1, 1], [0], [0]>} : vector<4x8x16xf32>, vector<4x8x16xf32>, vector<4x8x8xf32> -> vector<4x8x8xf32>
    "tpu.trace_stop"() : () -> ()
    %61 = vector.broadcast %5 : vector<4x1x8xf32> to vector<4x8x8xf32>
    %62 = arith.addf %60, %61 : vector<4x8x8xf32>
    %cst_26 = arith.constant dense<0xFF800000> : vector<4x8xf32>
    %63 = vector.multi_reduction <maximumf>, %62, %cst_26 [2] : vector<4x8x8xf32> to vector<4x8xf32>
    %64 = vector.shape_cast %63 : vector<4x8xf32> to vector<4x8x1xf32>
    %65 = vector.broadcast %64 : vector<4x8x1xf32> to vector<4x8x8xf32>
    %66 = arith.subf %62, %65 : vector<4x8x8xf32>
    %67 = math.exp %66 : vector<4x8x8xf32>
    %cst_27 = arith.constant dense<0.000000e+00> : vector<4x8xf32>
    %68 = vector.multi_reduction <add>, %67, %cst_27 [2] : vector<4x8x8xf32> to vector<4x8xf32>
    %69 = vector.shape_cast %68 : vector<4x8xf32> to vector<4x8x1xf32>
    %70 = vector.broadcast %69 : vector<4x8x1xf32> to vector<4x8x8xf32>
    %71 = arith.divf %67, %70 : vector<4x8x8xf32>
    "tpu.trace_start"() <{level = 10 : i32, message = "bqk,bkd->bqd"}> : () -> ()
    %cst_28 = arith.constant dense<0.000000e+00> : vector<4x8x16xf32>
    %72 = tpu.matmul %71, %59, %cst_28 {dimension_numbers = #tpu.dot_dimension_numbers<[2], [1], [1], [2], [0, 0, 0, 1, 1, 2], [0], [0]>} : vector<4x8x8xf32>, vector<4x8x16xf32>, vector<4x8x16xf32> -> vector<4x8x16xf32>
    "tpu.trace_stop"() : () -> ()
    %73 = vector.extract_strided_slice %72 {offsets = [0, 0, 0], sizes = [2, 8, 16], strides = [1, 1, 1]} : vector<4x8x16xf32> to vector<2x8x16xf32>
    %74 = vector.shape_cast %73 : vector<2x8x16xf32> to vector<16x16xf32>
    %75 = vector.extract_strided_slice %72 {offsets = [2, 0, 0], sizes = [2, 8, 16], strides = [1, 1, 1]} : vector<4x8x16xf32> to vector<2x8x16xf32>
    %76 = vector.shape_cast %75 : vector<2x8x16xf32> to vector<16x16xf32>
    %77 = tpu.concatenate %74, %76 in 1 : vector<16x16xf32>, vector<16x16xf32> -> vector<16x32xf32>
    %cst_29 = arith.constant dense<0.000000e+00> : vector<16x32xf32>
    %78 = tpu.matmul %77, %35, %cst_29 {dimension_numbers = #tpu.dot_dimension_numbers<[1], [0], [0], [1], [0, 0, 1, 1], [], []>} : vector<16x32xf32>, vector<32x32xf32>, vector<16x32xf32> -> vector<16x32xf32>
    %c0_30 = arith.constant 0 : index
    %c163 = arith.constant 163 : index
    %c0_31 = arith.constant 0 : index
    %79 = vector.load %arg2[%c0_30, %c163, %c0_31] : memref<2x338x96xf32, #tpu.memory_space<vmem>>, vector<1x1x32xf32>
    %80 = vector.shape_cast %79 : vector<1x1x32xf32> to vector<1x32xf32>
    %81 = vector.broadcast %80 : vector<1x32xf32> to vector<16x32xf32>
    %82 = arith.addf %78, %81 : vector<16x32xf32>
    %83 = arith.addf %31, %82 : vector<16x32xf32>
    %c0_32 = arith.constant 0 : index
    %c164 = arith.constant 164 : index
    %c0_33 = arith.constant 0 : index
    %84 = vector.load %arg2[%c0_32, %c164, %c0_33] : memref<2x338x96xf32, #tpu.memory_space<vmem>>, vector<1x1x32xf32>
    %85 = vector.shape_cast %84 : vector<1x1x32xf32> to vector<1x32xf32>
    %c0_34 = arith.constant 0 : index
    %c165 = arith.constant 165 : index
    %c0_35 = arith.constant 0 : index
    %86 = vector.load %arg2[%c0_34, %c165, %c0_35] : memref<2x338x96xf32, #tpu.memory_space<vmem>>, vector<1x1x32xf32>
    %87 = vector.shape_cast %86 : vector<1x1x32xf32> to vector<1x32xf32>
    %cst_36 = arith.constant dense<0.000000e+00> : vector<16xf32>
    %88 = vector.multi_reduction <add>, %83, %cst_36 [1] : vector<16x32xf32> to vector<16xf32>
    %89 = vector.shape_cast %88 : vector<16xf32> to vector<16x1xf32>
    %cst_37 = arith.constant 3.200000e+01 : f32
    %90 = vector.broadcast %cst_37 : f32 to vector<16x1xf32>
    %91 = arith.divf %89, %90 : vector<16x1xf32>
    %92 = vector.broadcast %91 : vector<16x1xf32> to vector<16x32xf32>
    %93 = arith.subf %83, %92 : vector<16x32xf32>
    %94 = arith.mulf %93, %93 : vector<16x32xf32>
    %cst_38 = arith.constant dense<0.000000e+00> : vector<16xf32>
    %95 = vector.multi_reduction <add>, %94, %cst_38 [1] : vector<16x32xf32> to vector<16xf32>
    %96 = vector.shape_cast %95 : vector<16xf32> to vector<16x1xf32>
    %cst_39 = arith.constant 3.200000e+01 : f32
    %97 = vector.broadcast %cst_39 : f32 to vector<16x1xf32>
    %98 = arith.divf %96, %97 : vector<16x1xf32>
    %99 = vector.broadcast %91 : vector<16x1xf32> to vector<16x32xf32>
    %100 = arith.subf %83, %99 : vector<16x32xf32>
    %cst_40 = arith.constant 9.99999996E-13 : f32
    %101 = vector.broadcast %cst_40 : f32 to vector<16x1xf32>
    %102 = arith.addf %98, %101 : vector<16x1xf32>
    %103 = math.rsqrt %102 : vector<16x1xf32>
    %104 = vector.broadcast %103 : vector<16x1xf32> to vector<16x32xf32>
    %105 = arith.mulf %100, %104 : vector<16x32xf32>
    %106 = vector.broadcast %85 : vector<1x32xf32> to vector<16x32xf32>
    %107 = arith.mulf %105, %106 : vector<16x32xf32>
    %108 = vector.broadcast %87 : vector<1x32xf32> to vector<16x32xf32>
    %109 = arith.addf %107, %108 : vector<16x32xf32>
    %cst_41 = arith.constant dense<0.000000e+00> : vector<16x64xf32>
    %110 = tpu.matmul %109, %37, %cst_41 {dimension_numbers = #tpu.dot_dimension_numbers<[1], [0], [0], [1], [0, 0, 1, 1], [], []>} : vector<16x32xf32>, vector<32x64xf32>, vector<16x64xf32> -> vector<16x64xf32>
    %c0_42 = arith.constant 0 : index
    %c166 = arith.constant 166 : index
    %c0_43 = arith.constant 0 : index
    %111 = vector.load %arg2[%c0_42, %c166, %c0_43] : memref<2x338x96xf32, #tpu.memory_space<vmem>>, vector<1x1x64xf32>
    %112 = vector.shape_cast %111 : vector<1x1x64xf32> to vector<1x64xf32>
    %113 = vector.broadcast %112 : vector<1x64xf32> to vector<16x64xf32>
    %114 = arith.addf %110, %113 : vector<16x64xf32>
    %115 = arith.mulf %114, %114 : vector<16x64xf32>
    %116 = arith.mulf %114, %115 : vector<16x64xf32>
    %cst_44 = arith.constant 4.471500e-02 : f32
    %117 = vector.broadcast %cst_44 : f32 to vector<16x64xf32>
    %118 = arith.mulf %117, %116 : vector<16x64xf32>
    %119 = arith.addf %114, %118 : vector<16x64xf32>
    %cst_45 = arith.constant 0.797884583 : f32
    %120 = vector.broadcast %cst_45 : f32 to vector<16x64xf32>
    %121 = arith.mulf %120, %119 : vector<16x64xf32>
    %122 = math.tanh %121 : vector<16x64xf32>
    %cst_46 = arith.constant 1.000000e+00 : f32
    %123 = vector.broadcast %cst_46 : f32 to vector<16x64xf32>
    %124 = arith.addf %123, %122 : vector<16x64xf32>
    %cst_47 = arith.constant 5.000000e-01 : f32
    %125 = vector.broadcast %cst_47 : f32 to vector<16x64xf32>
    %126 = arith.mulf %125, %124 : vector<16x64xf32>
    %127 = arith.mulf %114, %126 : vector<16x64xf32>
    %cst_48 = arith.constant dense<0.000000e+00> : vector<16x32xf32>
    %128 = tpu.matmul %127, %39, %cst_48 {dimension_numbers = #tpu.dot_dimension_numbers<[1], [0], [0], [1], [0, 0, 1, 1], [], []>} : vector<16x64xf32>, vector<64x32xf32>, vector<16x32xf32> -> vector<16x32xf32>
    %c0_49 = arith.constant 0 : index
    %c167 = arith.constant 167 : index
    %c0_50 = arith.constant 0 : index
    %129 = vector.load %arg2[%c0_49, %c167, %c0_50] : memref<2x338x96xf32, #tpu.memory_space<vmem>>, vector<1x1x32xf32>
    %130 = vector.shape_cast %129 : vector<1x1x32xf32> to vector<1x32xf32>
    %131 = vector.broadcast %130 : vector<1x32xf32> to vector<16x32xf32>
    %132 = arith.addf %128, %131 : vector<16x32xf32>
    %133 = arith.addf %109, %132 : vector<16x32xf32>
    %c0_51 = arith.constant 0 : index
    %c168 = arith.constant 168 : index
    %c0_52 = arith.constant 0 : index
    %134 = vector.load %arg2[%c0_51, %c168, %c0_52] : memref<2x338x96xf32, #tpu.memory_space<vmem>>, vector<1x1x32xf32>
    %135 = vector.shape_cast %134 : vector<1x1x32xf32> to vector<1x32xf32>
    %c0_53 = arith.constant 0 : index
    %c169 = arith.constant 169 : index
    %c0_54 = arith.constant 0 : index
    %136 = vector.load %arg2[%c0_53, %c169, %c0_54] : memref<2x338x96xf32, #tpu.memory_space<vmem>>, vector<1x1x32xf32>
    %137 = vector.shape_cast %136 : vector<1x1x32xf32> to vector<1x32xf32>
    %cst_55 = arith.constant dense<0.000000e+00> : vector<16xf32>
    %138 = vector.multi_reduction <add>, %133, %cst_55 [1] : vector<16x32xf32> to vector<16xf32>
    %139 = vector.shape_cast %138 : vector<16xf32> to vector<16x1xf32>
    %cst_56 = arith.constant 3.200000e+01 : f32
    %140 = vector.broadcast %cst_56 : f32 to vector<16x1xf32>
    %141 = arith.divf %139, %140 : vector<16x1xf32>
    %142 = vector.broadcast %141 : vector<16x1xf32> to vector<16x32xf32>
    %143 = arith.subf %133, %142 : vector<16x32xf32>
    %144 = arith.mulf %143, %143 : vector<16x32xf32>
    %cst_57 = arith.constant dense<0.000000e+00> : vector<16xf32>
    %145 = vector.multi_reduction <add>, %144, %cst_57 [1] : vector<16x32xf32> to vector<16xf32>
    %146 = vector.shape_cast %145 : vector<16xf32> to vector<16x1xf32>
    %cst_58 = arith.constant 3.200000e+01 : f32
    %147 = vector.broadcast %cst_58 : f32 to vector<16x1xf32>
    %148 = arith.divf %146, %147 : vector<16x1xf32>
    %149 = vector.broadcast %141 : vector<16x1xf32> to vector<16x32xf32>
    %150 = arith.subf %133, %149 : vector<16x32xf32>
    %cst_59 = arith.constant 9.99999996E-13 : f32
    %151 = vector.broadcast %cst_59 : f32 to vector<16x1xf32>
    %152 = arith.addf %148, %151 : vector<16x1xf32>
    %153 = math.rsqrt %152 : vector<16x1xf32>
    %154 = vector.broadcast %153 : vector<16x1xf32> to vector<16x32xf32>
    %155 = arith.mulf %150, %154 : vector<16x32xf32>
    %156 = vector.broadcast %135 : vector<1x32xf32> to vector<16x32xf32>
    %157 = arith.mulf %155, %156 : vector<16x32xf32>
    %158 = vector.broadcast %137 : vector<1x32xf32> to vector<16x32xf32>
    %159 = arith.addf %157, %158 : vector<16x32xf32>
    %c0_60 = arith.constant 0 : index
    %c170 = arith.constant 170 : index
    %c0_61 = arith.constant 0 : index
    %160 = vector.load %arg2[%c0_60, %c170, %c0_61] : memref<2x338x96xf32, #tpu.memory_space<vmem>>, vector<1x32x96xf32>
    %161 = vector.shape_cast %160 : vector<1x32x96xf32> to vector<32x96xf32>
    %c0_62 = arith.constant 0 : index
    %c202 = arith.constant 202 : index
    %c0_63 = arith.constant 0 : index
    %162 = vector.load %arg2[%c0_62, %c202, %c0_63] : memref<2x338x96xf32, #tpu.memory_space<vmem>>, vector<1x32x32xf32>
    %163 = vector.shape_cast %162 : vector<1x32x32xf32> to vector<32x32xf32>
    %c0_64 = arith.constant 0 : index
    %c234 = arith.constant 234 : index
    %c0_65 = arith.constant 0 : index
    %164 = vector.load %arg2[%c0_64, %c234, %c0_65] : memref<2x338x96xf32, #tpu.memory_space<vmem>>, vector<1x32x64xf32>
    %165 = vector.shape_cast %164 : vector<1x32x64xf32> to vector<32x64xf32>
    %c0_66 = arith.constant 0 : index
    %c266 = arith.constant 266 : index
    %c0_67 = arith.constant 0 : index
    %166 = vector.load %arg2[%c0_66, %c266, %c0_67] : memref<2x338x96xf32, #tpu.memory_space<vmem>>, vector<1x64x32xf32>
    %167 = vector.shape_cast %166 : vector<1x64x32xf32> to vector<64x32xf32>
    %cst_68 = arith.constant dense<0.000000e+00> : vector<16x96xf32>
    %168 = tpu.matmul %159, %161, %cst_68 {dimension_numbers = #tpu.dot_dimension_numbers<[1], [0], [0], [1], [0, 0, 1, 1], [], []>} : vector<16x32xf32>, vector<32x96xf32>, vector<16x96xf32> -> vector<16x96xf32>
    %c0_69 = arith.constant 0 : index
    %c330 = arith.constant 330 : index
    %c0_70 = arith.constant 0 : index
    %169 = vector.load %arg2[%c0_69, %c330, %c0_70] : memref<2x338x96xf32, #tpu.memory_space<vmem>>, vector<1x1x96xf32>
    %170 = vector.shape_cast %169 : vector<1x1x96xf32> to vector<1x96xf32>
    %171 = vector.broadcast %170 : vector<1x96xf32> to vector<16x96xf32>
    %172 = arith.addf %168, %171 : vector<16x96xf32>
    %173 = vector.extract_strided_slice %172 {offsets = [0, 0], sizes = [16, 16], strides = [1, 1]} : vector<16x96xf32> to vector<16x16xf32>
    %174 = vector.shape_cast %173 : vector<16x16xf32> to vector<2x8x16xf32>
    %175 = vector.extract_strided_slice %172 {offsets = [0, 16], sizes = [16, 16], strides = [1, 1]} : vector<16x96xf32> to vector<16x16xf32>
    %176 = vector.shape_cast %175 : vector<16x16xf32> to vector<2x8x16xf32>
    %177 = tpu.concatenate %174, %176 in 0 : vector<2x8x16xf32>, vector<2x8x16xf32> -> vector<4x8x16xf32>
    %178 = vector.extract_strided_slice %172 {offsets = [0, 32], sizes = [16, 16], strides = [1, 1]} : vector<16x96xf32> to vector<16x16xf32>
    %179 = vector.shape_cast %178 : vector<16x16xf32> to vector<2x8x16xf32>
    %180 = vector.extract_strided_slice %172 {offsets = [0, 48], sizes = [16, 16], strides = [1, 1]} : vector<16x96xf32> to vector<16x16xf32>
    %181 = vector.shape_cast %180 : vector<16x16xf32> to vector<2x8x16xf32>
    %182 = tpu.concatenate %179, %181 in 0 : vector<2x8x16xf32>, vector<2x8x16xf32> -> vector<4x8x16xf32>
    %183 = vector.extract_strided_slice %172 {offsets = [0, 64], sizes = [16, 16], strides = [1, 1]} : vector<16x96xf32> to vector<16x16xf32>
    %184 = vector.shape_cast %183 : vector<16x16xf32> to vector<2x8x16xf32>
    %185 = vector.extract_strided_slice %172 {offsets = [0, 80], sizes = [16, 16], strides = [1, 1]} : vector<16x96xf32> to vector<16x16xf32>
    %186 = vector.shape_cast %185 : vector<16x16xf32> to vector<2x8x16xf32>
    %187 = tpu.concatenate %184, %186 in 0 : vector<2x8x16xf32>, vector<2x8x16xf32> -> vector<4x8x16xf32>
    "tpu.trace_start"() <{level = 10 : i32, message = "bqd,bkd->bqk"}> : () -> ()
    %cst_71 = arith.constant dense<0.000000e+00> : vector<4x8x8xf32>
    %188 = tpu.matmul %177, %182, %cst_71 {dimension_numbers = #tpu.dot_dimension_numbers<[2], [2], [1], [1], [0, 0, 0, 1, 1, 1], [0], [0]>} : vector<4x8x16xf32>, vector<4x8x16xf32>, vector<4x8x8xf32> -> vector<4x8x8xf32>
    "tpu.trace_stop"() : () -> ()
    %189 = vector.broadcast %5 : vector<4x1x8xf32> to vector<4x8x8xf32>
    %190 = arith.addf %188, %189 : vector<4x8x8xf32>
    %cst_72 = arith.constant dense<0xFF800000> : vector<4x8xf32>
    %191 = vector.multi_reduction <maximumf>, %190, %cst_72 [2] : vector<4x8x8xf32> to vector<4x8xf32>
    %192 = vector.shape_cast %191 : vector<4x8xf32> to vector<4x8x1xf32>
    %193 = vector.broadcast %192 : vector<4x8x1xf32> to vector<4x8x8xf32>
    %194 = arith.subf %190, %193 : vector<4x8x8xf32>
    %195 = math.exp %194 : vector<4x8x8xf32>
    %cst_73 = arith.constant dense<0.000000e+00> : vector<4x8xf32>
    %196 = vector.multi_reduction <add>, %195, %cst_73 [2] : vector<4x8x8xf32> to vector<4x8xf32>
    %197 = vector.shape_cast %196 : vector<4x8xf32> to vector<4x8x1xf32>
    %198 = vector.broadcast %197 : vector<4x8x1xf32> to vector<4x8x8xf32>
    %199 = arith.divf %195, %198 : vector<4x8x8xf32>
    "tpu.trace_start"() <{level = 10 : i32, message = "bqk,bkd->bqd"}> : () -> ()
    %cst_74 = arith.constant dense<0.000000e+00> : vector<4x8x16xf32>
    %200 = tpu.matmul %199, %187, %cst_74 {dimension_numbers = #tpu.dot_dimension_numbers<[2], [1], [1], [2], [0, 0, 0, 1, 1, 2], [0], [0]>} : vector<4x8x8xf32>, vector<4x8x16xf32>, vector<4x8x16xf32> -> vector<4x8x16xf32>
    "tpu.trace_stop"() : () -> ()
    %201 = vector.extract_strided_slice %200 {offsets = [0, 0, 0], sizes = [2, 8, 16], strides = [1, 1, 1]} : vector<4x8x16xf32> to vector<2x8x16xf32>
    %202 = vector.shape_cast %201 : vector<2x8x16xf32> to vector<16x16xf32>
    %203 = vector.extract_strided_slice %200 {offsets = [2, 0, 0], sizes = [2, 8, 16], strides = [1, 1, 1]} : vector<4x8x16xf32> to vector<2x8x16xf32>
    %204 = vector.shape_cast %203 : vector<2x8x16xf32> to vector<16x16xf32>
    %205 = tpu.concatenate %202, %204 in 1 : vector<16x16xf32>, vector<16x16xf32> -> vector<16x32xf32>
    %cst_75 = arith.constant dense<0.000000e+00> : vector<16x32xf32>
    %206 = tpu.matmul %205, %163, %cst_75 {dimension_numbers = #tpu.dot_dimension_numbers<[1], [0], [0], [1], [0, 0, 1, 1], [], []>} : vector<16x32xf32>, vector<32x32xf32>, vector<16x32xf32> -> vector<16x32xf32>
    %c0_76 = arith.constant 0 : index
    %c331 = arith.constant 331 : index
    %c0_77 = arith.constant 0 : index
    %207 = vector.load %arg2[%c0_76, %c331, %c0_77] : memref<2x338x96xf32, #tpu.memory_space<vmem>>, vector<1x1x32xf32>
    %208 = vector.shape_cast %207 : vector<1x1x32xf32> to vector<1x32xf32>
    %209 = vector.broadcast %208 : vector<1x32xf32> to vector<16x32xf32>
    %210 = arith.addf %206, %209 : vector<16x32xf32>
    %211 = arith.addf %159, %210 : vector<16x32xf32>
    %c0_78 = arith.constant 0 : index
    %c332 = arith.constant 332 : index
    %c0_79 = arith.constant 0 : index
    %212 = vector.load %arg2[%c0_78, %c332, %c0_79] : memref<2x338x96xf32, #tpu.memory_space<vmem>>, vector<1x1x32xf32>
    %213 = vector.shape_cast %212 : vector<1x1x32xf32> to vector<1x32xf32>
    %c0_80 = arith.constant 0 : index
    %c333 = arith.constant 333 : index
    %c0_81 = arith.constant 0 : index
    %214 = vector.load %arg2[%c0_80, %c333, %c0_81] : memref<2x338x96xf32, #tpu.memory_space<vmem>>, vector<1x1x32xf32>
    %215 = vector.shape_cast %214 : vector<1x1x32xf32> to vector<1x32xf32>
    %cst_82 = arith.constant dense<0.000000e+00> : vector<16xf32>
    %216 = vector.multi_reduction <add>, %211, %cst_82 [1] : vector<16x32xf32> to vector<16xf32>
    %217 = vector.shape_cast %216 : vector<16xf32> to vector<16x1xf32>
    %cst_83 = arith.constant 3.200000e+01 : f32
    %218 = vector.broadcast %cst_83 : f32 to vector<16x1xf32>
    %219 = arith.divf %217, %218 : vector<16x1xf32>
    %220 = vector.broadcast %219 : vector<16x1xf32> to vector<16x32xf32>
    %221 = arith.subf %211, %220 : vector<16x32xf32>
    %222 = arith.mulf %221, %221 : vector<16x32xf32>
    %cst_84 = arith.constant dense<0.000000e+00> : vector<16xf32>
    %223 = vector.multi_reduction <add>, %222, %cst_84 [1] : vector<16x32xf32> to vector<16xf32>
    %224 = vector.shape_cast %223 : vector<16xf32> to vector<16x1xf32>
    %cst_85 = arith.constant 3.200000e+01 : f32
    %225 = vector.broadcast %cst_85 : f32 to vector<16x1xf32>
    %226 = arith.divf %224, %225 : vector<16x1xf32>
    %227 = vector.broadcast %219 : vector<16x1xf32> to vector<16x32xf32>
    %228 = arith.subf %211, %227 : vector<16x32xf32>
    %cst_86 = arith.constant 9.99999996E-13 : f32
    %229 = vector.broadcast %cst_86 : f32 to vector<16x1xf32>
    %230 = arith.addf %226, %229 : vector<16x1xf32>
    %231 = math.rsqrt %230 : vector<16x1xf32>
    %232 = vector.broadcast %231 : vector<16x1xf32> to vector<16x32xf32>
    %233 = arith.mulf %228, %232 : vector<16x32xf32>
    %234 = vector.broadcast %213 : vector<1x32xf32> to vector<16x32xf32>
    %235 = arith.mulf %233, %234 : vector<16x32xf32>
    %236 = vector.broadcast %215 : vector<1x32xf32> to vector<16x32xf32>
    %237 = arith.addf %235, %236 : vector<16x32xf32>
    %cst_87 = arith.constant dense<0.000000e+00> : vector<16x64xf32>
    %238 = tpu.matmul %237, %165, %cst_87 {dimension_numbers = #tpu.dot_dimension_numbers<[1], [0], [0], [1], [0, 0, 1, 1], [], []>} : vector<16x32xf32>, vector<32x64xf32>, vector<16x64xf32> -> vector<16x64xf32>
    %c0_88 = arith.constant 0 : index
    %c334 = arith.constant 334 : index
    %c0_89 = arith.constant 0 : index
    %239 = vector.load %arg2[%c0_88, %c334, %c0_89] : memref<2x338x96xf32, #tpu.memory_space<vmem>>, vector<1x1x64xf32>
    %240 = vector.shape_cast %239 : vector<1x1x64xf32> to vector<1x64xf32>
    %241 = vector.broadcast %240 : vector<1x64xf32> to vector<16x64xf32>
    %242 = arith.addf %238, %241 : vector<16x64xf32>
    %243 = arith.mulf %242, %242 : vector<16x64xf32>
    %244 = arith.mulf %242, %243 : vector<16x64xf32>
    %cst_90 = arith.constant 4.471500e-02 : f32
    %245 = vector.broadcast %cst_90 : f32 to vector<16x64xf32>
    %246 = arith.mulf %245, %244 : vector<16x64xf32>
    %247 = arith.addf %242, %246 : vector<16x64xf32>
    %cst_91 = arith.constant 0.797884583 : f32
    %248 = vector.broadcast %cst_91 : f32 to vector<16x64xf32>
    %249 = arith.mulf %248, %247 : vector<16x64xf32>
    %250 = math.tanh %249 : vector<16x64xf32>
    %cst_92 = arith.constant 1.000000e+00 : f32
    %251 = vector.broadcast %cst_92 : f32 to vector<16x64xf32>
    %252 = arith.addf %251, %250 : vector<16x64xf32>
    %cst_93 = arith.constant 5.000000e-01 : f32
    %253 = vector.broadcast %cst_93 : f32 to vector<16x64xf32>
    %254 = arith.mulf %253, %252 : vector<16x64xf32>
    %255 = arith.mulf %242, %254 : vector<16x64xf32>
    %cst_94 = arith.constant dense<0.000000e+00> : vector<16x32xf32>
    %256 = tpu.matmul %255, %167, %cst_94 {dimension_numbers = #tpu.dot_dimension_numbers<[1], [0], [0], [1], [0, 0, 1, 1], [], []>} : vector<16x64xf32>, vector<64x32xf32>, vector<16x32xf32> -> vector<16x32xf32>
    %c0_95 = arith.constant 0 : index
    %c335 = arith.constant 335 : index
    %c0_96 = arith.constant 0 : index
    %257 = vector.load %arg2[%c0_95, %c335, %c0_96] : memref<2x338x96xf32, #tpu.memory_space<vmem>>, vector<1x1x32xf32>
    %258 = vector.shape_cast %257 : vector<1x1x32xf32> to vector<1x32xf32>
    %259 = vector.broadcast %258 : vector<1x32xf32> to vector<16x32xf32>
    %260 = arith.addf %256, %259 : vector<16x32xf32>
    %261 = arith.addf %237, %260 : vector<16x32xf32>
    %c0_97 = arith.constant 0 : index
    %c336 = arith.constant 336 : index
    %c0_98 = arith.constant 0 : index
    %262 = vector.load %arg2[%c0_97, %c336, %c0_98] : memref<2x338x96xf32, #tpu.memory_space<vmem>>, vector<1x1x32xf32>
    %263 = vector.shape_cast %262 : vector<1x1x32xf32> to vector<1x32xf32>
    %c0_99 = arith.constant 0 : index
    %c337 = arith.constant 337 : index
    %c0_100 = arith.constant 0 : index
    %264 = vector.load %arg2[%c0_99, %c337, %c0_100] : memref<2x338x96xf32, #tpu.memory_space<vmem>>, vector<1x1x32xf32>
    %265 = vector.shape_cast %264 : vector<1x1x32xf32> to vector<1x32xf32>
    %cst_101 = arith.constant dense<0.000000e+00> : vector<16xf32>
    %266 = vector.multi_reduction <add>, %261, %cst_101 [1] : vector<16x32xf32> to vector<16xf32>
    %267 = vector.shape_cast %266 : vector<16xf32> to vector<16x1xf32>
    %cst_102 = arith.constant 3.200000e+01 : f32
    %268 = vector.broadcast %cst_102 : f32 to vector<16x1xf32>
    %269 = arith.divf %267, %268 : vector<16x1xf32>
    %270 = vector.broadcast %269 : vector<16x1xf32> to vector<16x32xf32>
    %271 = arith.subf %261, %270 : vector<16x32xf32>
    %272 = arith.mulf %271, %271 : vector<16x32xf32>
    %cst_103 = arith.constant dense<0.000000e+00> : vector<16xf32>
    %273 = vector.multi_reduction <add>, %272, %cst_103 [1] : vector<16x32xf32> to vector<16xf32>
    %274 = vector.shape_cast %273 : vector<16xf32> to vector<16x1xf32>
    %cst_104 = arith.constant 3.200000e+01 : f32
    %275 = vector.broadcast %cst_104 : f32 to vector<16x1xf32>
    %276 = arith.divf %274, %275 : vector<16x1xf32>
    %277 = vector.broadcast %269 : vector<16x1xf32> to vector<16x32xf32>
    %278 = arith.subf %261, %277 : vector<16x32xf32>
    %cst_105 = arith.constant 9.99999996E-13 : f32
    %279 = vector.broadcast %cst_105 : f32 to vector<16x1xf32>
    %280 = arith.addf %276, %279 : vector<16x1xf32>
    %281 = math.rsqrt %280 : vector<16x1xf32>
    %282 = vector.broadcast %281 : vector<16x1xf32> to vector<16x32xf32>
    %283 = arith.mulf %278, %282 : vector<16x32xf32>
    %284 = vector.broadcast %263 : vector<1x32xf32> to vector<16x32xf32>
    %285 = arith.mulf %283, %284 : vector<16x32xf32>
    %286 = vector.broadcast %265 : vector<1x32xf32> to vector<16x32xf32>
    %287 = arith.addf %285, %286 : vector<16x32xf32>
    %288 = vector.shape_cast %287 : vector<16x32xf32> to vector<2x8x32xf32>
    %289 = vector.extract_strided_slice %288 {offsets = [0, 0, 0], sizes = [2, 1, 32], strides = [1, 1, 1]} : vector<2x8x32xf32> to vector<2x1x32xf32>
    %290 = vector.shape_cast %289 : vector<2x1x32xf32> to vector<2x32xf32>
    %c0_106 = arith.constant 0 : index
    %c0_107 = arith.constant 0 : index
    %c0_108 = arith.constant 0 : index
    %291 = vector.load %arg3[%c0_106, %c0_107, %c0_108] : memref<2x2x32xf32, #tpu.memory_space<vmem>>, vector<1x2x32xf32>
    %292 = vector.shape_cast %291 : vector<1x2x32xf32> to vector<2x32xf32>
    %293 = vector.shape_cast %290 : vector<2x32xf32> to vector<1x2x32xf32>
    tpu.vector_store %arg3[%c0_106, %c0_107, %c0_108], %293 {strides = array<i32>} : memref<2x2x32xf32, #tpu.memory_space<vmem>>, vector<1x2x32xf32>,
    %c1_109 = arith.constant 1 : index
    %c0_110 = arith.constant 0 : index
    %c0_111 = arith.constant 0 : index
    %294 = vector.load %arg0[%c1_109, %c0_110, %c0_111] : memref<2x16x32xf32, #tpu.memory_space<vmem>>, vector<1x16x32xf32>
    %295 = vector.shape_cast %294 : vector<1x16x32xf32> to vector<16x32xf32>
    %c1_112 = arith.constant 1 : index
    %c0_113 = arith.constant 0 : index
    %c0_114 = arith.constant 0 : index
    %296 = vector.load %arg1[%c1_112, %c0_113, %c0_114] : memref<2x2x8xf32, #tpu.memory_space<vmem>>, vector<1x2x8xf32>
    %297 = vector.shape_cast %296 : vector<1x2x8xf32> to vector<2x8xf32>
    %298 = vector.shape_cast %297 : vector<2x8xf32> to vector<2x1x8xf32>
    %299 = tpu.concatenate %298, %298 in 0 : vector<2x1x8xf32>, vector<2x1x8xf32> -> vector<4x1x8xf32>
    %c1_115 = arith.constant 1 : index
    %c0_116 = arith.constant 0 : index
    %c0_117 = arith.constant 0 : index
    %300 = vector.load %arg2[%c1_115, %c0_116, %c0_117] : memref<2x338x96xf32, #tpu.memory_space<vmem>>, vector<1x1x32xf32>
    %301 = vector.shape_cast %300 : vector<1x1x32xf32> to vector<1x32xf32>
    %c1_118 = arith.constant 1 : index
    %c1_119 = arith.constant 1 : index
    %c0_120 = arith.constant 0 : index
    %302 = vector.load %arg2[%c1_118, %c1_119, %c0_120] : memref<2x338x96xf32, #tpu.memory_space<vmem>>, vector<1x1x32xf32>
    %303 = vector.shape_cast %302 : vector<1x1x32xf32> to vector<1x32xf32>
    %cst_121 = arith.constant dense<0.000000e+00> : vector<16xf32>
    %304 = vector.multi_reduction <add>, %295, %cst_121 [1] : vector<16x32xf32> to vector<16xf32>
    %305 = vector.shape_cast %304 : vector<16xf32> to vector<16x1xf32>
    %cst_122 = arith.constant 3.200000e+01 : f32
    %306 = vector.broadcast %cst_122 : f32 to vector<16x1xf32>
    %307 = arith.divf %305, %306 : vector<16x1xf32>
    %308 = vector.broadcast %307 : vector<16x1xf32> to vector<16x32xf32>
    %309 = arith.subf %295, %308 : vector<16x32xf32>
    %310 = arith.mulf %309, %309 : vector<16x32xf32>
    %cst_123 = arith.constant dense<0.000000e+00> : vector<16xf32>
    %311 = vector.multi_reduction <add>, %310, %cst_123 [1] : vector<16x32xf32> to vector<16xf32>
    %312 = vector.shape_cast %311 : vector<16xf32> to vector<16x1xf32>
    %cst_124 = arith.constant 3.200000e+01 : f32
    %313 = vector.broadcast %cst_124 : f32 to vector<16x1xf32>
    %314 = arith.divf %312, %313 : vector<16x1xf32>
    %315 = vector.broadcast %307 : vector<16x1xf32> to vector<16x32xf32>
    %316 = arith.subf %295, %315 : vector<16x32xf32>
    %cst_125 = arith.constant 9.99999996E-13 : f32
    %317 = vector.broadcast %cst_125 : f32 to vector<16x1xf32>
    %318 = arith.addf %314, %317 : vector<16x1xf32>
    %319 = math.rsqrt %318 : vector<16x1xf32>
    %320 = vector.broadcast %319 : vector<16x1xf32> to vector<16x32xf32>
    %321 = arith.mulf %316, %320 : vector<16x32xf32>
    %322 = vector.broadcast %301 : vector<1x32xf32> to vector<16x32xf32>
    %323 = arith.mulf %321, %322 : vector<16x32xf32>
    %324 = vector.broadcast %303 : vector<1x32xf32> to vector<16x32xf32>
    %325 = arith.addf %323, %324 : vector<16x32xf32>
    %c1_126 = arith.constant 1 : index
    %c2_127 = arith.constant 2 : index
    %c0_128 = arith.constant 0 : index
    %326 = vector.load %arg2[%c1_126, %c2_127, %c0_128] : memref<2x338x96xf32, #tpu.memory_space<vmem>>, vector<1x32x96xf32>
    %327 = vector.shape_cast %326 : vector<1x32x96xf32> to vector<32x96xf32>
    %c1_129 = arith.constant 1 : index
    %c34_130 = arith.constant 34 : index
    %c0_131 = arith.constant 0 : index
    %328 = vector.load %arg2[%c1_129, %c34_130, %c0_131] : memref<2x338x96xf32, #tpu.memory_space<vmem>>, vector<1x32x32xf32>
    %329 = vector.shape_cast %328 : vector<1x32x32xf32> to vector<32x32xf32>
    %c1_132 = arith.constant 1 : index
    %c66_133 = arith.constant 66 : index
    %c0_134 = arith.constant 0 : index
    %330 = vector.load %arg2[%c1_132, %c66_133, %c0_134] : memref<2x338x96xf32, #tpu.memory_space<vmem>>, vector<1x32x64xf32>
    %331 = vector.shape_cast %330 : vector<1x32x64xf32> to vector<32x64xf32>
    %c1_135 = arith.constant 1 : index
    %c98_136 = arith.constant 98 : index
    %c0_137 = arith.constant 0 : index
    %332 = vector.load %arg2[%c1_135, %c98_136, %c0_137] : memref<2x338x96xf32, #tpu.memory_space<vmem>>, vector<1x64x32xf32>
    %333 = vector.shape_cast %332 : vector<1x64x32xf32> to vector<64x32xf32>
    %cst_138 = arith.constant dense<0.000000e+00> : vector<16x96xf32>
    %334 = tpu.matmul %325, %327, %cst_138 {dimension_numbers = #tpu.dot_dimension_numbers<[1], [0], [0], [1], [0, 0, 1, 1], [], []>} : vector<16x32xf32>, vector<32x96xf32>, vector<16x96xf32> -> vector<16x96xf32>
    %c1_139 = arith.constant 1 : index
    %c162_140 = arith.constant 162 : index
    %c0_141 = arith.constant 0 : index
    %335 = vector.load %arg2[%c1_139, %c162_140, %c0_141] : memref<2x338x96xf32, #tpu.memory_space<vmem>>, vector<1x1x96xf32>
    %336 = vector.shape_cast %335 : vector<1x1x96xf32> to vector<1x96xf32>
    %337 = vector.broadcast %336 : vector<1x96xf32> to vector<16x96xf32>
    %338 = arith.addf %334, %337 : vector<16x96xf32>
    %339 = vector.extract_strided_slice %338 {offsets = [0, 0], sizes = [16, 16], strides = [1, 1]} : vector<16x96xf32> to vector<16x16xf32>
    %340 = vector.shape_cast %339 : vector<16x16xf32> to vector<2x8x16xf32>
    %341 = vector.extract_strided_slice %338 {offsets = [0, 16], sizes = [16, 16], strides = [1, 1]} : vector<16x96xf32> to vector<16x16xf32>
    %342 = vector.shape_cast %341 : vector<16x16xf32> to vector<2x8x16xf32>
    %343 = tpu.concatenate %340, %342 in 0 : vector<2x8x16xf32>, vector<2x8x16xf32> -> vector<4x8x16xf32>
    %344 = vector.extract_strided_slice %338 {offsets = [0, 32], sizes = [16, 16], strides = [1, 1]} : vector<16x96xf32> to vector<16x16xf32>
    %345 = vector.shape_cast %344 : vector<16x16xf32> to vector<2x8x16xf32>
    %346 = vector.extract_strided_slice %338 {offsets = [0, 48], sizes = [16, 16], strides = [1, 1]} : vector<16x96xf32> to vector<16x16xf32>
    %347 = vector.shape_cast %346 : vector<16x16xf32> to vector<2x8x16xf32>
    %348 = tpu.concatenate %345, %347 in 0 : vector<2x8x16xf32>, vector<2x8x16xf32> -> vector<4x8x16xf32>
    %349 = vector.extract_strided_slice %338 {offsets = [0, 64], sizes = [16, 16], strides = [1, 1]} : vector<16x96xf32> to vector<16x16xf32>
    %350 = vector.shape_cast %349 : vector<16x16xf32> to vector<2x8x16xf32>
    %351 = vector.extract_strided_slice %338 {offsets = [0, 80], sizes = [16, 16], strides = [1, 1]} : vector<16x96xf32> to vector<16x16xf32>
    %352 = vector.shape_cast %351 : vector<16x16xf32> to vector<2x8x16xf32>
    %353 = tpu.concatenate %350, %352 in 0 : vector<2x8x16xf32>, vector<2x8x16xf32> -> vector<4x8x16xf32>
    "tpu.trace_start"() <{level = 10 : i32, message = "bqd,bkd->bqk"}> : () -> ()
    %cst_142 = arith.constant dense<0.000000e+00> : vector<4x8x8xf32>
    %354 = tpu.matmul %343, %348, %cst_142 {dimension_numbers = #tpu.dot_dimension_numbers<[2], [2], [1], [1], [0, 0, 0, 1, 1, 1], [0], [0]>} : vector<4x8x16xf32>, vector<4x8x16xf32>, vector<4x8x8xf32> -> vector<4x8x8xf32>
    "tpu.trace_stop"() : () -> ()
    %355 = vector.broadcast %299 : vector<4x1x8xf32> to vector<4x8x8xf32>
    %356 = arith.addf %354, %355 : vector<4x8x8xf32>
    %cst_143 = arith.constant dense<0xFF800000> : vector<4x8xf32>
    %357 = vector.multi_reduction <maximumf>, %356, %cst_143 [2] : vector<4x8x8xf32> to vector<4x8xf32>
    %358 = vector.shape_cast %357 : vector<4x8xf32> to vector<4x8x1xf32>
    %359 = vector.broadcast %358 : vector<4x8x1xf32> to vector<4x8x8xf32>
    %360 = arith.subf %356, %359 : vector<4x8x8xf32>
    %361 = math.exp %360 : vector<4x8x8xf32>
    %cst_144 = arith.constant dense<0.000000e+00> : vector<4x8xf32>
    %362 = vector.multi_reduction <add>, %361, %cst_144 [2] : vector<4x8x8xf32> to vector<4x8xf32>
    %363 = vector.shape_cast %362 : vector<4x8xf32> to vector<4x8x1xf32>
    %364 = vector.broadcast %363 : vector<4x8x1xf32> to vector<4x8x8xf32>
    %365 = arith.divf %361, %364 : vector<4x8x8xf32>
    "tpu.trace_start"() <{level = 10 : i32, message = "bqk,bkd->bqd"}> : () -> ()
    %cst_145 = arith.constant dense<0.000000e+00> : vector<4x8x16xf32>
    %366 = tpu.matmul %365, %353, %cst_145 {dimension_numbers = #tpu.dot_dimension_numbers<[2], [1], [1], [2], [0, 0, 0, 1, 1, 2], [0], [0]>} : vector<4x8x8xf32>, vector<4x8x16xf32>, vector<4x8x16xf32> -> vector<4x8x16xf32>
    "tpu.trace_stop"() : () -> ()
    %367 = vector.extract_strided_slice %366 {offsets = [0, 0, 0], sizes = [2, 8, 16], strides = [1, 1, 1]} : vector<4x8x16xf32> to vector<2x8x16xf32>
    %368 = vector.shape_cast %367 : vector<2x8x16xf32> to vector<16x16xf32>
    %369 = vector.extract_strided_slice %366 {offsets = [2, 0, 0], sizes = [2, 8, 16], strides = [1, 1, 1]} : vector<4x8x16xf32> to vector<2x8x16xf32>
    %370 = vector.shape_cast %369 : vector<2x8x16xf32> to vector<16x16xf32>
    %371 = tpu.concatenate %368, %370 in 1 : vector<16x16xf32>, vector<16x16xf32> -> vector<16x32xf32>
    %cst_146 = arith.constant dense<0.000000e+00> : vector<16x32xf32>
    %372 = tpu.matmul %371, %329, %cst_146 {dimension_numbers = #tpu.dot_dimension_numbers<[1], [0], [0], [1], [0, 0, 1, 1], [], []>} : vector<16x32xf32>, vector<32x32xf32>, vector<16x32xf32> -> vector<16x32xf32>
    %c1_147 = arith.constant 1 : index
    %c163_148 = arith.constant 163 : index
    %c0_149 = arith.constant 0 : index
    %373 = vector.load %arg2[%c1_147, %c163_148, %c0_149] : memref<2x338x96xf32, #tpu.memory_space<vmem>>, vector<1x1x32xf32>
    %374 = vector.shape_cast %373 : vector<1x1x32xf32> to vector<1x32xf32>
    %375 = vector.broadcast %374 : vector<1x32xf32> to vector<16x32xf32>
    %376 = arith.addf %372, %375 : vector<16x32xf32>
    %377 = arith.addf %325, %376 : vector<16x32xf32>
    %c1_150 = arith.constant 1 : index
    %c164_151 = arith.constant 164 : index
    %c0_152 = arith.constant 0 : index
    %378 = vector.load %arg2[%c1_150, %c164_151, %c0_152] : memref<2x338x96xf32, #tpu.memory_space<vmem>>, vector<1x1x32xf32>
    %379 = vector.shape_cast %378 : vector<1x1x32xf32> to vector<1x32xf32>
    %c1_153 = arith.constant 1 : index
    %c165_154 = arith.constant 165 : index
    %c0_155 = arith.constant 0 : index
    %380 = vector.load %arg2[%c1_153, %c165_154, %c0_155] : memref<2x338x96xf32, #tpu.memory_space<vmem>>, vector<1x1x32xf32>
    %381 = vector.shape_cast %380 : vector<1x1x32xf32> to vector<1x32xf32>
    %cst_156 = arith.constant dense<0.000000e+00> : vector<16xf32>
    %382 = vector.multi_reduction <add>, %377, %cst_156 [1] : vector<16x32xf32> to vector<16xf32>
    %383 = vector.shape_cast %382 : vector<16xf32> to vector<16x1xf32>
    %cst_157 = arith.constant 3.200000e+01 : f32
    %384 = vector.broadcast %cst_157 : f32 to vector<16x1xf32>
    %385 = arith.divf %383, %384 : vector<16x1xf32>
    %386 = vector.broadcast %385 : vector<16x1xf32> to vector<16x32xf32>
    %387 = arith.subf %377, %386 : vector<16x32xf32>
    %388 = arith.mulf %387, %387 : vector<16x32xf32>
    %cst_158 = arith.constant dense<0.000000e+00> : vector<16xf32>
    %389 = vector.multi_reduction <add>, %388, %cst_158 [1] : vector<16x32xf32> to vector<16xf32>
    %390 = vector.shape_cast %389 : vector<16xf32> to vector<16x1xf32>
    %cst_159 = arith.constant 3.200000e+01 : f32
    %391 = vector.broadcast %cst_159 : f32 to vector<16x1xf32>
    %392 = arith.divf %390, %391 : vector<16x1xf32>
    %393 = vector.broadcast %385 : vector<16x1xf32> to vector<16x32xf32>
    %394 = arith.subf %377, %393 : vector<16x32xf32>
    %cst_160 = arith.constant 9.99999996E-13 : f32
    %395 = vector.broadcast %cst_160 : f32 to vector<16x1xf32>
    %396 = arith.addf %392, %395 : vector<16x1xf32>
    %397 = math.rsqrt %396 : vector<16x1xf32>
    %398 = vector.broadcast %397 : vector<16x1xf32> to vector<16x32xf32>
    %399 = arith.mulf %394, %398 : vector<16x32xf32>
    %400 = vector.broadcast %379 : vector<1x32xf32> to vector<16x32xf32>
    %401 = arith.mulf %399, %400 : vector<16x32xf32>
    %402 = vector.broadcast %381 : vector<1x32xf32> to vector<16x32xf32>
    %403 = arith.addf %401, %402 : vector<16x32xf32>
    %cst_161 = arith.constant dense<0.000000e+00> : vector<16x64xf32>
    %404 = tpu.matmul %403, %331, %cst_161 {dimension_numbers = #tpu.dot_dimension_numbers<[1], [0], [0], [1], [0, 0, 1, 1], [], []>} : vector<16x32xf32>, vector<32x64xf32>, vector<16x64xf32> -> vector<16x64xf32>
    %c1_162 = arith.constant 1 : index
    %c166_163 = arith.constant 166 : index
    %c0_164 = arith.constant 0 : index
    %405 = vector.load %arg2[%c1_162, %c166_163, %c0_164] : memref<2x338x96xf32, #tpu.memory_space<vmem>>, vector<1x1x64xf32>
    %406 = vector.shape_cast %405 : vector<1x1x64xf32> to vector<1x64xf32>
    %407 = vector.broadcast %406 : vector<1x64xf32> to vector<16x64xf32>
    %408 = arith.addf %404, %407 : vector<16x64xf32>
    %409 = arith.mulf %408, %408 : vector<16x64xf32>
    %410 = arith.mulf %408, %409 : vector<16x64xf32>
    %cst_165 = arith.constant 4.471500e-02 : f32
    %411 = vector.broadcast %cst_165 : f32 to vector<16x64xf32>
    %412 = arith.mulf %411, %410 : vector<16x64xf32>
    %413 = arith.addf %408, %412 : vector<16x64xf32>
    %cst_166 = arith.constant 0.797884583 : f32
    %414 = vector.broadcast %cst_166 : f32 to vector<16x64xf32>
    %415 = arith.mulf %414, %413 : vector<16x64xf32>
    %416 = math.tanh %415 : vector<16x64xf32>
    %cst_167 = arith.constant 1.000000e+00 : f32
    %417 = vector.broadcast %cst_167 : f32 to vector<16x64xf32>
    %418 = arith.addf %417, %416 : vector<16x64xf32>
    %cst_168 = arith.constant 5.000000e-01 : f32
    %419 = vector.broadcast %cst_168 : f32 to vector<16x64xf32>
    %420 = arith.mulf %419, %418 : vector<16x64xf32>
    %421 = arith.mulf %408, %420 : vector<16x64xf32>
    %cst_169 = arith.constant dense<0.000000e+00> : vector<16x32xf32>
    %422 = tpu.matmul %421, %333, %cst_169 {dimension_numbers = #tpu.dot_dimension_numbers<[1], [0], [0], [1], [0, 0, 1, 1], [], []>} : vector<16x64xf32>, vector<64x32xf32>, vector<16x32xf32> -> vector<16x32xf32>
    %c1_170 = arith.constant 1 : index
    %c167_171 = arith.constant 167 : index
    %c0_172 = arith.constant 0 : index
    %423 = vector.load %arg2[%c1_170, %c167_171, %c0_172] : memref<2x338x96xf32, #tpu.memory_space<vmem>>, vector<1x1x32xf32>
    %424 = vector.shape_cast %423 : vector<1x1x32xf32> to vector<1x32xf32>
    %425 = vector.broadcast %424 : vector<1x32xf32> to vector<16x32xf32>
    %426 = arith.addf %422, %425 : vector<16x32xf32>
    %427 = arith.addf %403, %426 : vector<16x32xf32>
    %c1_173 = arith.constant 1 : index
    %c168_174 = arith.constant 168 : index
    %c0_175 = arith.constant 0 : index
    %428 = vector.load %arg2[%c1_173, %c168_174, %c0_175] : memref<2x338x96xf32, #tpu.memory_space<vmem>>, vector<1x1x32xf32>
    %429 = vector.shape_cast %428 : vector<1x1x32xf32> to vector<1x32xf32>
    %c1_176 = arith.constant 1 : index
    %c169_177 = arith.constant 169 : index
    %c0_178 = arith.constant 0 : index
    %430 = vector.load %arg2[%c1_176, %c169_177, %c0_178] : memref<2x338x96xf32, #tpu.memory_space<vmem>>, vector<1x1x32xf32>
    %431 = vector.shape_cast %430 : vector<1x1x32xf32> to vector<1x32xf32>
    %cst_179 = arith.constant dense<0.000000e+00> : vector<16xf32>
    %432 = vector.multi_reduction <add>, %427, %cst_179 [1] : vector<16x32xf32> to vector<16xf32>
    %433 = vector.shape_cast %432 : vector<16xf32> to vector<16x1xf32>
    %cst_180 = arith.constant 3.200000e+01 : f32
    %434 = vector.broadcast %cst_180 : f32 to vector<16x1xf32>
    %435 = arith.divf %433, %434 : vector<16x1xf32>
    %436 = vector.broadcast %435 : vector<16x1xf32> to vector<16x32xf32>
    %437 = arith.subf %427, %436 : vector<16x32xf32>
    %438 = arith.mulf %437, %437 : vector<16x32xf32>
    %cst_181 = arith.constant dense<0.000000e+00> : vector<16xf32>
    %439 = vector.multi_reduction <add>, %438, %cst_181 [1] : vector<16x32xf32> to vector<16xf32>
    %440 = vector.shape_cast %439 : vector<16xf32> to vector<16x1xf32>
    %cst_182 = arith.constant 3.200000e+01 : f32
    %441 = vector.broadcast %cst_182 : f32 to vector<16x1xf32>
    %442 = arith.divf %440, %441 : vector<16x1xf32>
    %443 = vector.broadcast %435 : vector<16x1xf32> to vector<16x32xf32>
    %444 = arith.subf %427, %443 : vector<16x32xf32>
    %cst_183 = arith.constant 9.99999996E-13 : f32
    %445 = vector.broadcast %cst_183 : f32 to vector<16x1xf32>
    %446 = arith.addf %442, %445 : vector<16x1xf32>
    %447 = math.rsqrt %446 : vector<16x1xf32>
    %448 = vector.broadcast %447 : vector<16x1xf32> to vector<16x32xf32>
    %449 = arith.mulf %444, %448 : vector<16x32xf32>
    %450 = vector.broadcast %429 : vector<1x32xf32> to vector<16x32xf32>
    %451 = arith.mulf %449, %450 : vector<16x32xf32>
    %452 = vector.broadcast %431 : vector<1x32xf32> to vector<16x32xf32>
    %453 = arith.addf %451, %452 : vector<16x32xf32>
    %c1_184 = arith.constant 1 : index
    %c170_185 = arith.constant 170 : index
    %c0_186 = arith.constant 0 : index
    %454 = vector.load %arg2[%c1_184, %c170_185, %c0_186] : memref<2x338x96xf32, #tpu.memory_space<vmem>>, vector<1x32x96xf32>
    %455 = vector.shape_cast %454 : vector<1x32x96xf32> to vector<32x96xf32>
    %c1_187 = arith.constant 1 : index
    %c202_188 = arith.constant 202 : index
    %c0_189 = arith.constant 0 : index
    %456 = vector.load %arg2[%c1_187, %c202_188, %c0_189] : memref<2x338x96xf32, #tpu.memory_space<vmem>>, vector<1x32x32xf32>
    %457 = vector.shape_cast %456 : vector<1x32x32xf32> to vector<32x32xf32>
    %c1_190 = arith.constant 1 : index
    %c234_191 = arith.constant 234 : index
    %c0_192 = arith.constant 0 : index
    %458 = vector.load %arg2[%c1_190, %c234_191, %c0_192] : memref<2x338x96xf32, #tpu.memory_space<vmem>>, vector<1x32x64xf32>
    %459 = vector.shape_cast %458 : vector<1x32x64xf32> to vector<32x64xf32>
    %c1_193 = arith.constant 1 : index
    %c266_194 = arith.constant 266 : index
    %c0_195 = arith.constant 0 : index
    %460 = vector.load %arg2[%c1_193, %c266_194, %c0_195] : memref<2x338x96xf32, #tpu.memory_space<vmem>>, vector<1x64x32xf32>
    %461 = vector.shape_cast %460 : vector<1x64x32xf32> to vector<64x32xf32>
    %cst_196 = arith.constant dense<0.000000e+00> : vector<16x96xf32>
    %462 = tpu.matmul %453, %455, %cst_196 {dimension_numbers = #tpu.dot_dimension_numbers<[1], [0], [0], [1], [0, 0, 1, 1], [], []>} : vector<16x32xf32>, vector<32x96xf32>, vector<16x96xf32> -> vector<16x96xf32>
    %c1_197 = arith.constant 1 : index
    %c330_198 = arith.constant 330 : index
    %c0_199 = arith.constant 0 : index
    %463 = vector.load %arg2[%c1_197, %c330_198, %c0_199] : memref<2x338x96xf32, #tpu.memory_space<vmem>>, vector<1x1x96xf32>
    %464 = vector.shape_cast %463 : vector<1x1x96xf32> to vector<1x96xf32>
    %465 = vector.broadcast %464 : vector<1x96xf32> to vector<16x96xf32>
    %466 = arith.addf %462, %465 : vector<16x96xf32>
    %467 = vector.extract_strided_slice %466 {offsets = [0, 0], sizes = [16, 16], strides = [1, 1]} : vector<16x96xf32> to vector<16x16xf32>
    %468 = vector.shape_cast %467 : vector<16x16xf32> to vector<2x8x16xf32>
    %469 = vector.extract_strided_slice %466 {offsets = [0, 16], sizes = [16, 16], strides = [1, 1]} : vector<16x96xf32> to vector<16x16xf32>
    %470 = vector.shape_cast %469 : vector<16x16xf32> to vector<2x8x16xf32>
    %471 = tpu.concatenate %468, %470 in 0 : vector<2x8x16xf32>, vector<2x8x16xf32> -> vector<4x8x16xf32>
    %472 = vector.extract_strided_slice %466 {offsets = [0, 32], sizes = [16, 16], strides = [1, 1]} : vector<16x96xf32> to vector<16x16xf32>
    %473 = vector.shape_cast %472 : vector<16x16xf32> to vector<2x8x16xf32>
    %474 = vector.extract_strided_slice %466 {offsets = [0, 48], sizes = [16, 16], strides = [1, 1]} : vector<16x96xf32> to vector<16x16xf32>
    %475 = vector.shape_cast %474 : vector<16x16xf32> to vector<2x8x16xf32>
    %476 = tpu.concatenate %473, %475 in 0 : vector<2x8x16xf32>, vector<2x8x16xf32> -> vector<4x8x16xf32>
    %477 = vector.extract_strided_slice %466 {offsets = [0, 64], sizes = [16, 16], strides = [1, 1]} : vector<16x96xf32> to vector<16x16xf32>
    %478 = vector.shape_cast %477 : vector<16x16xf32> to vector<2x8x16xf32>
    %479 = vector.extract_strided_slice %466 {offsets = [0, 80], sizes = [16, 16], strides = [1, 1]} : vector<16x96xf32> to vector<16x16xf32>
    %480 = vector.shape_cast %479 : vector<16x16xf32> to vector<2x8x16xf32>
    %481 = tpu.concatenate %478, %480 in 0 : vector<2x8x16xf32>, vector<2x8x16xf32> -> vector<4x8x16xf32>
    "tpu.trace_start"() <{level = 10 : i32, message = "bqd,bkd->bqk"}> : () -> ()
    %cst_200 = arith.constant dense<0.000000e+00> : vector<4x8x8xf32>
    %482 = tpu.matmul %471, %476, %cst_200 {dimension_numbers = #tpu.dot_dimension_numbers<[2], [2], [1], [1], [0, 0, 0, 1, 1, 1], [0], [0]>} : vector<4x8x16xf32>, vector<4x8x16xf32>, vector<4x8x8xf32> -> vector<4x8x8xf32>
    "tpu.trace_stop"() : () -> ()
    %483 = vector.broadcast %299 : vector<4x1x8xf32> to vector<4x8x8xf32>
    %484 = arith.addf %482, %483 : vector<4x8x8xf32>
    %cst_201 = arith.constant dense<0xFF800000> : vector<4x8xf32>
    %485 = vector.multi_reduction <maximumf>, %484, %cst_201 [2] : vector<4x8x8xf32> to vector<4x8xf32>
    %486 = vector.shape_cast %485 : vector<4x8xf32> to vector<4x8x1xf32>
    %487 = vector.broadcast %486 : vector<4x8x1xf32> to vector<4x8x8xf32>
    %488 = arith.subf %484, %487 : vector<4x8x8xf32>
    %489 = math.exp %488 : vector<4x8x8xf32>
    %cst_202 = arith.constant dense<0.000000e+00> : vector<4x8xf32>
    %490 = vector.multi_reduction <add>, %489, %cst_202 [2] : vector<4x8x8xf32> to vector<4x8xf32>
    %491 = vector.shape_cast %490 : vector<4x8xf32> to vector<4x8x1xf32>
    %492 = vector.broadcast %491 : vector<4x8x1xf32> to vector<4x8x8xf32>
    %493 = arith.divf %489, %492 : vector<4x8x8xf32>
    "tpu.trace_start"() <{level = 10 : i32, message = "bqk,bkd->bqd"}> : () -> ()
    %cst_203 = arith.constant dense<0.000000e+00> : vector<4x8x16xf32>
    %494 = tpu.matmul %493, %481, %cst_203 {dimension_numbers = #tpu.dot_dimension_numbers<[2], [1], [1], [2], [0, 0, 0, 1, 1, 2], [0], [0]>} : vector<4x8x8xf32>, vector<4x8x16xf32>, vector<4x8x16xf32> -> vector<4x8x16xf32>
    "tpu.trace_stop"() : () -> ()
    %495 = vector.extract_strided_slice %494 {offsets = [0, 0, 0], sizes = [2, 8, 16], strides = [1, 1, 1]} : vector<4x8x16xf32> to vector<2x8x16xf32>
    %496 = vector.shape_cast %495 : vector<2x8x16xf32> to vector<16x16xf32>
    %497 = vector.extract_strided_slice %494 {offsets = [2, 0, 0], sizes = [2, 8, 16], strides = [1, 1, 1]} : vector<4x8x16xf32> to vector<2x8x16xf32>
    %498 = vector.shape_cast %497 : vector<2x8x16xf32> to vector<16x16xf32>
    %499 = tpu.concatenate %496, %498 in 1 : vector<16x16xf32>, vector<16x16xf32> -> vector<16x32xf32>
    %cst_204 = arith.constant dense<0.000000e+00> : vector<16x32xf32>
    %500 = tpu.matmul %499, %457, %cst_204 {dimension_numbers = #tpu.dot_dimension_numbers<[1], [0], [0], [1], [0, 0, 1, 1], [], []>} : vector<16x32xf32>, vector<32x32xf32>, vector<16x32xf32> -> vector<16x32xf32>
    %c1_205 = arith.constant 1 : index
    %c331_206 = arith.constant 331 : index
    %c0_207 = arith.constant 0 : index
    %501 = vector.load %arg2[%c1_205, %c331_206, %c0_207] : memref<2x338x96xf32, #tpu.memory_space<vmem>>, vector<1x1x32xf32>
    %502 = vector.shape_cast %501 : vector<1x1x32xf32> to vector<1x32xf32>
    %503 = vector.broadcast %502 : vector<1x32xf32> to vector<16x32xf32>
    %504 = arith.addf %500, %503 : vector<16x32xf32>
    %505 = arith.addf %453, %504 : vector<16x32xf32>
    %c1_208 = arith.constant 1 : index
    %c332_209 = arith.constant 332 : index
    %c0_210 = arith.constant 0 : index
    %506 = vector.load %arg2[%c1_208, %c332_209, %c0_210] : memref<2x338x96xf32, #tpu.memory_space<vmem>>, vector<1x1x32xf32>
    %507 = vector.shape_cast %506 : vector<1x1x32xf32> to vector<1x32xf32>
    %c1_211 = arith.constant 1 : index
    %c333_212 = arith.constant 333 : index
    %c0_213 = arith.constant 0 : index
    %508 = vector.load %arg2[%c1_211, %c333_212, %c0_213] : memref<2x338x96xf32, #tpu.memory_space<vmem>>, vector<1x1x32xf32>
    %509 = vector.shape_cast %508 : vector<1x1x32xf32> to vector<1x32xf32>
    %cst_214 = arith.constant dense<0.000000e+00> : vector<16xf32>
    %510 = vector.multi_reduction <add>, %505, %cst_214 [1] : vector<16x32xf32> to vector<16xf32>
    %511 = vector.shape_cast %510 : vector<16xf32> to vector<16x1xf32>
    %cst_215 = arith.constant 3.200000e+01 : f32
    %512 = vector.broadcast %cst_215 : f32 to vector<16x1xf32>
    %513 = arith.divf %511, %512 : vector<16x1xf32>
    %514 = vector.broadcast %513 : vector<16x1xf32> to vector<16x32xf32>
    %515 = arith.subf %505, %514 : vector<16x32xf32>
    %516 = arith.mulf %515, %515 : vector<16x32xf32>
    %cst_216 = arith.constant dense<0.000000e+00> : vector<16xf32>
    %517 = vector.multi_reduction <add>, %516, %cst_216 [1] : vector<16x32xf32> to vector<16xf32>
    %518 = vector.shape_cast %517 : vector<16xf32> to vector<16x1xf32>
    %cst_217 = arith.constant 3.200000e+01 : f32
    %519 = vector.broadcast %cst_217 : f32 to vector<16x1xf32>
    %520 = arith.divf %518, %519 : vector<16x1xf32>
    %521 = vector.broadcast %513 : vector<16x1xf32> to vector<16x32xf32>
    %522 = arith.subf %505, %521 : vector<16x32xf32>
    %cst_218 = arith.constant 9.99999996E-13 : f32
    %523 = vector.broadcast %cst_218 : f32 to vector<16x1xf32>
    %524 = arith.addf %520, %523 : vector<16x1xf32>
    %525 = math.rsqrt %524 : vector<16x1xf32>
    %526 = vector.broadcast %525 : vector<16x1xf32> to vector<16x32xf32>
    %527 = arith.mulf %522, %526 : vector<16x32xf32>
    %528 = vector.broadcast %507 : vector<1x32xf32> to vector<16x32xf32>
    %529 = arith.mulf %527, %528 : vector<16x32xf32>
    %530 = vector.broadcast %509 : vector<1x32xf32> to vector<16x32xf32>
    %531 = arith.addf %529, %530 : vector<16x32xf32>
    %cst_219 = arith.constant dense<0.000000e+00> : vector<16x64xf32>
    %532 = tpu.matmul %531, %459, %cst_219 {dimension_numbers = #tpu.dot_dimension_numbers<[1], [0], [0], [1], [0, 0, 1, 1], [], []>} : vector<16x32xf32>, vector<32x64xf32>, vector<16x64xf32> -> vector<16x64xf32>
    %c1_220 = arith.constant 1 : index
    %c334_221 = arith.constant 334 : index
    %c0_222 = arith.constant 0 : index
    %533 = vector.load %arg2[%c1_220, %c334_221, %c0_222] : memref<2x338x96xf32, #tpu.memory_space<vmem>>, vector<1x1x64xf32>
    %534 = vector.shape_cast %533 : vector<1x1x64xf32> to vector<1x64xf32>
    %535 = vector.broadcast %534 : vector<1x64xf32> to vector<16x64xf32>
    %536 = arith.addf %532, %535 : vector<16x64xf32>
    %537 = arith.mulf %536, %536 : vector<16x64xf32>
    %538 = arith.mulf %536, %537 : vector<16x64xf32>
    %cst_223 = arith.constant 4.471500e-02 : f32
    %539 = vector.broadcast %cst_223 : f32 to vector<16x64xf32>
    %540 = arith.mulf %539, %538 : vector<16x64xf32>
    %541 = arith.addf %536, %540 : vector<16x64xf32>
    %cst_224 = arith.constant 0.797884583 : f32
    %542 = vector.broadcast %cst_224 : f32 to vector<16x64xf32>
    %543 = arith.mulf %542, %541 : vector<16x64xf32>
    %544 = math.tanh %543 : vector<16x64xf32>
    %cst_225 = arith.constant 1.000000e+00 : f32
    %545 = vector.broadcast %cst_225 : f32 to vector<16x64xf32>
    %546 = arith.addf %545, %544 : vector<16x64xf32>
    %cst_226 = arith.constant 5.000000e-01 : f32
    %547 = vector.broadcast %cst_226 : f32 to vector<16x64xf32>
    %548 = arith.mulf %547, %546 : vector<16x64xf32>
    %549 = arith.mulf %536, %548 : vector<16x64xf32>
    %cst_227 = arith.constant dense<0.000000e+00> : vector<16x32xf32>
    %550 = tpu.matmul %549, %461, %cst_227 {dimension_numbers = #tpu.dot_dimension_numbers<[1], [0], [0], [1], [0, 0, 1, 1], [], []>} : vector<16x64xf32>, vector<64x32xf32>, vector<16x32xf32> -> vector<16x32xf32>
    %c1_228 = arith.constant 1 : index
    %c335_229 = arith.constant 335 : index
    %c0_230 = arith.constant 0 : index
    %551 = vector.load %arg2[%c1_228, %c335_229, %c0_230] : memref<2x338x96xf32, #tpu.memory_space<vmem>>, vector<1x1x32xf32>
    %552 = vector.shape_cast %551 : vector<1x1x32xf32> to vector<1x32xf32>
    %553 = vector.broadcast %552 : vector<1x32xf32> to vector<16x32xf32>
    %554 = arith.addf %550, %553 : vector<16x32xf32>
    %555 = arith.addf %531, %554 : vector<16x32xf32>
    %c1_231 = arith.constant 1 : index
    %c336_232 = arith.constant 336 : index
    %c0_233 = arith.constant 0 : index
    %556 = vector.load %arg2[%c1_231, %c336_232, %c0_233] : memref<2x338x96xf32, #tpu.memory_space<vmem>>, vector<1x1x32xf32>
    %557 = vector.shape_cast %556 : vector<1x1x32xf32> to vector<1x32xf32>
    %c1_234 = arith.constant 1 : index
    %c337_235 = arith.constant 337 : index
    %c0_236 = arith.constant 0 : index
    %558 = vector.load %arg2[%c1_234, %c337_235, %c0_236] : memref<2x338x96xf32, #tpu.memory_space<vmem>>, vector<1x1x32xf32>
    %559 = vector.shape_cast %558 : vector<1x1x32xf32> to vector<1x32xf32>
    %cst_237 = arith.constant dense<0.000000e+00> : vector<16xf32>
    %560 = vector.multi_reduction <add>, %555, %cst_237 [1] : vector<16x32xf32> to vector<16xf32>
    %561 = vector.shape_cast %560 : vector<16xf32> to vector<16x1xf32>
    %cst_238 = arith.constant 3.200000e+01 : f32
    %562 = vector.broadcast %cst_238 : f32 to vector<16x1xf32>
    %563 = arith.divf %561, %562 : vector<16x1xf32>
    %564 = vector.broadcast %563 : vector<16x1xf32> to vector<16x32xf32>
    %565 = arith.subf %555, %564 : vector<16x32xf32>
    %566 = arith.mulf %565, %565 : vector<16x32xf32>
    %cst_239 = arith.constant dense<0.000000e+00> : vector<16xf32>
    %567 = vector.multi_reduction <add>, %566, %cst_239 [1] : vector<16x32xf32> to vector<16xf32>
    %568 = vector.shape_cast %567 : vector<16xf32> to vector<16x1xf32>
    %cst_240 = arith.constant 3.200000e+01 : f32
    %569 = vector.broadcast %cst_240 : f32 to vector<16x1xf32>
    %570 = arith.divf %568, %569 : vector<16x1xf32>
    %571 = vector.broadcast %563 : vector<16x1xf32> to vector<16x32xf32>
    %572 = arith.subf %555, %571 : vector<16x32xf32>
    %cst_241 = arith.constant 9.99999996E-13 : f32
    %573 = vector.broadcast %cst_241 : f32 to vector<16x1xf32>
    %574 = arith.addf %570, %573 : vector<16x1xf32>
    %575 = math.rsqrt %574 : vector<16x1xf32>
    %576 = vector.broadcast %575 : vector<16x1xf32> to vector<16x32xf32>
    %577 = arith.mulf %572, %576 : vector<16x32xf32>
    %578 = vector.broadcast %557 : vector<1x32xf32> to vector<16x32xf32>
    %579 = arith.mulf %577, %578 : vector<16x32xf32>
    %580 = vector.broadcast %559 : vector<1x32xf32> to vector<16x32xf32>
    %581 = arith.addf %579, %580 : vector<16x32xf32>
    %582 = vector.shape_cast %581 : vector<16x32xf32> to vector<2x8x32xf32>
    %583 = vector.extract_strided_slice %582 {offsets = [0, 0, 0], sizes = [2, 1, 32], strides = [1, 1, 1]} : vector<2x8x32xf32> to vector<2x1x32xf32>
    %584 = vector.shape_cast %583 : vector<2x1x32xf32> to vector<2x32xf32>
    %c1_242 = arith.constant 1 : index
    %c0_243 = arith.constant 0 : index
    %c0_244 = arith.constant 0 : index
    %585 = vector.load %arg3[%c1_242, %c0_243, %c0_244] : memref<2x2x32xf32, #tpu.memory_space<vmem>>, vector<1x2x32xf32>
    %586 = vector.shape_cast %585 : vector<1x2x32xf32> to vector<2x32xf32>
    %587 = vector.shape_cast %584 : vector<2x32xf32> to vector<1x2x32xf32>
    tpu.vector_store %arg3[%c1_242, %c0_243, %c0_244], %587 {strides = array<i32>} : memref<2x2x32xf32, #tpu.memory_space<vmem>>, vector<1x2x32xf32>,
    return
  }
}

</mosaic_0001>

<llo_original>
// kernel: tpu_custom_call.1
$region0: #{tpu_custom_call.1}
  #allocation0 [shape = 'u32[]', space=smem, size = 0x4, offset = 0x4, fixed_abs, tag = 'smem constant byte address 0x4 - core index']
  #allocation1 [shape = 'u32[144,128]{1,0:T(1,128)}', space=vmem, size = 0x12000, scoped, tag = 'internal scratch']
  %s0 = inlined_call_operand.vmem [shape: f32[2,16,32], index: 0, kind: input, shape index: {}]
  %s1 = inlined_call_operand.vmem [shape: f32[2,2,8], index: 1, kind: input, shape index: {}]
  %s2 = inlined_call_operand.vmem [shape: f32[2,338,96], index: 2, kind: input, shape index: {}]
  %s3 = inlined_call_operand.hbm [shape: f32[2,2,32], index: 3, kind: output, shape index: {}]
  %s4 = sld [smem:[#allocation0]]
  $region22: #{tpu_custom_call.1} parent=0
    _
  %s6 = ssub.s32 1, %s4
  %s7 = scalar_select 0, %s6, %s4
  $region1: #{tpu_custom_call.1} parent=0
    #allocation2 [shape = 'u8[2048]{0}', space=vmem, size = 0x800, scoped, tag = 'output window, operand 0, single buffered']
    #allocation3 [shape = 's32[1]{0}', space=sflag, size = 0x4, scoped, tag = 'scoped memory for tpu_custom_call.1']
    %8 = vsyncpa [#allocation3], 0
    // Predicated region
    $region2: #{tpu_custom_call.1} parent=1 // pred_check
      _
    $region3: #{tpu_custom_call.1} parent=1 // pred_check_branch
      %10 = sbr.rel (0) target = $region5
    $region4: #{tpu_custom_call.1} parent=1 // pred_region
      _
    $region5: #{tpu_custom_call.1} parent=1 // pred_fallthru
      _
    // Predicated region
    $region6: #{tpu_custom_call.1} parent=1 // pred_check
      _
    $region7: #{tpu_custom_call.1} parent=1 // pred_check_branch
      %12 = sbr.rel (0) target = $region9
    $region8: #{tpu_custom_call.1} parent=1 // pred_region
      _
    $region9: #{tpu_custom_call.1} parent=1 // pred_fallthru
      _
    // Predicated region
    $region10: #{tpu_custom_call.1} parent=1 // pred_check
      _
    $region11: #{tpu_custom_call.1} parent=1 // pred_check_branch
      %14 = sbr.rel (0) target = $region13
    $region12: #{tpu_custom_call.1} parent=1 // pred_region
      _
    $region13: #{tpu_custom_call.1} parent=1 // pred_fallthru
      _
    %v15 = vld [vmem:[%s0] sm:$0xff]
    %v16 = vld [vmem:[%s0 + $0x8] sm:$0xff]
    %v17 = vld [vmem:[%s1] sm:$0x3]
    %v20 = vunpack.c.l.s4 1966171168
    %v21 = vunpack.c.0.s8 %v20
    %v22 = vlaneseq
    %v23 = vshrl.u32 %v22, 7
    %v24 = vsub.s32 %v21, %v23
    %v25 = vrot.slane %v17, %v24
    %v26 = vcombine.high %v25, %v25
    %v28 = vunpack.c.l.s4 1966171168
    %v29 = vunpack.c.0.s8 %v28
    %v30 = vlaneseq
    %v31 = vshrl.u32 %v30, 7
    %v32 = vsub.s32 %v29, %v31
    %v33 = vrot.slane %v25, %v32
    %v35 = vunpack.c.l.s4 1966171168
    %v36 = vunpack.c.0.s8 %v35
    %v37 = vlaneseq
    %v38 = vshrl.u32 %v37, 7
    %v39 = vsub.s32 %v36, %v38
    %v40 = vrot.slane %v26, %v39
    %v41 = vld [vmem:[%s2] sm:$0x1]
    %v42 = vld [vmem:[%s2 + $0x1] sm:$0x1]
    %vm43 = vcmask 261120
    %v44 = vsel %vm43, %v15, 0.0
    %45 = vadd.xlane.f32.xlu0 %v44
    %v46 = vpop.xlane.xlu0 %45
    %v47 = vsel %vm43, %v16, 0.0
    %48 = vadd.xlane.f32.xlu0 %v47
    %v49 = vpop.xlane.xlu0 %48
    %v50 = vrcp.pop 32.0
    %v51 = vmul.f32 %v46, %v50
    %v52 = vmul.f32 %v49, %v50
    %v53 = vsub.f32 %v15, %v51
    %v54 = vsub.f32 %v16, %v52
    %v55 = vmul.f32 %v53, %v53
    %v56 = vmul.f32 %v54, %v54
    %v57 = vsel %vm43, %v55, 0.0
    %58 = vadd.xlane.f32.xlu0 %v57
    %v59 = vpop.xlane.xlu0 %58
    %v60 = vsel %vm43, %v56, 0.0
    %61 = vadd.xlane.f32.xlu0 %v60
    %v62 = vpop.xlane.xlu0 %61
    %v63 = vmul.f32 %v59, %v50
    %v64 = vmul.f32 %v62, %v50
    %v65 = vadd.f32 %v63, 1e-12
    %v66 = vadd.f32 %v64, 1e-12
    %v67 = vrsqrt.pop %v65
    %v68 = vrsqrt.pop %v66
    %v69 = vmul.f32 %v53, %v67
    %v70 = vmul.f32 %v54, %v68
    %v71 = vlaneseq
    %v72 = vshrl.u32 %v71, 7
    %v73 = vsub.s32 0, %v72
    %v74 = vrot.slane %v41, %v73
    %v75 = vmul.f32 %v69, %v74
    %v76 = vmul.f32 %v70, %v74
    %v77 = vlaneseq
    %v78 = vshrl.u32 %v77, 7
    %v79 = vsub.s32 0, %v78
    %v80 = vrot.slane %v42, %v79
    %v81 = vadd.f32 %v75, %v80
    %v82 = vadd.f32 %v76, %v80
    %v83 = vld [vmem:[%s2 + $0x2] sm:$0xff]
    %v84 = vld [vmem:[%s2 + $0xa] sm:$0xff]
    %v85 = vld [vmem:[%s2 + $0x12] sm:$0xff]
    %v86 = vld [vmem:[%s2 + $0x1a] sm:$0xff]
    %v87 = vld [vmem:[%s2 + $0x22] sm:$0xff]
    %v88 = vld [vmem:[%s2 + $0x2a] sm:$0xff]
    %v89 = vld [vmem:[%s2 + $0x32] sm:$0xff]
    %v90 = vld [vmem:[%s2 + $0x3a] sm:$0xff]
    %v91 = vld [vmem:[%s2 + $0x42] sm:$0xff]
    %v92 = vld [vmem:[%s2 + $0x4a] sm:$0xff]
    %v93 = vld [vmem:[%s2 + $0x52] sm:$0xff]
    %v94 = vld [vmem:[%s2 + $0x5a] sm:$0xff]
    %v95 = vld [vmem:[%s2 + $0x62] sm:$0xff]
    %v96 = vld [vmem:[%s2 + $0x6a] sm:$0xff]
    %v97 = vld [vmem:[%s2 + $0x72] sm:$0xff]
    %v98 = vld [vmem:[%s2 + $0x7a] sm:$0xff]
    %v99 = vld [vmem:[%s2 + $0x82] sm:$0xff]
    %v100 = vld [vmem:[%s2 + $0x8a] sm:$0xff]
    %v101 = vld [vmem:[%s2 + $0x92] sm:$0xff]
    %v102 = vld [vmem:[%s2 + $0x9a] sm:$0xff]
    %v103 = vld [vmem:[%s2 + $0xa2] sm:$0x1]
    %v104 = vlaneseq
    %v105 = vshrl.u32 %v104, 7
    %v106 = vsub.s32 0, %v105
    %v107 = vrot.slane %v103, %v106
    %v109 = vsel %vm43, %v81, 0
    %v112 = vsel %vm43, %v82, 0
    %114 = vmatprep.subr.mxu0 0.0
    %115 = vmatpush1.msra.mxu0 0.0
    %116 = vmatprep.subr.mxu0 0.0
    %117 = vmatpush1.msra.mxu0 0.0
    %118 = vmatprep.subr.mxu0 0.0
    %119 = vmatpush1.msra.mxu0 0.0
    %120 = vmatprep.subr.mxu0 0.0
    %121 = vmatpush1.msra.mxu0 0.0
    %122 = vmatprep.subr.mxu0 0.0
    %123 = vmatpush1.msra.mxu0 0.0
    %124 = vmatprep.subr.mxu0 0.0
    %125 = vmatpush1.msra.mxu0 0.0
    %126 = vmatprep.subr.mxu0 0.0
    %127 = vmatpush1.msra.mxu0 0.0
    %128 = vmatprep.subr.mxu0 0.0
    %129 = vmatpush1.msra.mxu0 0.0
    %130 = vmatprep.subr.mxu0 0.0
    %131 = vmatpush1.msra.mxu0 0.0
    %132 = vmatprep.subr.mxu0 0.0
    %133 = vmatpush1.msra.mxu0 0.0
    %134 = vmatprep.subr.mxu0 0.0
    %135 = vmatpush1.msra.mxu0 0.0
    %136 = vmatprep.subr.mxu0 0.0
    %137 = vmatpush1.msra.mxu0 0.0
    %138 = vmatprep.subr.mxu0 0.0
    %139 = vmatpush1.msra.mxu0 %v86
    %140 = vmatprep.subr.mxu0 0.0
    %141 = vmatpush1.msra.mxu0 %v85
    %142 = vmatprep.subr.mxu0 0.0
    %143 = vmatpush1.msra.mxu0 %v84
    %144 = vmatprep.subr.mxu0 0.0
    %145 = vmatpush1.msra.mxu0 %v83
    %146 = vmatprep.subr.mxu0 0.0
    %147 = vmatpush2.msra.mxu0 0.0
    %148 = vmatprep.subr.mxu0 0.0
    %149 = vmatpush2.msra.mxu0 0.0
    %150 = vmatprep.subr.mxu0 0.0
    %151 = vmatpush2.msra.mxu0 0.0
    %152 = vmatprep.subr.mxu0 0.0
    %153 = vmatpush2.msra.mxu0 0.0
    %154 = vmatprep.subr.mxu0 0.0
    %155 = vmatpush2.msra.mxu0 0.0
    %156 = vmatprep.subr.mxu0 0.0
    %157 = vmatpush2.msra.mxu0 0.0
    %158 = vmatprep.subr.mxu0 0.0
    %159 = vmatpush2.msra.mxu0 0.0
    %160 = vmatprep.subr.mxu0 0.0
    %161 = vmatpush2.msra.mxu0 0.0
    %162 = vmatprep.subr.mxu0 0.0
    %163 = vmatpush2.msra.mxu0 0.0
    %164 = vmatprep.subr.mxu0 0.0
    %165 = vmatpush2.msra.mxu0 0.0
    %166 = vmatprep.subr.mxu0 0.0
    %167 = vmatpush2.msra.mxu0 0.0
    %168 = vmatprep.subr.mxu0 0.0
    %169 = vmatpush2.msra.mxu0 0.0
    %170 = vmatprep.subr.mxu0 0.0
    %171 = vmatpush2.msra.mxu0 0.0
    %172 = vmatprep.subr.mxu0 0.0
    %173 = vmatpush2.msra.mxu0 0.0
    %174 = vmatprep.subr.mxu0 0.0
    %175 = vmatpush2.msra.mxu0 0.0
    %176 = vmatprep.subr.mxu0 0.0
    %177 = vmatpush2.msra.mxu0 0.0
    %178 = vmatprep.mubr.f32.mxu0 0.0
    %179 = vmatmul.mubr.f32.gmra.mxu0 %v109
    %v180 = vpop.f32.mrf.mxu0
    %v181 = vadd.f32 %v107, %v180
    %v182 = vpop.f32.mrf.mxu0
    %183 = vmatprep.mubr.f32.mxu0 0.0
    %184 = vmatmul.mubr.f32.gmra.mxu0 %v112
    %v185 = vpop.f32.mrf.mxu0
    %v186 = vadd.f32 %v107, %v185
    %v187 = vpop.f32.mrf.mxu0
    %188 = vdwg.mxu0
    %191 = vrot.lane.b32.xlu0 %v181, 112
    %v192 = vpop.permute.xlu0 %191
    %193 = vrot.lane.b32.xlu0 %v186, 112
    %v194 = vpop.permute.xlu0 %193
    %v195 = vlaneseq
    %v196 = vshrl.u32 %v195, 7
    %v197 = vsub.s32 0, %v196
    %v198 = vrot.slane %v33, %v197
    %v199 = vlaneseq
    %v200 = vshrl.u32 %v199, 7
    %v201 = vsub.s32 0, %v200
    %v202 = vrot.slane %v40, %v201
    %205 = vrot.lane.b32.xlu0 %v181, 96
    %v206 = vpop.permute.xlu0 %205
    %vm207 = vcmask 130048
    %v208 = vsel %vm207, %v181, 0
    %v210 = vsel %vm207, %v206, 0
    %212 = vmatprep.subr.mxu0 0.0
    %213 = vmatpush1.xpose.msra.mxu0 0.0
    %214 = vmatprep.subr.mxu0 0.0
    %215 = vmatpush1.xpose.msra.mxu0 0.0
    %216 = vmatprep.subr.mxu0 0.0
    %217 = vmatpush1.xpose.msra.mxu0 0.0
    %218 = vmatprep.subr.mxu0 0.0
    %219 = vmatpush1.xpose.msra.mxu0 0.0
    %220 = vmatprep.subr.mxu0 0.0
    %221 = vmatpush1.xpose.msra.mxu0 0.0
    %222 = vmatprep.subr.mxu0 0.0
    %223 = vmatpush1.xpose.msra.mxu0 0.0
    %224 = vmatprep.subr.mxu0 0.0
    %225 = vmatpush1.xpose.msra.mxu0 0.0
    %226 = vmatprep.subr.mxu0 0.0
    %227 = vmatpush1.xpose.msra.mxu0 0.0
    %228 = vmatprep.subr.mxu0 0.0
    %229 = vmatpush1.xpose.msra.mxu0 0.0
    %230 = vmatprep.subr.mxu0 0.0
    %231 = vmatpush1.xpose.msra.mxu0 0.0
    %232 = vmatprep.subr.mxu0 0.0
    %233 = vmatpush1.xpose.msra.mxu0 0.0
    %234 = vmatprep.subr.mxu0 0.0
    %235 = vmatpush1.xpose.msra.mxu0 0.0
    %236 = vmatprep.subr.mxu0 0.0
    %237 = vmatpush1.xpose.msra.mxu0 0.0
    %238 = vmatprep.subr.mxu0 0.0
    %239 = vmatpush1.xpose.msra.mxu0 0.0
    %240 = vmatprep.subr.mxu0 0.0
    %241 = vmatpush1.xpose.msra.mxu0 0.0
    %242 = vmatprep.subr.mxu0 0.0
    %243 = vmatpush1.xpose.msra.mxu0 %v210
    %244 = vmatprep.subr.mxu0 0.0
    %245 = vmatpush2.xpose.msra.mxu0 0.0
    %246 = vmatprep.subr.mxu0 0.0
    %247 = vmatpush2.xpose.msra.mxu0 0.0
    %248 = vmatprep.subr.mxu0 0.0
    %249 = vmatpush2.xpose.msra.mxu0 0.0
    %250 = vmatprep.subr.mxu0 0.0
    %251 = vmatpush2.xpose.msra.mxu0 0.0
    %252 = vmatprep.subr.mxu0 0.0
    %253 = vmatpush2.xpose.msra.mxu0 0.0
    %254 = vmatprep.subr.mxu0 0.0
    %255 = vmatpush2.xpose.msra.mxu0 0.0
    %256 = vmatprep.subr.mxu0 0.0
    %257 = vmatpush2.xpose.msra.mxu0 0.0
    %258 = vmatprep.subr.mxu0 0.0
    %259 = vmatpush2.xpose.msra.mxu0 0.0
    %260 = vmatprep.subr.mxu0 0.0
    %261 = vmatpush2.xpose.msra.mxu0 0.0
    %262 = vmatprep.subr.mxu0 0.0
    %263 = vmatpush2.xpose.msra.mxu0 0.0
    %264 = vmatprep.subr.mxu0 0.0
    %265 = vmatpush2.xpose.msra.mxu0 0.0
    %266 = vmatprep.subr.mxu0 0.0
    %267 = vmatpush2.xpose.msra.mxu0 0.0
    %268 = vmatprep.subr.mxu0 0.0
    %269 = vmatpush2.xpose.msra.mxu0 0.0
    %270 = vmatprep.subr.mxu0 0.0
    %271 = vmatpush2.xpose.msra.mxu0 0.0
    %272 = vmatprep.subr.mxu0 0.0
    %273 = vmatpush2.xpose.msra.mxu0 0.0
    %274 = vmatprep.subr.mxu0 0.0
    %275 = vmatpush2.xpose.msra.mxu0 0.0
    %276 = vmatprep.mubr.f32.mxu0 0.0
    %277 = vmatmul.mubr.f32.gmra.mxu0 %v208
    %v278 = vpop.f32.mrf.mxu0
    %v279 = vadd.f32 %v198, %v278
    %v280 = vpop.f32.mrf.mxu0
    %281 = vdwg.mxu0
    %282 = vrot.lane.b32.xlu0 %v186, 96
    %v283 = vpop.permute.xlu0 %282
    %v284 = vsel %vm207, %v186, 0
    %v286 = vsel %vm207, %v283, 0
    %288 = vmatprep.subr.mxu0 0.0
    %289 = vmatpush1.xpose.msra.mxu0 0.0
    %290 = vmatprep.subr.mxu0 0.0
    %291 = vmatpush1.xpose.msra.mxu0 0.0
    %292 = vmatprep.subr.mxu0 0.0
    %293 = vmatpush1.xpose.msra.mxu0 0.0
    %294 = vmatprep.subr.mxu0 0.0
    %295 = vmatpush1.xpose.msra.mxu0 0.0
    %296 = vmatprep.subr.mxu0 0.0
    %297 = vmatpush1.xpose.msra.mxu0 0.0
    %298 = vmatprep.subr.mxu0 0.0
    %299 = vmatpush1.xpose.msra.mxu0 0.0
    %300 = vmatprep.subr.mxu0 0.0
    %301 = vmatpush1.xpose.msra.mxu0 0.0
    %302 = vmatprep.subr.mxu0 0.0
    %303 = vmatpush1.xpose.msra.mxu0 0.0
    %304 = vmatprep.subr.mxu0 0.0
    %305 = vmatpush1.xpose.msra.mxu0 0.0
    %306 = vmatprep.subr.mxu0 0.0
    %307 = vmatpush1.xpose.msra.mxu0 0.0
    %308 = vmatprep.subr.mxu0 0.0
    %309 = vmatpush1.xpose.msra.mxu0 0.0
    %310 = vmatprep.subr.mxu0 0.0
    %311 = vmatpush1.xpose.msra.mxu0 0.0
    %312 = vmatprep.subr.mxu0 0.0
    %313 = vmatpush1.xpose.msra.mxu0 0.0
    %314 = vmatprep.subr.mxu0 0.0
    %315 = vmatpush1.xpose.msra.mxu0 0.0
    %316 = vmatprep.subr.mxu0 0.0
    %317 = vmatpush1.xpose.msra.mxu0 0.0
    %318 = vmatprep.subr.mxu0 0.0
    %319 = vmatpush1.xpose.msra.mxu0 %v286
    %320 = vmatprep.subr.mxu0 0.0
    %321 = vmatpush2.xpose.msra.mxu0 0.0
    %322 = vmatprep.subr.mxu0 0.0
    %323 = vmatpush2.xpose.msra.mxu0 0.0
    %324 = vmatprep.subr.mxu0 0.0
    %325 = vmatpush2.xpose.msra.mxu0 0.0
    %326 = vmatprep.subr.mxu0 0.0
    %327 = vmatpush2.xpose.msra.mxu0 0.0
    %328 = vmatprep.subr.mxu0 0.0
    %329 = vmatpush2.xpose.msra.mxu0 0.0
    %330 = vmatprep.subr.mxu0 0.0
    %331 = vmatpush2.xpose.msra.mxu0 0.0
    %332 = vmatprep.subr.mxu0 0.0
    %333 = vmatpush2.xpose.msra.mxu0 0.0
    %334 = vmatprep.subr.mxu0 0.0
    %335 = vmatpush2.xpose.msra.mxu0 0.0
    %336 = vmatprep.subr.mxu0 0.0
    %337 = vmatpush2.xpose.msra.mxu0 0.0
    %338 = vmatprep.subr.mxu0 0.0
    %339 = vmatpush2.xpose.msra.mxu0 0.0
    %340 = vmatprep.subr.mxu0 0.0
    %341 = vmatpush2.xpose.msra.mxu0 0.0
    %342 = vmatprep.subr.mxu0 0.0
    %343 = vmatpush2.xpose.msra.mxu0 0.0
    %344 = vmatprep.subr.mxu0 0.0
    %345 = vmatpush2.xpose.msra.mxu0 0.0
    %346 = vmatprep.subr.mxu0 0.0
    %347 = vmatpush2.xpose.msra.mxu0 0.0
    %348 = vmatprep.subr.mxu0 0.0
    %349 = vmatpush2.xpose.msra.mxu0 0.0
    %350 = vmatprep.subr.mxu0 0.0
    %351 = vmatpush2.xpose.msra.mxu0 0.0
    %352 = vmatprep.mubr.f32.mxu0 0.0
    %353 = vmatmul.mubr.f32.gmra.mxu0 %v284
    %v354 = vpop.f32.mrf.mxu0
    %v355 = vadd.f32 %v202, %v354
    %v356 = vpop.f32.mrf.mxu0
    %357 = vdwg.mxu0
    %358 = vrot.lane.b32.xlu0 %v192, 96
    %v359 = vpop.permute.xlu0 %358
    %v360 = vsel %vm207, %v192, 0
    %v362 = vsel %vm207, %v359, 0
    %364 = vmatprep.subr.mxu0 0.0
    %365 = vmatpush1.xpose.msra.mxu0 0.0
    %366 = vmatprep.subr.mxu0 0.0
    %367 = vmatpush1.xpose.msra.mxu0 0.0
    %368 = vmatprep.subr.mxu0 0.0
    %369 = vmatpush1.xpose.msra.mxu0 0.0
    %370 = vmatprep.subr.mxu0 0.0
    %371 = vmatpush1.xpose.msra.mxu0 0.0
    %372 = vmatprep.subr.mxu0 0.0
    %373 = vmatpush1.xpose.msra.mxu0 0.0
    %374 = vmatprep.subr.mxu0 0.0
    %375 = vmatpush1.xpose.msra.mxu0 0.0
    %376 = vmatprep.subr.mxu0 0.0
    %377 = vmatpush1.xpose.msra.mxu0 0.0
    %378 = vmatprep.subr.mxu0 0.0
    %379 = vmatpush1.xpose.msra.mxu0 0.0
    %380 = vmatprep.subr.mxu0 0.0
    %381 = vmatpush1.xpose.msra.mxu0 0.0
    %382 = vmatprep.subr.mxu0 0.0
    %383 = vmatpush1.xpose.msra.mxu0 0.0
    %384 = vmatprep.subr.mxu0 0.0
    %385 = vmatpush1.xpose.msra.mxu0 0.0
    %386 = vmatprep.subr.mxu0 0.0
    %387 = vmatpush1.xpose.msra.mxu0 0.0
    %388 = vmatprep.subr.mxu0 0.0
    %389 = vmatpush1.xpose.msra.mxu0 0.0
    %390 = vmatprep.subr.mxu0 0.0
    %391 = vmatpush1.xpose.msra.mxu0 0.0
    %392 = vmatprep.subr.mxu0 0.0
    %393 = vmatpush1.xpose.msra.mxu0 0.0
    %394 = vmatprep.subr.mxu0 0.0
    %395 = vmatpush1.xpose.msra.mxu0 %v362
    %396 = vmatprep.subr.mxu0 0.0
    %397 = vmatpush2.xpose.msra.mxu0 0.0
    %398 = vmatprep.subr.mxu0 0.0
    %399 = vmatpush2.xpose.msra.mxu0 0.0
    %400 = vmatprep.subr.mxu0 0.0
    %401 = vmatpush2.xpose.msra.mxu0 0.0
    %402 = vmatprep.subr.mxu0 0.0
    %403 = vmatpush2.xpose.msra.mxu0 0.0
    %404 = vmatprep.subr.mxu0 0.0
    %405 = vmatpush2.xpose.msra.mxu0 0.0
    %406 = vmatprep.subr.mxu0 0.0
    %407 = vmatpush2.xpose.msra.mxu0 0.0
    %408 = vmatprep.subr.mxu0 0.0
    %409 = vmatpush2.xpose.msra.mxu0 0.0
    %410 = vmatprep.subr.mxu0 0.0
    %411 = vmatpush2.xpose.msra.mxu0 0.0
    %412 = vmatprep.subr.mxu0 0.0
    %413 = vmatpush2.xpose.msra.mxu0 0.0
    %414 = vmatprep.subr.mxu0 0.0
    %415 = vmatpush2.xpose.msra.mxu0 0.0
    %416 = vmatprep.subr.mxu0 0.0
    %417 = vmatpush2.xpose.msra.mxu0 0.0
    %418 = vmatprep.subr.mxu0 0.0
    %419 = vmatpush2.xpose.msra.mxu0 0.0
    %420 = vmatprep.subr.mxu0 0.0
    %421 = vmatpush2.xpose.msra.mxu0 0.0
    %422 = vmatprep.subr.mxu0 0.0
    %423 = vmatpush2.xpose.msra.mxu0 0.0
    %424 = vmatprep.subr.mxu0 0.0
    %425 = vmatpush2.xpose.msra.mxu0 0.0
    %426 = vmatprep.subr.mxu0 0.0
    %427 = vmatpush2.xpose.msra.mxu0 0.0
    %428 = vmatprep.mubr.f32.mxu0 0.0
    %429 = vmatmul.mubr.f32.gmra.mxu0 %v360
    %v430 = vpop.f32.mrf.mxu0
    %v431 = vadd.f32 %v198, %v430
    %v432 = vpop.f32.mrf.mxu0
    %433 = vdwg.mxu0
    %434 = vrot.lane.b32.xlu0 %v194, 96
    %v435 = vpop.permute.xlu0 %434
    %v436 = vsel %vm207, %v194, 0
    %v438 = vsel %vm207, %v435, 0
    %440 = vmatprep.subr.mxu0 0.0
    %441 = vmatpush1.xpose.msra.mxu0 0.0
    %442 = vmatprep.subr.mxu0 0.0
    %443 = vmatpush1.xpose.msra.mxu0 0.0
    %444 = vmatprep.subr.mxu0 0.0
    %445 = vmatpush1.xpose.msra.mxu0 0.0
    %446 = vmatprep.subr.mxu0 0.0
    %447 = vmatpush1.xpose.msra.mxu0 0.0
    %448 = vmatprep.subr.mxu0 0.0
    %449 = vmatpush1.xpose.msra.mxu0 0.0
    %450 = vmatprep.subr.mxu0 0.0
    %451 = vmatpush1.xpose.msra.mxu0 0.0
    %452 = vmatprep.subr.mxu0 0.0
    %453 = vmatpush1.xpose.msra.mxu0 0.0
    %454 = vmatprep.subr.mxu0 0.0
    %455 = vmatpush1.xpose.msra.mxu0 0.0
    %456 = vmatprep.subr.mxu0 0.0
    %457 = vmatpush1.xpose.msra.mxu0 0.0
    %458 = vmatprep.subr.mxu0 0.0
    %459 = vmatpush1.xpose.msra.mxu0 0.0
    %460 = vmatprep.subr.mxu0 0.0
    %461 = vmatpush1.xpose.msra.mxu0 0.0
    %462 = vmatprep.subr.mxu0 0.0
    %463 = vmatpush1.xpose.msra.mxu0 0.0
    %464 = vmatprep.subr.mxu0 0.0
    %465 = vmatpush1.xpose.msra.mxu0 0.0
    %466 = vmatprep.subr.mxu0 0.0
    %467 = vmatpush1.xpose.msra.mxu0 0.0
    %468 = vmatprep.subr.mxu0 0.0
    %469 = vmatpush1.xpose.msra.mxu0 0.0
    %470 = vmatprep.subr.mxu0 0.0
    %471 = vmatpush1.xpose.msra.mxu0 %v438
    %472 = vmatprep.subr.mxu0 0.0
    %473 = vmatpush2.xpose.msra.mxu0 0.0
    %474 = vmatprep.subr.mxu0 0.0
    %475 = vmatpush2.xpose.msra.mxu0 0.0
    %476 = vmatprep.subr.mxu0 0.0
    %477 = vmatpush2.xpose.msra.mxu0 0.0
    %478 = vmatprep.subr.mxu0 0.0
    %479 = vmatpush2.xpose.msra.mxu0 0.0
    %480 = vmatprep.subr.mxu0 0.0
    %481 = vmatpush2.xpose.msra.mxu0 0.0
    %482 = vmatprep.subr.mxu0 0.0
    %483 = vmatpush2.xpose.msra.mxu0 0.0
    %484 = vmatprep.subr.mxu0 0.0
    %485 = vmatpush2.xpose.msra.mxu0 0.0
    %486 = vmatprep.subr.mxu0 0.0
    %487 = vmatpush2.xpose.msra.mxu0 0.0
    %488 = vmatprep.subr.mxu0 0.0
    %489 = vmatpush2.xpose.msra.mxu0 0.0
    %490 = vmatprep.subr.mxu0 0.0
    %491 = vmatpush2.xpose.msra.mxu0 0.0
    %492 = vmatprep.subr.mxu0 0.0
    %493 = vmatpush2.xpose.msra.mxu0 0.0
    %494 = vmatprep.subr.mxu0 0.0
    %495 = vmatpush2.xpose.msra.mxu0 0.0
    %496 = vmatprep.subr.mxu0 0.0
    %497 = vmatpush2.xpose.msra.mxu0 0.0
    %498 = vmatprep.subr.mxu0 0.0
    %499 = vmatpush2.xpose.msra.mxu0 0.0
    %500 = vmatprep.subr.mxu0 0.0
    %501 = vmatpush2.xpose.msra.mxu0 0.0
    %502 = vmatprep.subr.mxu0 0.0
    %503 = vmatpush2.xpose.msra.mxu0 0.0
    %504 = vmatprep.mubr.f32.mxu0 0.0
    %505 = vmatmul.mubr.f32.gmra.mxu0 %v436
    %v506 = vpop.f32.mrf.mxu0
    %v507 = vadd.f32 %v202, %v506
    %v508 = vpop.f32.mrf.mxu0
    %509 = vdwg.mxu0
    %vm510 = vcmask 64512
    %v511 = vsel %vm510, %v279, -inf
    %512 = vmax.xlane.f32.xlu0 %v511
    %v513 = vpop.xlane.xlu0 %512
    %v514 = vsel %vm510, %v355, -inf
    %515 = vmax.xlane.f32.xlu0 %v514
    %v516 = vpop.xlane.xlu0 %515
    %v517 = vsel %vm510, %v431, -inf
    %518 = vmax.xlane.f32.xlu0 %v517
    %v519 = vpop.xlane.xlu0 %518
    %v520 = vsel %vm510, %v507, -inf
    %521 = vmax.xlane.f32.xlu0 %v520
    %v522 = vpop.xlane.xlu0 %521
    %v523 = vsub.f32 %v279, %v513
    %v524 = vsub.f32 %v355, %v516
    %v525 = vsub.f32 %v431, %v519
    %v526 = vsub.f32 %v507, %v522
    %v527 = vmul.f32 %v523, 1.442695
    %v528 = vpow.pop %v527
    %v529 = vmul.f32 %v524, 1.442695
    %v530 = vpow.pop %v529
    %v531 = vmul.f32 %v525, 1.442695
    %v532 = vpow.pop %v531
    %v533 = vmul.f32 %v526, 1.442695
    %v534 = vpow.pop %v533
    %v535 = vsel %vm510, %v528, 0.0
    %536 = vadd.xlane.f32.xlu0 %v535
    %v537 = vpop.xlane.xlu0 %536
    %v538 = vsel %vm510, %v530, 0.0
    %539 = vadd.xlane.f32.xlu0 %v538
    %v540 = vpop.xlane.xlu0 %539
    %v541 = vsel %vm510, %v532, 0.0
    %542 = vadd.xlane.f32.xlu0 %v541
    %v543 = vpop.xlane.xlu0 %542
    %v544 = vsel %vm510, %v534, 0.0
    %545 = vadd.xlane.f32.xlu0 %v544
    %v546 = vpop.xlane.xlu0 %545
    %v547 = vrcp.pop %v537
    %v548 = vmul.f32 %v528, %v547
    %v549 = vrcp.pop %v540
    %v550 = vmul.f32 %v530, %v549
    %v551 = vrcp.pop %v543
    %v552 = vmul.f32 %v532, %v551
    %v553 = vrcp.pop %v546
    %v554 = vmul.f32 %v534, %v553
    %555 = vrot.lane.b32.xlu0 %v181, 64
    %v556 = vpop.permute.xlu0 %555
    %v559 = vsel %vm510, %v548, 0
    %561 = vmatprep.subr.mxu0 0.0
    %562 = vmatpush1.msra.mxu0 0.0
    %563 = vmatprep.subr.mxu0 0.0
    %564 = vmatpush1.msra.mxu0 0.0
    %565 = vmatprep.subr.mxu0 0.0
    %566 = vmatpush1.msra.mxu0 0.0
    %567 = vmatprep.subr.mxu0 0.0
    %568 = vmatpush1.msra.mxu0 0.0
    %569 = vmatprep.subr.mxu0 0.0
    %570 = vmatpush1.msra.mxu0 0.0
    %571 = vmatprep.subr.mxu0 0.0
    %572 = vmatpush1.msra.mxu0 0.0
    %573 = vmatprep.subr.mxu0 0.0
    %574 = vmatpush1.msra.mxu0 0.0
    %575 = vmatprep.subr.mxu0 0.0
    %576 = vmatpush1.msra.mxu0 0.0
    %577 = vmatprep.subr.mxu0 0.0
    %578 = vmatpush1.msra.mxu0 0.0
    %579 = vmatprep.subr.mxu0 0.0
    %580 = vmatpush1.msra.mxu0 0.0
    %581 = vmatprep.subr.mxu0 0.0
    %582 = vmatpush1.msra.mxu0 0.0
    %583 = vmatprep.subr.mxu0 0.0
    %584 = vmatpush1.msra.mxu0 0.0
    %585 = vmatprep.subr.mxu0 0.0
    %586 = vmatpush1.msra.mxu0 0.0
    %587 = vmatprep.subr.mxu0 0.0
    %588 = vmatpush1.msra.mxu0 0.0
    %589 = vmatprep.subr.mxu0 0.0
    %590 = vmatpush1.msra.mxu0 0.0
    %591 = vmatprep.subr.mxu0 0.0
    %592 = vmatpush1.msra.mxu0 %v556
    %593 = vmatprep.subr.mxu0 0.0
    %594 = vmatpush2.msra.mxu0 0.0
    %595 = vmatprep.subr.mxu0 0.0
    %596 = vmatpush2.msra.mxu0 0.0
    %597 = vmatprep.subr.mxu0 0.0
    %598 = vmatpush2.msra.mxu0 0.0
    %599 = vmatprep.subr.mxu0 0.0
    %600 = vmatpush2.msra.mxu0 0.0
    %601 = vmatprep.subr.mxu0 0.0
    %602 = vmatpush2.msra.mxu0 0.0
    %603 = vmatprep.subr.mxu0 0.0
    %604 = vmatpush2.msra.mxu0 0.0
    %605 = vmatprep.subr.mxu0 0.0
    %606 = vmatpush2.msra.mxu0 0.0
    %607 = vmatprep.subr.mxu0 0.0
    %608 = vmatpush2.msra.mxu0 0.0
    %609 = vmatprep.subr.mxu0 0.0
    %610 = vmatpush2.msra.mxu0 0.0
    %611 = vmatprep.subr.mxu0 0.0
    %612 = vmatpush2.msra.mxu0 0.0
    %613 = vmatprep.subr.mxu0 0.0
    %614 = vmatpush2.msra.mxu0 0.0
    %615 = vmatprep.subr.mxu0 0.0
    %616 = vmatpush2.msra.mxu0 0.0
    %617 = vmatprep.subr.mxu0 0.0
    %618 = vmatpush2.msra.mxu0 0.0
    %619 = vmatprep.subr.mxu0 0.0
    %620 = vmatpush2.msra.mxu0 0.0
    %621 = vmatprep.subr.mxu0 0.0
    %622 = vmatpush2.msra.mxu0 0.0
    %623 = vmatprep.subr.mxu0 0.0
    %624 = vmatpush2.msra.mxu0 0.0
    %625 = vmatprep.mubr.f32.mxu0 0.0
    %626 = vmatmul.mubr.f32.gmra.mxu0 %v559
    %v627 = vpop.f32.mrf.mxu0
    %v628 = vadd.f32 0.0, %v627
    %v629 = vpop.f32.mrf.mxu0
    %630 = vdwg.mxu0
    %631 = vrot.lane.b32.xlu0 %v186, 64
    %v632 = vpop.permute.xlu0 %631
    %v635 = vsel %vm510, %v550, 0
    %637 = vmatprep.subr.mxu0 0.0
    %638 = vmatpush1.msra.mxu0 0.0
    %639 = vmatprep.subr.mxu0 0.0
    %640 = vmatpush1.msra.mxu0 0.0
    %641 = vmatprep.subr.mxu0 0.0
    %642 = vmatpush1.msra.mxu0 0.0
    %643 = vmatprep.subr.mxu0 0.0
    %644 = vmatpush1.msra.mxu0 0.0
    %645 = vmatprep.subr.mxu0 0.0
    %646 = vmatpush1.msra.mxu0 0.0
    %647 = vmatprep.subr.mxu0 0.0
    %648 = vmatpush1.msra.mxu0 0.0
    %649 = vmatprep.subr.mxu0 0.0
    %650 = vmatpush1.msra.mxu0 0.0
    %651 = vmatprep.subr.mxu0 0.0
    %652 = vmatpush1.msra.mxu0 0.0
    %653 = vmatprep.subr.mxu0 0.0
    %654 = vmatpush1.msra.mxu0 0.0
    %655 = vmatprep.subr.mxu0 0.0
    %656 = vmatpush1.msra.mxu0 0.0
    %657 = vmatprep.subr.mxu0 0.0
    %658 = vmatpush1.msra.mxu0 0.0
    %659 = vmatprep.subr.mxu0 0.0
    %660 = vmatpush1.msra.mxu0 0.0
    %661 = vmatprep.subr.mxu0 0.0
    %662 = vmatpush1.msra.mxu0 0.0
    %663 = vmatprep.subr.mxu0 0.0
    %664 = vmatpush1.msra.mxu0 0.0
    %665 = vmatprep.subr.mxu0 0.0
    %666 = vmatpush1.msra.mxu0 0.0
    %667 = vmatprep.subr.mxu0 0.0
    %668 = vmatpush1.msra.mxu0 %v632
    %669 = vmatprep.subr.mxu0 0.0
    %670 = vmatpush2.msra.mxu0 0.0
    %671 = vmatprep.subr.mxu0 0.0
    %672 = vmatpush2.msra.mxu0 0.0
    %673 = vmatprep.subr.mxu0 0.0
    %674 = vmatpush2.msra.mxu0 0.0
    %675 = vmatprep.subr.mxu0 0.0
    %676 = vmatpush2.msra.mxu0 0.0
    %677 = vmatprep.subr.mxu0 0.0
    %678 = vmatpush2.msra.mxu0 0.0
    %679 = vmatprep.subr.mxu0 0.0
    %680 = vmatpush2.msra.mxu0 0.0
    %681 = vmatprep.subr.mxu0 0.0
    %682 = vmatpush2.msra.mxu0 0.0
    %683 = vmatprep.subr.mxu0 0.0
    %684 = vmatpush2.msra.mxu0 0.0
    %685 = vmatprep.subr.mxu0 0.0
    %686 = vmatpush2.msra.mxu0 0.0
    %687 = vmatprep.subr.mxu0 0.0
    %688 = vmatpush2.msra.mxu0 0.0
    %689 = vmatprep.subr.mxu0 0.0
    %690 = vmatpush2.msra.mxu0 0.0
    %691 = vmatprep.subr.mxu0 0.0
    %692 = vmatpush2.msra.mxu0 0.0
    %693 = vmatprep.subr.mxu0 0.0
    %694 = vmatpush2.msra.mxu0 0.0
    %695 = vmatprep.subr.mxu0 0.0
    %696 = vmatpush2.msra.mxu0 0.0
    %697 = vmatprep.subr.mxu0 0.0
    %698 = vmatpush2.msra.mxu0 0.0
    %699 = vmatprep.subr.mxu0 0.0
    %700 = vmatpush2.msra.mxu0 0.0
    %701 = vmatprep.mubr.f32.mxu0 0.0
    %702 = vmatmul.mubr.f32.gmra.mxu0 %v635
    %v703 = vpop.f32.mrf.mxu0
    %v704 = vadd.f32 0.0, %v703
    %v705 = vpop.f32.mrf.mxu0
    %706 = vdwg.mxu0
    %707 = vrot.lane.b32.xlu0 %v192, 64
    %v708 = vpop.permute.xlu0 %707
    %v711 = vsel %vm510, %v552, 0
    %713 = vmatprep.subr.mxu0 0.0
    %714 = vmatpush1.msra.mxu0 0.0
    %715 = vmatprep.subr.mxu0 0.0
    %716 = vmatpush1.msra.mxu0 0.0
    %717 = vmatprep.subr.mxu0 0.0
    %718 = vmatpush1.msra.mxu0 0.0
    %719 = vmatprep.subr.mxu0 0.0
    %720 = vmatpush1.msra.mxu0 0.0
    %721 = vmatprep.subr.mxu0 0.0
    %722 = vmatpush1.msra.mxu0 0.0
    %723 = vmatprep.subr.mxu0 0.0
    %724 = vmatpush1.msra.mxu0 0.0
    %725 = vmatprep.subr.mxu0 0.0
    %726 = vmatpush1.msra.mxu0 0.0
    %727 = vmatprep.subr.mxu0 0.0
    %728 = vmatpush1.msra.mxu0 0.0
    %729 = vmatprep.subr.mxu0 0.0
    %730 = vmatpush1.msra.mxu0 0.0
    %731 = vmatprep.subr.mxu0 0.0
    %732 = vmatpush1.msra.mxu0 0.0
    %733 = vmatprep.subr.mxu0 0.0
    %734 = vmatpush1.msra.mxu0 0.0
    %735 = vmatprep.subr.mxu0 0.0
    %736 = vmatpush1.msra.mxu0 0.0
    %737 = vmatprep.subr.mxu0 0.0
    %738 = vmatpush1.msra.mxu0 0.0
    %739 = vmatprep.subr.mxu0 0.0
    %740 = vmatpush1.msra.mxu0 0.0
    %741 = vmatprep.subr.mxu0 0.0
    %742 = vmatpush1.msra.mxu0 0.0
    %743 = vmatprep.subr.mxu0 0.0
    %744 = vmatpush1.msra.mxu0 %v708
    %745 = vmatprep.subr.mxu0 0.0
    %746 = vmatpush2.msra.mxu0 0.0
    %747 = vmatprep.subr.mxu0 0.0
    %748 = vmatpush2.msra.mxu0 0.0
    %749 = vmatprep.subr.mxu0 0.0
    %750 = vmatpush2.msra.mxu0 0.0
    %751 = vmatprep.subr.mxu0 0.0
    %752 = vmatpush2.msra.mxu0 0.0
    %753 = vmatprep.subr.mxu0 0.0
    %754 = vmatpush2.msra.mxu0 0.0
    %755 = vmatprep.subr.mxu0 0.0
    %756 = vmatpush2.msra.mxu0 0.0
    %757 = vmatprep.subr.mxu0 0.0
    %758 = vmatpush2.msra.mxu0 0.0
    %759 = vmatprep.subr.mxu0 0.0
    %760 = vmatpush2.msra.mxu0 0.0
    %761 = vmatprep.subr.mxu0 0.0
    %762 = vmatpush2.msra.mxu0 0.0
    %763 = vmatprep.subr.mxu0 0.0
    %764 = vmatpush2.msra.mxu0 0.0
    %765 = vmatprep.subr.mxu0 0.0
    %766 = vmatpush2.msra.mxu0 0.0
    %767 = vmatprep.subr.mxu0 0.0
    %768 = vmatpush2.msra.mxu0 0.0
    %769 = vmatprep.subr.mxu0 0.0
    %770 = vmatpush2.msra.mxu0 0.0
    %771 = vmatprep.subr.mxu0 0.0
    %772 = vmatpush2.msra.mxu0 0.0
    %773 = vmatprep.subr.mxu0 0.0
    %774 = vmatpush2.msra.mxu0 0.0
    %775 = vmatprep.subr.mxu0 0.0
    %776 = vmatpush2.msra.mxu0 0.0
    %777 = vmatprep.mubr.f32.mxu0 0.0
    %778 = vmatmul.mubr.f32.gmra.mxu0 %v711
    %v779 = vpop.f32.mrf.mxu0
    %v780 = vadd.f32 0.0, %v779
    %v781 = vpop.f32.mrf.mxu0
    %782 = vdwg.mxu0
    %783 = vrot.lane.b32.xlu0 %v194, 64
    %v784 = vpop.permute.xlu0 %783
    %v787 = vsel %vm510, %v554, 0
    %789 = vmatprep.subr.mxu0 0.0
    %790 = vmatpush1.msra.mxu0 0.0
    %791 = vmatprep.subr.mxu0 0.0
    %792 = vmatpush1.msra.mxu0 0.0
    %793 = vmatprep.subr.mxu0 0.0
    %794 = vmatpush1.msra.mxu0 0.0
    %795 = vmatprep.subr.mxu0 0.0
    %796 = vmatpush1.msra.mxu0 0.0
    %797 = vmatprep.subr.mxu0 0.0
    %798 = vmatpush1.msra.mxu0 0.0
    %799 = vmatprep.subr.mxu0 0.0
    %800 = vmatpush1.msra.mxu0 0.0
    %801 = vmatprep.subr.mxu0 0.0
    %802 = vmatpush1.msra.mxu0 0.0
    %803 = vmatprep.subr.mxu0 0.0
    %804 = vmatpush1.msra.mxu0 0.0
    %805 = vmatprep.subr.mxu0 0.0
    %806 = vmatpush1.msra.mxu0 0.0
    %807 = vmatprep.subr.mxu0 0.0
    %808 = vmatpush1.msra.mxu0 0.0
    %809 = vmatprep.subr.mxu0 0.0
    %810 = vmatpush1.msra.mxu0 0.0
    %811 = vmatprep.subr.mxu0 0.0
    %812 = vmatpush1.msra.mxu0 0.0
    %813 = vmatprep.subr.mxu0 0.0
    %814 = vmatpush1.msra.mxu0 0.0
    %815 = vmatprep.subr.mxu0 0.0
    %816 = vmatpush1.msra.mxu0 0.0
    %817 = vmatprep.subr.mxu0 0.0
    %818 = vmatpush1.msra.mxu0 0.0
    %819 = vmatprep.subr.mxu0 0.0
    %820 = vmatpush1.msra.mxu0 %v784
    %821 = vmatprep.subr.mxu0 0.0
    %822 = vmatpush2.msra.mxu0 0.0
    %823 = vmatprep.subr.mxu0 0.0
    %824 = vmatpush2.msra.mxu0 0.0
    %825 = vmatprep.subr.mxu0 0.0
    %826 = vmatpush2.msra.mxu0 0.0
    %827 = vmatprep.subr.mxu0 0.0
    %828 = vmatpush2.msra.mxu0 0.0
    %829 = vmatprep.subr.mxu0 0.0
    %830 = vmatpush2.msra.mxu0 0.0
    %831 = vmatprep.subr.mxu0 0.0
    %832 = vmatpush2.msra.mxu0 0.0
    %833 = vmatprep.subr.mxu0 0.0
    %834 = vmatpush2.msra.mxu0 0.0
    %835 = vmatprep.subr.mxu0 0.0
    %836 = vmatpush2.msra.mxu0 0.0
    %837 = vmatprep.subr.mxu0 0.0
    %838 = vmatpush2.msra.mxu0 0.0
    %839 = vmatprep.subr.mxu0 0.0
    %840 = vmatpush2.msra.mxu0 0.0
    %841 = vmatprep.subr.mxu0 0.0
    %842 = vmatpush2.msra.mxu0 0.0
    %843 = vmatprep.subr.mxu0 0.0
    %844 = vmatpush2.msra.mxu0 0.0
    %845 = vmatprep.subr.mxu0 0.0
    %846 = vmatpush2.msra.mxu0 0.0
    %847 = vmatprep.subr.mxu0 0.0
    %848 = vmatpush2.msra.mxu0 0.0
    %849 = vmatprep.subr.mxu0 0.0
    %850 = vmatpush2.msra.mxu0 0.0
    %851 = vmatprep.subr.mxu0 0.0
    %852 = vmatpush2.msra.mxu0 0.0
    %853 = vmatprep.mubr.f32.mxu0 0.0
    %854 = vmatmul.mubr.f32.gmra.mxu0 %v787
    %v855 = vpop.f32.mrf.mxu0
    %v856 = vadd.f32 0.0, %v855
    %v857 = vpop.f32.mrf.mxu0
    %858 = vdwg.mxu0
    %861 = vrot.lane.b32.xlu0 %v780, 16
    %v862 = vpop.permute.xlu0 %861
    %863 = vrot.lane.b32.xlu0 %v856, 16
    %v864 = vpop.permute.xlu0 %863
    %v867 = vsel %vm207, %v628, %v862
    %v868 = vsel %vm207, %v704, %v864
    %v869 = vld [vmem:[%s2 + $0xa3] sm:$0x1]
    %v870 = vlaneseq
    %v871 = vshrl.u32 %v870, 7
    %v872 = vsub.s32 0, %v871
    %v873 = vrot.slane %v869, %v872
    %v875 = vsel %vm43, %v867, 0
    %v878 = vsel %vm43, %v868, 0
    %880 = vmatprep.subr.mxu0 0.0
    %881 = vmatpush1.msra.mxu0 0.0
    %882 = vmatprep.subr.mxu0 0.0
    %883 = vmatpush1.msra.mxu0 0.0
    %884 = vmatprep.subr.mxu0 0.0
    %885 = vmatpush1.msra.mxu0 0.0
    %886 = vmatprep.subr.mxu0 0.0
    %887 = vmatpush1.msra.mxu0 0.0
    %888 = vmatprep.subr.mxu0 0.0
    %889 = vmatpush1.msra.mxu0 0.0
    %890 = vmatprep.subr.mxu0 0.0
    %891 = vmatpush1.msra.mxu0 0.0
    %892 = vmatprep.subr.mxu0 0.0
    %893 = vmatpush1.msra.mxu0 0.0
    %894 = vmatprep.subr.mxu0 0.0
    %895 = vmatpush1.msra.mxu0 0.0
    %896 = vmatprep.subr.mxu0 0.0
    %897 = vmatpush1.msra.mxu0 0.0
    %898 = vmatprep.subr.mxu0 0.0
    %899 = vmatpush1.msra.mxu0 0.0
    %900 = vmatprep.subr.mxu0 0.0
    %901 = vmatpush1.msra.mxu0 0.0
    %902 = vmatprep.subr.mxu0 0.0
    %903 = vmatpush1.msra.mxu0 0.0
    %904 = vmatprep.subr.mxu0 0.0
    %905 = vmatpush1.msra.mxu0 %v90
    %906 = vmatprep.subr.mxu0 0.0
    %907 = vmatpush1.msra.mxu0 %v89
    %908 = vmatprep.subr.mxu0 0.0
    %909 = vmatpush1.msra.mxu0 %v88
    %910 = vmatprep.subr.mxu0 0.0
    %911 = vmatpush1.msra.mxu0 %v87
    %912 = vmatprep.subr.mxu0 0.0
    %913 = vmatpush2.msra.mxu0 0.0
    %914 = vmatprep.subr.mxu0 0.0
    %915 = vmatpush2.msra.mxu0 0.0
    %916 = vmatprep.subr.mxu0 0.0
    %917 = vmatpush2.msra.mxu0 0.0
    %918 = vmatprep.subr.mxu0 0.0
    %919 = vmatpush2.msra.mxu0 0.0
    %920 = vmatprep.subr.mxu0 0.0
    %921 = vmatpush2.msra.mxu0 0.0
    %922 = vmatprep.subr.mxu0 0.0
    %923 = vmatpush2.msra.mxu0 0.0
    %924 = vmatprep.subr.mxu0 0.0
    %925 = vmatpush2.msra.mxu0 0.0
    %926 = vmatprep.subr.mxu0 0.0
    %927 = vmatpush2.msra.mxu0 0.0
    %928 = vmatprep.subr.mxu0 0.0
    %929 = vmatpush2.msra.mxu0 0.0
    %930 = vmatprep.subr.mxu0 0.0
    %931 = vmatpush2.msra.mxu0 0.0
    %932 = vmatprep.subr.mxu0 0.0
    %933 = vmatpush2.msra.mxu0 0.0
    %934 = vmatprep.subr.mxu0 0.0
    %935 = vmatpush2.msra.mxu0 0.0
    %936 = vmatprep.subr.mxu0 0.0
    %937 = vmatpush2.msra.mxu0 0.0
    %938 = vmatprep.subr.mxu0 0.0
    %939 = vmatpush2.msra.mxu0 0.0
    %940 = vmatprep.subr.mxu0 0.0
    %941 = vmatpush2.msra.mxu0 0.0
    %942 = vmatprep.subr.mxu0 0.0
    %943 = vmatpush2.msra.mxu0 0.0
    %944 = vmatprep.mubr.f32.mxu0 0.0
    %945 = vmatmul.mubr.f32.gmra.mxu0 %v875
    %v946 = vpop.f32.mrf.mxu0
    %v947 = vadd.f32 %v873, %v946
    %v948 = vpop.f32.mrf.mxu0
    %949 = vmatprep.mubr.f32.mxu0 0.0
    %950 = vmatmul.mubr.f32.gmra.mxu0 %v878
    %v951 = vpop.f32.mrf.mxu0
    %v952 = vadd.f32 %v873, %v951
    %v953 = vpop.f32.mrf.mxu0
    %954 = vdwg.mxu0
    %v955 = vadd.f32 %v81, %v947
    %v956 = vadd.f32 %v82, %v952
    %v957 = vld [vmem:[%s2 + $0xa4] sm:$0x1]
    %v958 = vld [vmem:[%s2 + $0xa5] sm:$0x1]
    %v959 = vsel %vm43, %v955, 0.0
    %960 = vadd.xlane.f32.xlu0 %v959
    %v961 = vpop.xlane.xlu0 %960
    %v962 = vsel %vm43, %v956, 0.0
    %963 = vadd.xlane.f32.xlu0 %v962
    %v964 = vpop.xlane.xlu0 %963
    %v965 = vmul.f32 %v961, %v50
    %v966 = vmul.f32 %v964, %v50
    %v967 = vsub.f32 %v955, %v965
    %v968 = vsub.f32 %v956, %v966
    %v969 = vmul.f32 %v967, %v967
    %v970 = vmul.f32 %v968, %v968
    %v971 = vsel %vm43, %v969, 0.0
    %972 = vadd.xlane.f32.xlu0 %v971
    %v973 = vpop.xlane.xlu0 %972
    %v974 = vsel %vm43, %v970, 0.0
    %975 = vadd.xlane.f32.xlu0 %v974
    %v976 = vpop.xlane.xlu0 %975
    %v977 = vmul.f32 %v973, %v50
    %v978 = vmul.f32 %v976, %v50
    %v979 = vadd.f32 %v977, 1e-12
    %v980 = vadd.f32 %v978, 1e-12
    %v981 = vrsqrt.pop %v979
    %v982 = vrsqrt.pop %v980
    %v983 = vmul.f32 %v967, %v981
    %v984 = vmul.f32 %v968, %v982
    %v985 = vlaneseq
    %v986 = vshrl.u32 %v985, 7
    %v987 = vsub.s32 0, %v986
    %v988 = vrot.slane %v957, %v987
    %v989 = vmul.f32 %v983, %v988
    %v990 = vmul.f32 %v984, %v988
    %v991 = vlaneseq
    %v992 = vshrl.u32 %v991, 7
    %v993 = vsub.s32 0, %v992
    %v994 = vrot.slane %v958, %v993
    %v995 = vadd.f32 %v989, %v994
    %v996 = vadd.f32 %v990, %v994
    %v997 = vld [vmem:[%s2 + $0xa6] sm:$0x1]
    %v998 = vlaneseq
    %v999 = vshrl.u32 %v998, 7
    %v1000 = vsub.s32 0, %v999
    %v1001 = vrot.slane %v997, %v1000
    %v1003 = vsel %vm43, %v995, 0
    %v1006 = vsel %vm43, %v996, 0
    %1008 = vmatprep.subr.mxu0 0.0
    %1009 = vmatpush1.msra.mxu0 0.0
    %1010 = vmatprep.subr.mxu0 0.0
    %1011 = vmatpush1.msra.mxu0 0.0
    %1012 = vmatprep.subr.mxu0 0.0
    %1013 = vmatpush1.msra.mxu0 0.0
    %1014 = vmatprep.subr.mxu0 0.0
    %1015 = vmatpush1.msra.mxu0 0.0
    %1016 = vmatprep.subr.mxu0 0.0
    %1017 = vmatpush1.msra.mxu0 0.0
    %1018 = vmatprep.subr.mxu0 0.0
    %1019 = vmatpush1.msra.mxu0 0.0
    %1020 = vmatprep.subr.mxu0 0.0
    %1021 = vmatpush1.msra.mxu0 0.0
    %1022 = vmatprep.subr.mxu0 0.0
    %1023 = vmatpush1.msra.mxu0 0.0
    %1024 = vmatprep.subr.mxu0 0.0
    %1025 = vmatpush1.msra.mxu0 0.0
    %1026 = vmatprep.subr.mxu0 0.0
    %1027 = vmatpush1.msra.mxu0 0.0
    %1028 = vmatprep.subr.mxu0 0.0
    %1029 = vmatpush1.msra.mxu0 0.0
    %1030 = vmatprep.subr.mxu0 0.0
    %1031 = vmatpush1.msra.mxu0 0.0
    %1032 = vmatprep.subr.mxu0 0.0
    %1033 = vmatpush1.msra.mxu0 %v94
    %1034 = vmatprep.subr.mxu0 0.0
    %1035 = vmatpush1.msra.mxu0 %v93
    %1036 = vmatprep.subr.mxu0 0.0
    %1037 = vmatpush1.msra.mxu0 %v92
    %1038 = vmatprep.subr.mxu0 0.0
    %1039 = vmatpush1.msra.mxu0 %v91
    %1040 = vmatprep.subr.mxu0 0.0
    %1041 = vmatpush2.msra.mxu0 0.0
    %1042 = vmatprep.subr.mxu0 0.0
    %1043 = vmatpush2.msra.mxu0 0.0
    %1044 = vmatprep.subr.mxu0 0.0
    %1045 = vmatpush2.msra.mxu0 0.0
    %1046 = vmatprep.subr.mxu0 0.0
    %1047 = vmatpush2.msra.mxu0 0.0
    %1048 = vmatprep.subr.mxu0 0.0
    %1049 = vmatpush2.msra.mxu0 0.0
    %1050 = vmatprep.subr.mxu0 0.0
    %1051 = vmatpush2.msra.mxu0 0.0
    %1052 = vmatprep.subr.mxu0 0.0
    %1053 = vmatpush2.msra.mxu0 0.0
    %1054 = vmatprep.subr.mxu0 0.0
    %1055 = vmatpush2.msra.mxu0 0.0
    %1056 = vmatprep.subr.mxu0 0.0
    %1057 = vmatpush2.msra.mxu0 0.0
    %1058 = vmatprep.subr.mxu0 0.0
    %1059 = vmatpush2.msra.mxu0 0.0
    %1060 = vmatprep.subr.mxu0 0.0
    %1061 = vmatpush2.msra.mxu0 0.0
    %1062 = vmatprep.subr.mxu0 0.0
    %1063 = vmatpush2.msra.mxu0 0.0
    %1064 = vmatprep.subr.mxu0 0.0
    %1065 = vmatpush2.msra.mxu0 0.0
    %1066 = vmatprep.subr.mxu0 0.0
    %1067 = vmatpush2.msra.mxu0 0.0
    %1068 = vmatprep.subr.mxu0 0.0
    %1069 = vmatpush2.msra.mxu0 0.0
    %1070 = vmatprep.subr.mxu0 0.0
    %1071 = vmatpush2.msra.mxu0 0.0
    %1072 = vmatprep.mubr.f32.mxu0 0.0
    %1073 = vmatmul.mubr.f32.gmra.mxu0 %v1003
    %v1074 = vpop.f32.mrf.mxu0
    %v1075 = vadd.f32 %v1001, %v1074
    %v1076 = vpop.f32.mrf.mxu0
    %1077 = vmatprep.mubr.f32.mxu0 0.0
    %1078 = vmatmul.mubr.f32.gmra.mxu0 %v1006
    %v1079 = vpop.f32.mrf.mxu0
    %v1080 = vadd.f32 %v1001, %v1079
    %v1081 = vpop.f32.mrf.mxu0
    %1082 = vdwg.mxu0
    %v1083 = vmul.f32 %v1075, %v1075
    %v1084 = vmul.f32 %v1080, %v1080
    %v1085 = vmul.f32 %v1075, %v1083
    %v1086 = vmul.f32 %v1080, %v1084
    %v1087 = vmul.f32 %v1085, 0.044715
    %v1088 = vmul.f32 %v1086, 0.044715
    %v1089 = vadd.f32 %v1075, %v1087
    %v1090 = vadd.f32 %v1080, %v1088
    %v1091 = vmul.f32 %v1089, 0.7978846
    %v1092 = vmul.f32 %v1090, 0.7978846
    %v1093 = vtanh.pop %v1091
    %v1094 = vtanh.pop %v1092
    %v1095 = vadd.f32 %v1093, 1.0
    %v1096 = vadd.f32 %v1094, 1.0
    %v1097 = vmul.f32 %v1095, 0.5
    %v1098 = vmul.f32 %v1096, 0.5
    %v1099 = vmul.f32 %v1075, %v1097
    %v1100 = vmul.f32 %v1080, %v1098
    %v1101 = vld [vmem:[%s2 + $0xa7] sm:$0x1]
    %v1102 = vlaneseq
    %v1103 = vshrl.u32 %v1102, 7
    %v1104 = vsub.s32 0, %v1103
    %v1105 = vrot.slane %v1101, %v1104
    %vm1106 = vcmask 523264
    %v1108 = vsel %vm1106, %v1099, 0
    %v1111 = vsel %vm1106, %v1100, 0
    %1113 = vmatprep.subr.mxu0 0.0
    %1114 = vmatpush1.msra.mxu0 0.0
    %1115 = vmatprep.subr.mxu0 0.0
    %1116 = vmatpush1.msra.mxu0 0.0
    %1117 = vmatprep.subr.mxu0 0.0
    %1118 = vmatpush1.msra.mxu0 0.0
    %1119 = vmatprep.subr.mxu0 0.0
    %1120 = vmatpush1.msra.mxu0 0.0
    %1121 = vmatprep.subr.mxu0 0.0
    %1122 = vmatpush1.msra.mxu0 0.0
    %1123 = vmatprep.subr.mxu0 0.0
    %1124 = vmatpush1.msra.mxu0 0.0
    %1125 = vmatprep.subr.mxu0 0.0
    %1126 = vmatpush1.msra.mxu0 0.0
    %1127 = vmatprep.subr.mxu0 0.0
    %1128 = vmatpush1.msra.mxu0 0.0
    %1129 = vmatprep.subr.mxu0 0.0
    %1130 = vmatpush1.msra.mxu0 %v102
    %1131 = vmatprep.subr.mxu0 0.0
    %1132 = vmatpush1.msra.mxu0 %v101
    %1133 = vmatprep.subr.mxu0 0.0
    %1134 = vmatpush1.msra.mxu0 %v100
    %1135 = vmatprep.subr.mxu0 0.0
    %1136 = vmatpush1.msra.mxu0 %v99
    %1137 = vmatprep.subr.mxu0 0.0
    %1138 = vmatpush1.msra.mxu0 %v98
    %1139 = vmatprep.subr.mxu0 0.0
    %1140 = vmatpush1.msra.mxu0 %v97
    %1141 = vmatprep.subr.mxu0 0.0
    %1142 = vmatpush1.msra.mxu0 %v96
    %1143 = vmatprep.subr.mxu0 0.0
    %1144 = vmatpush1.msra.mxu0 %v95
    %1145 = vmatprep.subr.mxu0 0.0
    %1146 = vmatpush2.msra.mxu0 0.0
    %1147 = vmatprep.subr.mxu0 0.0
    %1148 = vmatpush2.msra.mxu0 0.0
    %1149 = vmatprep.subr.mxu0 0.0
    %1150 = vmatpush2.msra.mxu0 0.0
    %1151 = vmatprep.subr.mxu0 0.0
    %1152 = vmatpush2.msra.mxu0 0.0
    %1153 = vmatprep.subr.mxu0 0.0
    %1154 = vmatpush2.msra.mxu0 0.0
    %1155 = vmatprep.subr.mxu0 0.0
    %1156 = vmatpush2.msra.mxu0 0.0
    %1157 = vmatprep.subr.mxu0 0.0
    %1158 = vmatpush2.msra.mxu0 0.0
    %1159 = vmatprep.subr.mxu0 0.0
    %1160 = vmatpush2.msra.mxu0 0.0
    %1161 = vmatprep.subr.mxu0 0.0
    %1162 = vmatpush2.msra.mxu0 0.0
    %1163 = vmatprep.subr.mxu0 0.0
    %1164 = vmatpush2.msra.mxu0 0.0
    %1165 = vmatprep.subr.mxu0 0.0
    %1166 = vmatpush2.msra.mxu0 0.0
    %1167 = vmatprep.subr.mxu0 0.0
    %1168 = vmatpush2.msra.mxu0 0.0
    %1169 = vmatprep.subr.mxu0 0.0
    %1170 = vmatpush2.msra.mxu0 0.0
    %1171 = vmatprep.subr.mxu0 0.0
    %1172 = vmatpush2.msra.mxu0 0.0
    %1173 = vmatprep.subr.mxu0 0.0
    %1174 = vmatpush2.msra.mxu0 0.0
    %1175 = vmatprep.subr.mxu0 0.0
    %1176 = vmatpush2.msra.mxu0 0.0
    %1177 = vmatprep.mubr.f32.mxu0 0.0
    %1178 = vmatmul.mubr.f32.gmra.mxu0 %v1108
    %v1179 = vpop.f32.mrf.mxu0
    %v1180 = vadd.f32 %v1105, %v1179
    %v1181 = vpop.f32.mrf.mxu0
    %1182 = vmatprep.mubr.f32.mxu0 0.0
    %1183 = vmatmul.mubr.f32.gmra.mxu0 %v1111
    %v1184 = vpop.f32.mrf.mxu0
    %v1185 = vadd.f32 %v1105, %v1184
    %v1186 = vpop.f32.mrf.mxu0
    %1187 = vdwg.mxu0
    %v1188 = vadd.f32 %v995, %v1180
    %v1189 = vadd.f32 %v996, %v1185
    %v1190 = vld [vmem:[%s2 + $0xa8] sm:$0x1]
    %v1191 = vld [vmem:[%s2 + $0xa9] sm:$0x1]
    %v1192 = vsel %vm43, %v1188, 0.0
    %1193 = vadd.xlane.f32.xlu0 %v1192
    %v1194 = vpop.xlane.xlu0 %1193
    %v1195 = vsel %vm43, %v1189, 0.0
    %1196 = vadd.xlane.f32.xlu0 %v1195
    %v1197 = vpop.xlane.xlu0 %1196
    %v1198 = vmul.f32 %v1194, %v50
    %v1199 = vmul.f32 %v1197, %v50
    %v1200 = vsub.f32 %v1188, %v1198
    %v1201 = vsub.f32 %v1189, %v1199
    %v1202 = vmul.f32 %v1200, %v1200
    %v1203 = vmul.f32 %v1201, %v1201
    %v1204 = vsel %vm43, %v1202, 0.0
    %1205 = vadd.xlane.f32.xlu0 %v1204
    %v1206 = vpop.xlane.xlu0 %1205
    %v1207 = vsel %vm43, %v1203, 0.0
    %1208 = vadd.xlane.f32.xlu0 %v1207
    %v1209 = vpop.xlane.xlu0 %1208
    %v1210 = vmul.f32 %v1206, %v50
    %v1211 = vmul.f32 %v1209, %v50
    %v1212 = vadd.f32 %v1210, 1e-12
    %v1213 = vadd.f32 %v1211, 1e-12
    %v1214 = vrsqrt.pop %v1212
    %v1215 = vrsqrt.pop %v1213
    %v1216 = vmul.f32 %v1200, %v1214
    %v1217 = vmul.f32 %v1201, %v1215
    %v1218 = vlaneseq
    %v1219 = vshrl.u32 %v1218, 7
    %v1220 = vsub.s32 0, %v1219
    %v1221 = vrot.slane %v1190, %v1220
    %v1222 = vmul.f32 %v1216, %v1221
    %v1223 = vmul.f32 %v1217, %v1221
    %v1224 = vlaneseq
    %v1225 = vshrl.u32 %v1224, 7
    %v1226 = vsub.s32 0, %v1225
    %v1227 = vrot.slane %v1191, %v1226
    %v1228 = vadd.f32 %v1222, %v1227
    %v1229 = vadd.f32 %v1223, %v1227
    %v1230 = vld [vmem:[%s2 + $0xaa] sm:$0xff]
    %v1231 = vld [vmem:[%s2 + $0xb2] sm:$0xff]
    %v1232 = vld [vmem:[%s2 + $0xba] sm:$0xff]
    %v1233 = vld [vmem:[%s2 + $0xc2] sm:$0xff]
    %v1234 = vld [vmem:[%s2 + $0xca] sm:$0xff]
    %v1235 = vld [vmem:[%s2 + $0xd2] sm:$0xff]
    %v1236 = vld [vmem:[%s2 + $0xda] sm:$0xff]
    %v1237 = vld [vmem:[%s2 + $0xe2] sm:$0xff]
    %v1238 = vld [vmem:[%s2 + $0xea] sm:$0xff]
    %v1239 = vld [vmem:[%s2 + $0xf2] sm:$0xff]
    %v1240 = vld [vmem:[%s2 + $0xfa] sm:$0xff]
    %v1241 = vld [vmem:[%s2 + $0x102] sm:$0xff]
    %v1242 = vld [vmem:[%s2 + $0x10a] sm:$0xff]
    %v1243 = vld [vmem:[%s2 + $0x112] sm:$0xff]
    %v1244 = vld [vmem:[%s2 + $0x11a] sm:$0xff]
    %v1245 = vld [vmem:[%s2 + $0x122] sm:$0xff]
    %v1246 = vld [vmem:[%s2 + $0x12a] sm:$0xff]
    %v1247 = vld [vmem:[%s2 + $0x132] sm:$0xff]
    %v1248 = vld [vmem:[%s2 + $0x13a] sm:$0xff]
    %v1249 = vld [vmem:[%s2 + $0x142] sm:$0xff]
    %v1250 = vld [vmem:[%s2 + $0x14a] sm:$0x1]
    %v1251 = vlaneseq
    %v1252 = vshrl.u32 %v1251, 7
    %v1253 = vsub.s32 0, %v1252
    %v1254 = vrot.slane %v1250, %v1253
    %v1256 = vsel %vm43, %v1228, 0
    %v1259 = vsel %vm43, %v1229, 0
    %1261 = vmatprep.subr.mxu0 0.0
    %1262 = vmatpush1.msra.mxu0 0.0
    %1263 = vmatprep.subr.mxu0 0.0
    %1264 = vmatpush1.msra.mxu0 0.0
    %1265 = vmatprep.subr.mxu0 0.0
    %1266 = vmatpush1.msra.mxu0 0.0
    %1267 = vmatprep.subr.mxu0 0.0
    %1268 = vmatpush1.msra.mxu0 0.0
    %1269 = vmatprep.subr.mxu0 0.0
    %1270 = vmatpush1.msra.mxu0 0.0
    %1271 = vmatprep.subr.mxu0 0.0
    %1272 = vmatpush1.msra.mxu0 0.0
    %1273 = vmatprep.subr.mxu0 0.0
    %1274 = vmatpush1.msra.mxu0 0.0
    %1275 = vmatprep.subr.mxu0 0.0
    %1276 = vmatpush1.msra.mxu0 0.0
    %1277 = vmatprep.subr.mxu0 0.0
    %1278 = vmatpush1.msra.mxu0 0.0
    %1279 = vmatprep.subr.mxu0 0.0
    %1280 = vmatpush1.msra.mxu0 0.0
    %1281 = vmatprep.subr.mxu0 0.0
    %1282 = vmatpush1.msra.mxu0 0.0
    %1283 = vmatprep.subr.mxu0 0.0
    %1284 = vmatpush1.msra.mxu0 0.0
    %1285 = vmatprep.subr.mxu0 0.0
    %1286 = vmatpush1.msra.mxu0 %v1233
    %1287 = vmatprep.subr.mxu0 0.0
    %1288 = vmatpush1.msra.mxu0 %v1232
    %1289 = vmatprep.subr.mxu0 0.0
    %1290 = vmatpush1.msra.mxu0 %v1231
    %1291 = vmatprep.subr.mxu0 0.0
    %1292 = vmatpush1.msra.mxu0 %v1230
    %1293 = vmatprep.subr.mxu0 0.0
    %1294 = vmatpush2.msra.mxu0 0.0
    %1295 = vmatprep.subr.mxu0 0.0
    %1296 = vmatpush2.msra.mxu0 0.0
    %1297 = vmatprep.subr.mxu0 0.0
    %1298 = vmatpush2.msra.mxu0 0.0
    %1299 = vmatprep.subr.mxu0 0.0
    %1300 = vmatpush2.msra.mxu0 0.0
    %1301 = vmatprep.subr.mxu0 0.0
    %1302 = vmatpush2.msra.mxu0 0.0
    %1303 = vmatprep.subr.mxu0 0.0
    %1304 = vmatpush2.msra.mxu0 0.0
    %1305 = vmatprep.subr.mxu0 0.0
    %1306 = vmatpush2.msra.mxu0 0.0
    %1307 = vmatprep.subr.mxu0 0.0
    %1308 = vmatpush2.msra.mxu0 0.0
    %1309 = vmatprep.subr.mxu0 0.0
    %1310 = vmatpush2.msra.mxu0 0.0
    %1311 = vmatprep.subr.mxu0 0.0
    %1312 = vmatpush2.msra.mxu0 0.0
    %1313 = vmatprep.subr.mxu0 0.0
    %1314 = vmatpush2.msra.mxu0 0.0
    %1315 = vmatprep.subr.mxu0 0.0
    %1316 = vmatpush2.msra.mxu0 0.0
    %1317 = vmatprep.subr.mxu0 0.0
    %1318 = vmatpush2.msra.mxu0 0.0
    %1319 = vmatprep.subr.mxu0 0.0
    %1320 = vmatpush2.msra.mxu0 0.0
    %1321 = vmatprep.subr.mxu0 0.0
    %1322 = vmatpush2.msra.mxu0 0.0
    %1323 = vmatprep.subr.mxu0 0.0
    %1324 = vmatpush2.msra.mxu0 0.0
    %1325 = vmatprep.mubr.f32.mxu0 0.0
    %1326 = vmatmul.mubr.f32.gmra.mxu0 %v1256
    %v1327 = vpop.f32.mrf.mxu0
    %v1328 = vadd.f32 %v1254, %v1327
    %v1329 = vpop.f32.mrf.mxu0
    %1330 = vmatprep.mubr.f32.mxu0 0.0
    %1331 = vmatmul.mubr.f32.gmra.mxu0 %v1259
    %v1332 = vpop.f32.mrf.mxu0
    %v1333 = vadd.f32 %v1254, %v1332
    %v1334 = vpop.f32.mrf.mxu0
    %1335 = vdwg.mxu0
    %1338 = vrot.lane.b32.xlu0 %v1328, 112
    %v1339 = vpop.permute.xlu0 %1338
    %1340 = vrot.lane.b32.xlu0 %v1333, 112
    %v1341 = vpop.permute.xlu0 %1340
    %1342 = vrot.lane.b32.xlu0 %v1328, 96
    %v1343 = vpop.permute.xlu0 %1342
    %v1344 = vsel %vm207, %v1328, 0
    %v1346 = vsel %vm207, %v1343, 0
    %1348 = vmatprep.subr.mxu0 0.0
    %1349 = vmatpush1.xpose.msra.mxu0 0.0
    %1350 = vmatprep.subr.mxu0 0.0
    %1351 = vmatpush1.xpose.msra.mxu0 0.0
    %1352 = vmatprep.subr.mxu0 0.0
    %1353 = vmatpush1.xpose.msra.mxu0 0.0
    %1354 = vmatprep.subr.mxu0 0.0
    %1355 = vmatpush1.xpose.msra.mxu0 0.0
    %1356 = vmatprep.subr.mxu0 0.0
    %1357 = vmatpush1.xpose.msra.mxu0 0.0
    %1358 = vmatprep.subr.mxu0 0.0
    %1359 = vmatpush1.xpose.msra.mxu0 0.0
    %1360 = vmatprep.subr.mxu0 0.0
    %1361 = vmatpush1.xpose.msra.mxu0 0.0
    %1362 = vmatprep.subr.mxu0 0.0
    %1363 = vmatpush1.xpose.msra.mxu0 0.0
    %1364 = vmatprep.subr.mxu0 0.0
    %1365 = vmatpush1.xpose.msra.mxu0 0.0
    %1366 = vmatprep.subr.mxu0 0.0
    %1367 = vmatpush1.xpose.msra.mxu0 0.0
    %1368 = vmatprep.subr.mxu0 0.0
    %1369 = vmatpush1.xpose.msra.mxu0 0.0
    %1370 = vmatprep.subr.mxu0 0.0
    %1371 = vmatpush1.xpose.msra.mxu0 0.0
    %1372 = vmatprep.subr.mxu0 0.0
    %1373 = vmatpush1.xpose.msra.mxu0 0.0
    %1374 = vmatprep.subr.mxu0 0.0
    %1375 = vmatpush1.xpose.msra.mxu0 0.0
    %1376 = vmatprep.subr.mxu0 0.0
    %1377 = vmatpush1.xpose.msra.mxu0 0.0
    %1378 = vmatprep.subr.mxu0 0.0
    %1379 = vmatpush1.xpose.msra.mxu0 %v1346
    %1380 = vmatprep.subr.mxu0 0.0
    %1381 = vmatpush2.xpose.msra.mxu0 0.0
    %1382 = vmatprep.subr.mxu0 0.0
    %1383 = vmatpush2.xpose.msra.mxu0 0.0
    %1384 = vmatprep.subr.mxu0 0.0
    %1385 = vmatpush2.xpose.msra.mxu0 0.0
    %1386 = vmatprep.subr.mxu0 0.0
    %1387 = vmatpush2.xpose.msra.mxu0 0.0
    %1388 = vmatprep.subr.mxu0 0.0
    %1389 = vmatpush2.xpose.msra.mxu0 0.0
    %1390 = vmatprep.subr.mxu0 0.0
    %1391 = vmatpush2.xpose.msra.mxu0 0.0
    %1392 = vmatprep.subr.mxu0 0.0
    %1393 = vmatpush2.xpose.msra.mxu0 0.0
    %1394 = vmatprep.subr.mxu0 0.0
    %1395 = vmatpush2.xpose.msra.mxu0 0.0
    %1396 = vmatprep.subr.mxu0 0.0
    %1397 = vmatpush2.xpose.msra.mxu0 0.0
    %1398 = vmatprep.subr.mxu0 0.0
    %1399 = vmatpush2.xpose.msra.mxu0 0.0
    %1400 = vmatprep.subr.mxu0 0.0
    %1401 = vmatpush2.xpose.msra.mxu0 0.0
    %1402 = vmatprep.subr.mxu0 0.0
    %1403 = vmatpush2.xpose.msra.mxu0 0.0
    %1404 = vmatprep.subr.mxu0 0.0
    %1405 = vmatpush2.xpose.msra.mxu0 0.0
    %1406 = vmatprep.subr.mxu0 0.0
    %1407 = vmatpush2.xpose.msra.mxu0 0.0
    %1408 = vmatprep.subr.mxu0 0.0
    %1409 = vmatpush2.xpose.msra.mxu0 0.0
    %1410 = vmatprep.subr.mxu0 0.0
    %1411 = vmatpush2.xpose.msra.mxu0 0.0
    %1412 = vmatprep.mubr.f32.mxu0 0.0
    %1413 = vmatmul.mubr.f32.gmra.mxu0 %v1344
    %v1414 = vpop.f32.mrf.mxu0
    %v1415 = vadd.f32 %v198, %v1414
    %v1416 = vpop.f32.mrf.mxu0
    %1417 = vdwg.mxu0
    %1418 = vrot.lane.b32.xlu0 %v1333, 96
    %v1419 = vpop.permute.xlu0 %1418
    %v1420 = vsel %vm207, %v1333, 0
    %v1422 = vsel %vm207, %v1419, 0
    %1424 = vmatprep.subr.mxu0 0.0
    %1425 = vmatpush1.xpose.msra.mxu0 0.0
    %1426 = vmatprep.subr.mxu0 0.0
    %1427 = vmatpush1.xpose.msra.mxu0 0.0
    %1428 = vmatprep.subr.mxu0 0.0
    %1429 = vmatpush1.xpose.msra.mxu0 0.0
    %1430 = vmatprep.subr.mxu0 0.0
    %1431 = vmatpush1.xpose.msra.mxu0 0.0
    %1432 = vmatprep.subr.mxu0 0.0
    %1433 = vmatpush1.xpose.msra.mxu0 0.0
    %1434 = vmatprep.subr.mxu0 0.0
    %1435 = vmatpush1.xpose.msra.mxu0 0.0
    %1436 = vmatprep.subr.mxu0 0.0
    %1437 = vmatpush1.xpose.msra.mxu0 0.0
    %1438 = vmatprep.subr.mxu0 0.0
    %1439 = vmatpush1.xpose.msra.mxu0 0.0
    %1440 = vmatprep.subr.mxu0 0.0
    %1441 = vmatpush1.xpose.msra.mxu0 0.0
    %1442 = vmatprep.subr.mxu0 0.0
    %1443 = vmatpush1.xpose.msra.mxu0 0.0
    %1444 = vmatprep.subr.mxu0 0.0
    %1445 = vmatpush1.xpose.msra.mxu0 0.0
    %1446 = vmatprep.subr.mxu0 0.0
    %1447 = vmatpush1.xpose.msra.mxu0 0.0
    %1448 = vmatprep.subr.mxu0 0.0
    %1449 = vmatpush1.xpose.msra.mxu0 0.0
    %1450 = vmatprep.subr.mxu0 0.0
    %1451 = vmatpush1.xpose.msra.mxu0 0.0
    %1452 = vmatprep.subr.mxu0 0.0
    %1453 = vmatpush1.xpose.msra.mxu0 0.0
    %1454 = vmatprep.subr.mxu0 0.0
    %1455 = vmatpush1.xpose.msra.mxu0 %v1422
    %1456 = vmatprep.subr.mxu0 0.0
    %1457 = vmatpush2.xpose.msra.mxu0 0.0
    %1458 = vmatprep.subr.mxu0 0.0
    %1459 = vmatpush2.xpose.msra.mxu0 0.0
    %1460 = vmatprep.subr.mxu0 0.0
    %1461 = vmatpush2.xpose.msra.mxu0 0.0
    %1462 = vmatprep.subr.mxu0 0.0
    %1463 = vmatpush2.xpose.msra.mxu0 0.0
    %1464 = vmatprep.subr.mxu0 0.0
    %1465 = vmatpush2.xpose.msra.mxu0 0.0
    %1466 = vmatprep.subr.mxu0 0.0
    %1467 = vmatpush2.xpose.msra.mxu0 0.0
    %1468 = vmatprep.subr.mxu0 0.0
    %1469 = vmatpush2.xpose.msra.mxu0 0.0
    %1470 = vmatprep.subr.mxu0 0.0
    %1471 = vmatpush2.xpose.msra.mxu0 0.0
    %1472 = vmatprep.subr.mxu0 0.0
    %1473 = vmatpush2.xpose.msra.mxu0 0.0
    %1474 = vmatprep.subr.mxu0 0.0
    %1475 = vmatpush2.xpose.msra.mxu0 0.0
    %1476 = vmatprep.subr.mxu0 0.0
    %1477 = vmatpush2.xpose.msra.mxu0 0.0
    %1478 = vmatprep.subr.mxu0 0.0
    %1479 = vmatpush2.xpose.msra.mxu0 0.0
    %1480 = vmatprep.subr.mxu0 0.0
    %1481 = vmatpush2.xpose.msra.mxu0 0.0
    %1482 = vmatprep.subr.mxu0 0.0
    %1483 = vmatpush2.xpose.msra.mxu0 0.0
    %1484 = vmatprep.subr.mxu0 0.0
    %1485 = vmatpush2.xpose.msra.mxu0 0.0
    %1486 = vmatprep.subr.mxu0 0.0
    %1487 = vmatpush2.xpose.msra.mxu0 0.0
    %1488 = vmatprep.mubr.f32.mxu0 0.0
    %1489 = vmatmul.mubr.f32.gmra.mxu0 %v1420
    %v1490 = vpop.f32.mrf.mxu0
    %v1491 = vadd.f32 %v202, %v1490
    %v1492 = vpop.f32.mrf.mxu0
    %1493 = vdwg.mxu0
    %1494 = vrot.lane.b32.xlu0 %v1339, 96
    %v1495 = vpop.permute.xlu0 %1494
    %v1496 = vsel %vm207, %v1339, 0
    %v1498 = vsel %vm207, %v1495, 0
    %1500 = vmatprep.subr.mxu0 0.0
    %1501 = vmatpush1.xpose.msra.mxu0 0.0
    %1502 = vmatprep.subr.mxu0 0.0
    %1503 = vmatpush1.xpose.msra.mxu0 0.0
    %1504 = vmatprep.subr.mxu0 0.0
    %1505 = vmatpush1.xpose.msra.mxu0 0.0
    %1506 = vmatprep.subr.mxu0 0.0
    %1507 = vmatpush1.xpose.msra.mxu0 0.0
    %1508 = vmatprep.subr.mxu0 0.0
    %1509 = vmatpush1.xpose.msra.mxu0 0.0
    %1510 = vmatprep.subr.mxu0 0.0
    %1511 = vmatpush1.xpose.msra.mxu0 0.0
    %1512 = vmatprep.subr.mxu0 0.0
    %1513 = vmatpush1.xpose.msra.mxu0 0.0
    %1514 = vmatprep.subr.mxu0 0.0
    %1515 = vmatpush1.xpose.msra.mxu0 0.0
    %1516 = vmatprep.subr.mxu0 0.0
    %1517 = vmatpush1.xpose.msra.mxu0 0.0
    %1518 = vmatprep.subr.mxu0 0.0
    %1519 = vmatpush1.xpose.msra.mxu0 0.0
    %1520 = vmatprep.subr.mxu0 0.0
    %1521 = vmatpush1.xpose.msra.mxu0 0.0
    %1522 = vmatprep.subr.mxu0 0.0
    %1523 = vmatpush1.xpose.msra.mxu0 0.0
    %1524 = vmatprep.subr.mxu0 0.0
    %1525 = vmatpush1.xpose.msra.mxu0 0.0
    %1526 = vmatprep.subr.mxu0 0.0
    %1527 = vmatpush1.xpose.msra.mxu0 0.0
    %1528 = vmatprep.subr.mxu0 0.0
    %1529 = vmatpush1.xpose.msra.mxu0 0.0
    %1530 = vmatprep.subr.mxu0 0.0
    %1531 = vmatpush1.xpose.msra.mxu0 %v1498
    %1532 = vmatprep.subr.mxu0 0.0
    %1533 = vmatpush2.xpose.msra.mxu0 0.0
    %1534 = vmatprep.subr.mxu0 0.0
    %1535 = vmatpush2.xpose.msra.mxu0 0.0
    %1536 = vmatprep.subr.mxu0 0.0
    %1537 = vmatpush2.xpose.msra.mxu0 0.0
    %1538 = vmatprep.subr.mxu0 0.0
    %1539 = vmatpush2.xpose.msra.mxu0 0.0
    %1540 = vmatprep.subr.mxu0 0.0
    %1541 = vmatpush2.xpose.msra.mxu0 0.0
    %1542 = vmatprep.subr.mxu0 0.0
    %1543 = vmatpush2.xpose.msra.mxu0 0.0
    %1544 = vmatprep.subr.mxu0 0.0
    %1545 = vmatpush2.xpose.msra.mxu0 0.0
    %1546 = vmatprep.subr.mxu0 0.0
    %1547 = vmatpush2.xpose.msra.mxu0 0.0
    %1548 = vmatprep.subr.mxu0 0.0
    %1549 = vmatpush2.xpose.msra.mxu0 0.0
    %1550 = vmatprep.subr.mxu0 0.0
    %1551 = vmatpush2.xpose.msra.mxu0 0.0
    %1552 = vmatprep.subr.mxu0 0.0
    %1553 = vmatpush2.xpose.msra.mxu0 0.0
    %1554 = vmatprep.subr.mxu0 0.0
    %1555 = vmatpush2.xpose.msra.mxu0 0.0
    %1556 = vmatprep.subr.mxu0 0.0
    %1557 = vmatpush2.xpose.msra.mxu0 0.0
    %1558 = vmatprep.subr.mxu0 0.0
    %1559 = vmatpush2.xpose.msra.mxu0 0.0
    %1560 = vmatprep.subr.mxu0 0.0
    %1561 = vmatpush2.xpose.msra.mxu0 0.0
    %1562 = vmatprep.subr.mxu0 0.0
    %1563 = vmatpush2.xpose.msra.mxu0 0.0
    %1564 = vmatprep.mubr.f32.mxu0 0.0
    %1565 = vmatmul.mubr.f32.gmra.mxu0 %v1496
    %v1566 = vpop.f32.mrf.mxu0
    %v1567 = vadd.f32 %v198, %v1566
    %v1568 = vpop.f32.mrf.mxu0
    %1569 = vdwg.mxu0
    %1570 = vrot.lane.b32.xlu0 %v1341, 96
    %v1571 = vpop.permute.xlu0 %1570
    %v1572 = vsel %vm207, %v1341, 0
    %v1574 = vsel %vm207, %v1571, 0
    %1576 = vmatprep.subr.mxu0 0.0
    %1577 = vmatpush1.xpose.msra.mxu0 0.0
    %1578 = vmatprep.subr.mxu0 0.0
    %1579 = vmatpush1.xpose.msra.mxu0 0.0
    %1580 = vmatprep.subr.mxu0 0.0
    %1581 = vmatpush1.xpose.msra.mxu0 0.0
    %1582 = vmatprep.subr.mxu0 0.0
    %1583 = vmatpush1.xpose.msra.mxu0 0.0
    %1584 = vmatprep.subr.mxu0 0.0
    %1585 = vmatpush1.xpose.msra.mxu0 0.0
    %1586 = vmatprep.subr.mxu0 0.0
    %1587 = vmatpush1.xpose.msra.mxu0 0.0
    %1588 = vmatprep.subr.mxu0 0.0
    %1589 = vmatpush1.xpose.msra.mxu0 0.0
    %1590 = vmatprep.subr.mxu0 0.0
    %1591 = vmatpush1.xpose.msra.mxu0 0.0
    %1592 = vmatprep.subr.mxu0 0.0
    %1593 = vmatpush1.xpose.msra.mxu0 0.0
    %1594 = vmatprep.subr.mxu0 0.0
    %1595 = vmatpush1.xpose.msra.mxu0 0.0
    %1596 = vmatprep.subr.mxu0 0.0
    %1597 = vmatpush1.xpose.msra.mxu0 0.0
    %1598 = vmatprep.subr.mxu0 0.0
    %1599 = vmatpush1.xpose.msra.mxu0 0.0
    %1600 = vmatprep.subr.mxu0 0.0
    %1601 = vmatpush1.xpose.msra.mxu0 0.0
    %1602 = vmatprep.subr.mxu0 0.0
    %1603 = vmatpush1.xpose.msra.mxu0 0.0
    %1604 = vmatprep.subr.mxu0 0.0
    %1605 = vmatpush1.xpose.msra.mxu0 0.0
    %1606 = vmatprep.subr.mxu0 0.0
    %1607 = vmatpush1.xpose.msra.mxu0 %v1574
    %1608 = vmatprep.subr.mxu0 0.0
    %1609 = vmatpush2.xpose.msra.mxu0 0.0
    %1610 = vmatprep.subr.mxu0 0.0
    %1611 = vmatpush2.xpose.msra.mxu0 0.0
    %1612 = vmatprep.subr.mxu0 0.0
    %1613 = vmatpush2.xpose.msra.mxu0 0.0
    %1614 = vmatprep.subr.mxu0 0.0
    %1615 = vmatpush2.xpose.msra.mxu0 0.0
    %1616 = vmatprep.subr.mxu0 0.0
    %1617 = vmatpush2.xpose.msra.mxu0 0.0
    %1618 = vmatprep.subr.mxu0 0.0
    %1619 = vmatpush2.xpose.msra.mxu0 0.0
    %1620 = vmatprep.subr.mxu0 0.0
    %1621 = vmatpush2.xpose.msra.mxu0 0.0
    %1622 = vmatprep.subr.mxu0 0.0
    %1623 = vmatpush2.xpose.msra.mxu0 0.0
    %1624 = vmatprep.subr.mxu0 0.0
    %1625 = vmatpush2.xpose.msra.mxu0 0.0
    %1626 = vmatprep.subr.mxu0 0.0
    %1627 = vmatpush2.xpose.msra.mxu0 0.0
    %1628 = vmatprep.subr.mxu0 0.0
    %1629 = vmatpush2.xpose.msra.mxu0 0.0
    %1630 = vmatprep.subr.mxu0 0.0
    %1631 = vmatpush2.xpose.msra.mxu0 0.0
    %1632 = vmatprep.subr.mxu0 0.0
    %1633 = vmatpush2.xpose.msra.mxu0 0.0
    %1634 = vmatprep.subr.mxu0 0.0
    %1635 = vmatpush2.xpose.msra.mxu0 0.0
    %1636 = vmatprep.subr.mxu0 0.0
    %1637 = vmatpush2.xpose.msra.mxu0 0.0
    %1638 = vmatprep.subr.mxu0 0.0
    %1639 = vmatpush2.xpose.msra.mxu0 0.0
    %1640 = vmatprep.mubr.f32.mxu0 0.0
    %1641 = vmatmul.mubr.f32.gmra.mxu0 %v1572
    %v1642 = vpop.f32.mrf.mxu0
    %v1643 = vadd.f32 %v202, %v1642
    %v1644 = vpop.f32.mrf.mxu0
    %1645 = vdwg.mxu0
    %v1646 = vsel %vm510, %v1415, -inf
    %1647 = vmax.xlane.f32.xlu0 %v1646
    %v1648 = vpop.xlane.xlu0 %1647
    %v1649 = vsel %vm510, %v1491, -inf
    %1650 = vmax.xlane.f32.xlu0 %v1649
    %v1651 = vpop.xlane.xlu0 %1650
    %v1652 = vsel %vm510, %v1567, -inf
    %1653 = vmax.xlane.f32.xlu0 %v1652
    %v1654 = vpop.xlane.xlu0 %1653
    %v1655 = vsel %vm510, %v1643, -inf
    %1656 = vmax.xlane.f32.xlu0 %v1655
    %v1657 = vpop.xlane.xlu0 %1656
    %v1658 = vsub.f32 %v1415, %v1648
    %v1659 = vsub.f32 %v1491, %v1651
    %v1660 = vsub.f32 %v1567, %v1654
    %v1661 = vsub.f32 %v1643, %v1657
    %v1662 = vmul.f32 %v1658, 1.442695
    %v1663 = vpow.pop %v1662
    %v1664 = vmul.f32 %v1659, 1.442695
    %v1665 = vpow.pop %v1664
    %v1666 = vmul.f32 %v1660, 1.442695
    %v1667 = vpow.pop %v1666
    %v1668 = vmul.f32 %v1661, 1.442695
    %v1669 = vpow.pop %v1668
    %v1670 = vsel %vm510, %v1663, 0.0
    %1671 = vadd.xlane.f32.xlu0 %v1670
    %v1672 = vpop.xlane.xlu0 %1671
    %v1673 = vsel %vm510, %v1665, 0.0
    %1674 = vadd.xlane.f32.xlu0 %v1673
    %v1675 = vpop.xlane.xlu0 %1674
    %v1676 = vsel %vm510, %v1667, 0.0
    %1677 = vadd.xlane.f32.xlu0 %v1676
    %v1678 = vpop.xlane.xlu0 %1677
    %v1679 = vsel %vm510, %v1669, 0.0
    %1680 = vadd.xlane.f32.xlu0 %v1679
    %v1681 = vpop.xlane.xlu0 %1680
    %v1682 = vrcp.pop %v1672
    %v1683 = vmul.f32 %v1663, %v1682
    %v1684 = vrcp.pop %v1675
    %v1685 = vmul.f32 %v1665, %v1684
    %v1686 = vrcp.pop %v1678
    %v1687 = vmul.f32 %v1667, %v1686
    %v1688 = vrcp.pop %v1681
    %v1689 = vmul.f32 %v1669, %v1688
    %1690 = vrot.lane.b32.xlu0 %v1328, 64
    %v1691 = vpop.permute.xlu0 %1690
    %v1694 = vsel %vm510, %v1683, 0
    %1696 = vmatprep.subr.mxu0 0.0
    %1697 = vmatpush1.msra.mxu0 0.0
    %1698 = vmatprep.subr.mxu0 0.0
    %1699 = vmatpush1.msra.mxu0 0.0
    %1700 = vmatprep.subr.mxu0 0.0
    %1701 = vmatpush1.msra.mxu0 0.0
    %1702 = vmatprep.subr.mxu0 0.0
    %1703 = vmatpush1.msra.mxu0 0.0
    %1704 = vmatprep.subr.mxu0 0.0
    %1705 = vmatpush1.msra.mxu0 0.0
    %1706 = vmatprep.subr.mxu0 0.0
    %1707 = vmatpush1.msra.mxu0 0.0
    %1708 = vmatprep.subr.mxu0 0.0
    %1709 = vmatpush1.msra.mxu0 0.0
    %1710 = vmatprep.subr.mxu0 0.0
    %1711 = vmatpush1.msra.mxu0 0.0
    %1712 = vmatprep.subr.mxu0 0.0
    %1713 = vmatpush1.msra.mxu0 0.0
    %1714 = vmatprep.subr.mxu0 0.0
    %1715 = vmatpush1.msra.mxu0 0.0
    %1716 = vmatprep.subr.mxu0 0.0
    %1717 = vmatpush1.msra.mxu0 0.0
    %1718 = vmatprep.subr.mxu0 0.0
    %1719 = vmatpush1.msra.mxu0 0.0
    %1720 = vmatprep.subr.mxu0 0.0
    %1721 = vmatpush1.msra.mxu0 0.0
    %1722 = vmatprep.subr.mxu0 0.0
    %1723 = vmatpush1.msra.mxu0 0.0
    %1724 = vmatprep.subr.mxu0 0.0
    %1725 = vmatpush1.msra.mxu0 0.0
    %1726 = vmatprep.subr.mxu0 0.0
    %1727 = vmatpush1.msra.mxu0 %v1691
    %1728 = vmatprep.subr.mxu0 0.0
    %1729 = vmatpush2.msra.mxu0 0.0
    %1730 = vmatprep.subr.mxu0 0.0
    %1731 = vmatpush2.msra.mxu0 0.0
    %1732 = vmatprep.subr.mxu0 0.0
    %1733 = vmatpush2.msra.mxu0 0.0
    %1734 = vmatprep.subr.mxu0 0.0
    %1735 = vmatpush2.msra.mxu0 0.0
    %1736 = vmatprep.subr.mxu0 0.0
    %1737 = vmatpush2.msra.mxu0 0.0
    %1738 = vmatprep.subr.mxu0 0.0
    %1739 = vmatpush2.msra.mxu0 0.0
    %1740 = vmatprep.subr.mxu0 0.0
    %1741 = vmatpush2.msra.mxu0 0.0
    %1742 = vmatprep.subr.mxu0 0.0
    %1743 = vmatpush2.msra.mxu0 0.0
    %1744 = vmatprep.subr.mxu0 0.0
    %1745 = vmatpush2.msra.mxu0 0.0
    %1746 = vmatprep.subr.mxu0 0.0
    %1747 = vmatpush2.msra.mxu0 0.0
    %1748 = vmatprep.subr.mxu0 0.0
    %1749 = vmatpush2.msra.mxu0 0.0
    %1750 = vmatprep.subr.mxu0 0.0
    %1751 = vmatpush2.msra.mxu0 0.0
    %1752 = vmatprep.subr.mxu0 0.0
    %1753 = vmatpush2.msra.mxu0 0.0
    %1754 = vmatprep.subr.mxu0 0.0
    %1755 = vmatpush2.msra.mxu0 0.0
    %1756 = vmatprep.subr.mxu0 0.0
    %1757 = vmatpush2.msra.mxu0 0.0
    %1758 = vmatprep.subr.mxu0 0.0
    %1759 = vmatpush2.msra.mxu0 0.0
    %1760 = vmatprep.mubr.f32.mxu0 0.0
    %1761 = vmatmul.mubr.f32.gmra.mxu0 %v1694
    %v1762 = vpop.f32.mrf.mxu0
    %v1763 = vadd.f32 0.0, %v1762
    %v1764 = vpop.f32.mrf.mxu0
    %1765 = vdwg.mxu0
    %1766 = vrot.lane.b32.xlu0 %v1333, 64
    %v1767 = vpop.permute.xlu0 %1766
    %v1770 = vsel %vm510, %v1685, 0
    %1772 = vmatprep.subr.mxu0 0.0
    %1773 = vmatpush1.msra.mxu0 0.0
    %1774 = vmatprep.subr.mxu0 0.0
    %1775 = vmatpush1.msra.mxu0 0.0
    %1776 = vmatprep.subr.mxu0 0.0
    %1777 = vmatpush1.msra.mxu0 0.0
    %1778 = vmatprep.subr.mxu0 0.0
    %1779 = vmatpush1.msra.mxu0 0.0
    %1780 = vmatprep.subr.mxu0 0.0
    %1781 = vmatpush1.msra.mxu0 0.0
    %1782 = vmatprep.subr.mxu0 0.0
    %1783 = vmatpush1.msra.mxu0 0.0
    %1784 = vmatprep.subr.mxu0 0.0
    %1785 = vmatpush1.msra.mxu0 0.0
    %1786 = vmatprep.subr.mxu0 0.0
    %1787 = vmatpush1.msra.mxu0 0.0
    %1788 = vmatprep.subr.mxu0 0.0
    %1789 = vmatpush1.msra.mxu0 0.0
    %1790 = vmatprep.subr.mxu0 0.0
    %1791 = vmatpush1.msra.mxu0 0.0
    %1792 = vmatprep.subr.mxu0 0.0
    %1793 = vmatpush1.msra.mxu0 0.0
    %1794 = vmatprep.subr.mxu0 0.0
    %1795 = vmatpush1.msra.mxu0 0.0
    %1796 = vmatprep.subr.mxu0 0.0
    %1797 = vmatpush1.msra.mxu0 0.0
    %1798 = vmatprep.subr.mxu0 0.0
    %1799 = vmatpush1.msra.mxu0 0.0
    %1800 = vmatprep.subr.mxu0 0.0
    %1801 = vmatpush1.msra.mxu0 0.0
    %1802 = vmatprep.subr.mxu0 0.0
    %1803 = vmatpush1.msra.mxu0 %v1767
    %1804 = vmatprep.subr.mxu0 0.0
    %1805 = vmatpush2.msra.mxu0 0.0
    %1806 = vmatprep.subr.mxu0 0.0
    %1807 = vmatpush2.msra.mxu0 0.0
    %1808 = vmatprep.subr.mxu0 0.0
    %1809 = vmatpush2.msra.mxu0 0.0
    %1810 = vmatprep.subr.mxu0 0.0
    %1811 = vmatpush2.msra.mxu0 0.0
    %1812 = vmatprep.subr.mxu0 0.0
    %1813 = vmatpush2.msra.mxu0 0.0
    %1814 = vmatprep.subr.mxu0 0.0
    %1815 = vmatpush2.msra.mxu0 0.0
    %1816 = vmatprep.subr.mxu0 0.0
    %1817 = vmatpush2.msra.mxu0 0.0
    %1818 = vmatprep.subr.mxu0 0.0
    %1819 = vmatpush2.msra.mxu0 0.0
    %1820 = vmatprep.subr.mxu0 0.0
    %1821 = vmatpush2.msra.mxu0 0.0
    %1822 = vmatprep.subr.mxu0 0.0
    %1823 = vmatpush2.msra.mxu0 0.0
    %1824 = vmatprep.subr.mxu0 0.0
    %1825 = vmatpush2.msra.mxu0 0.0
    %1826 = vmatprep.subr.mxu0 0.0
    %1827 = vmatpush2.msra.mxu0 0.0
    %1828 = vmatprep.subr.mxu0 0.0
    %1829 = vmatpush2.msra.mxu0 0.0
    %1830 = vmatprep.subr.mxu0 0.0
    %1831 = vmatpush2.msra.mxu0 0.0
    %1832 = vmatprep.subr.mxu0 0.0
    %1833 = vmatpush2.msra.mxu0 0.0
    %1834 = vmatprep.subr.mxu0 0.0
    %1835 = vmatpush2.msra.mxu0 0.0
    %1836 = vmatprep.mubr.f32.mxu0 0.0
    %1837 = vmatmul.mubr.f32.gmra.mxu0 %v1770
    %v1838 = vpop.f32.mrf.mxu0
    %v1839 = vadd.f32 0.0, %v1838
    %v1840 = vpop.f32.mrf.mxu0
    %1841 = vdwg.mxu0
    %1842 = vrot.lane.b32.xlu0 %v1339, 64
    %v1843 = vpop.permute.xlu0 %1842
    %v1846 = vsel %vm510, %v1687, 0
    %1848 = vmatprep.subr.mxu0 0.0
    %1849 = vmatpush1.msra.mxu0 0.0
    %1850 = vmatprep.subr.mxu0 0.0
    %1851 = vmatpush1.msra.mxu0 0.0
    %1852 = vmatprep.subr.mxu0 0.0
    %1853 = vmatpush1.msra.mxu0 0.0
    %1854 = vmatprep.subr.mxu0 0.0
    %1855 = vmatpush1.msra.mxu0 0.0
    %1856 = vmatprep.subr.mxu0 0.0
    %1857 = vmatpush1.msra.mxu0 0.0
    %1858 = vmatprep.subr.mxu0 0.0
    %1859 = vmatpush1.msra.mxu0 0.0
    %1860 = vmatprep.subr.mxu0 0.0
    %1861 = vmatpush1.msra.mxu0 0.0
    %1862 = vmatprep.subr.mxu0 0.0
    %1863 = vmatpush1.msra.mxu0 0.0
    %1864 = vmatprep.subr.mxu0 0.0
    %1865 = vmatpush1.msra.mxu0 0.0
    %1866 = vmatprep.subr.mxu0 0.0
    %1867 = vmatpush1.msra.mxu0 0.0
    %1868 = vmatprep.subr.mxu0 0.0
    %1869 = vmatpush1.msra.mxu0 0.0
    %1870 = vmatprep.subr.mxu0 0.0
    %1871 = vmatpush1.msra.mxu0 0.0
    %1872 = vmatprep.subr.mxu0 0.0
    %1873 = vmatpush1.msra.mxu0 0.0
    %1874 = vmatprep.subr.mxu0 0.0
    %1875 = vmatpush1.msra.mxu0 0.0
    %1876 = vmatprep.subr.mxu0 0.0
    %1877 = vmatpush1.msra.mxu0 0.0
    %1878 = vmatprep.subr.mxu0 0.0
    %1879 = vmatpush1.msra.mxu0 %v1843
    %1880 = vmatprep.subr.mxu0 0.0
    %1881 = vmatpush2.msra.mxu0 0.0
    %1882 = vmatprep.subr.mxu0 0.0
    %1883 = vmatpush2.msra.mxu0 0.0
    %1884 = vmatprep.subr.mxu0 0.0
    %1885 = vmatpush2.msra.mxu0 0.0
    %1886 = vmatprep.subr.mxu0 0.0
    %1887 = vmatpush2.msra.mxu0 0.0
    %1888 = vmatprep.subr.mxu0 0.0
    %1889 = vmatpush2.msra.mxu0 0.0
    %1890 = vmatprep.subr.mxu0 0.0
    %1891 = vmatpush2.msra.mxu0 0.0
    %1892 = vmatprep.subr.mxu0 0.0
    %1893 = vmatpush2.msra.mxu0 0.0
    %1894 = vmatprep.subr.mxu0 0.0
    %1895 = vmatpush2.msra.mxu0 0.0
    %1896 = vmatprep.subr.mxu0 0.0
    %1897 = vmatpush2.msra.mxu0 0.0
    %1898 = vmatprep.subr.mxu0 0.0
    %1899 = vmatpush2.msra.mxu0 0.0
    %1900 = vmatprep.subr.mxu0 0.0
    %1901 = vmatpush2.msra.mxu0 0.0
    %1902 = vmatprep.subr.mxu0 0.0
    %1903 = vmatpush2.msra.mxu0 0.0
    %1904 = vmatprep.subr.mxu0 0.0
    %1905 = vmatpush2.msra.mxu0 0.0
    %1906 = vmatprep.subr.mxu0 0.0
    %1907 = vmatpush2.msra.mxu0 0.0
    %1908 = vmatprep.subr.mxu0 0.0
    %1909 = vmatpush2.msra.mxu0 0.0
    %1910 = vmatprep.subr.mxu0 0.0
    %1911 = vmatpush2.msra.mxu0 0.0
    %1912 = vmatprep.mubr.f32.mxu0 0.0
    %1913 = vmatmul.mubr.f32.gmra.mxu0 %v1846
    %v1914 = vpop.f32.mrf.mxu0
    %v1915 = vadd.f32 0.0, %v1914
    %v1916 = vpop.f32.mrf.mxu0
    %1917 = vdwg.mxu0
    %1918 = vrot.lane.b32.xlu0 %v1341, 64
    %v1919 = vpop.permute.xlu0 %1918
    %v1922 = vsel %vm510, %v1689, 0
    %1924 = vmatprep.subr.mxu0 0.0
    %1925 = vmatpush1.msra.mxu0 0.0
    %1926 = vmatprep.subr.mxu0 0.0
    %1927 = vmatpush1.msra.mxu0 0.0
    %1928 = vmatprep.subr.mxu0 0.0
    %1929 = vmatpush1.msra.mxu0 0.0
    %1930 = vmatprep.subr.mxu0 0.0
    %1931 = vmatpush1.msra.mxu0 0.0
    %1932 = vmatprep.subr.mxu0 0.0
    %1933 = vmatpush1.msra.mxu0 0.0
    %1934 = vmatprep.subr.mxu0 0.0
    %1935 = vmatpush1.msra.mxu0 0.0
    %1936 = vmatprep.subr.mxu0 0.0
    %1937 = vmatpush1.msra.mxu0 0.0
    %1938 = vmatprep.subr.mxu0 0.0
    %1939 = vmatpush1.msra.mxu0 0.0
    %1940 = vmatprep.subr.mxu0 0.0
    %1941 = vmatpush1.msra.mxu0 0.0
    %1942 = vmatprep.subr.mxu0 0.0
    %1943 = vmatpush1.msra.mxu0 0.0
    %1944 = vmatprep.subr.mxu0 0.0
    %1945 = vmatpush1.msra.mxu0 0.0
    %1946 = vmatprep.subr.mxu0 0.0
    %1947 = vmatpush1.msra.mxu0 0.0
    %1948 = vmatprep.subr.mxu0 0.0
    %1949 = vmatpush1.msra.mxu0 0.0
    %1950 = vmatprep.subr.mxu0 0.0
    %1951 = vmatpush1.msra.mxu0 0.0
    %1952 = vmatprep.subr.mxu0 0.0
    %1953 = vmatpush1.msra.mxu0 0.0
    %1954 = vmatprep.subr.mxu0 0.0
    %1955 = vmatpush1.msra.mxu0 %v1919
    %1956 = vmatprep.subr.mxu0 0.0
    %1957 = vmatpush2.msra.mxu0 0.0
    %1958 = vmatprep.subr.mxu0 0.0
    %1959 = vmatpush2.msra.mxu0 0.0
    %1960 = vmatprep.subr.mxu0 0.0
    %1961 = vmatpush2.msra.mxu0 0.0
    %1962 = vmatprep.subr.mxu0 0.0
    %1963 = vmatpush2.msra.mxu0 0.0
    %1964 = vmatprep.subr.mxu0 0.0
    %1965 = vmatpush2.msra.mxu0 0.0
    %1966 = vmatprep.subr.mxu0 0.0
    %1967 = vmatpush2.msra.mxu0 0.0
    %1968 = vmatprep.subr.mxu0 0.0
    %1969 = vmatpush2.msra.mxu0 0.0
    %1970 = vmatprep.subr.mxu0 0.0
    %1971 = vmatpush2.msra.mxu0 0.0
    %1972 = vmatprep.subr.mxu0 0.0
    %1973 = vmatpush2.msra.mxu0 0.0
    %1974 = vmatprep.subr.mxu0 0.0
    %1975 = vmatpush2.msra.mxu0 0.0
    %1976 = vmatprep.subr.mxu0 0.0
    %1977 = vmatpush2.msra.mxu0 0.0
    %1978 = vmatprep.subr.mxu0 0.0
    %1979 = vmatpush2.msra.mxu0 0.0
    %1980 = vmatprep.subr.mxu0 0.0
    %1981 = vmatpush2.msra.mxu0 0.0
    %1982 = vmatprep.subr.mxu0 0.0
    %1983 = vmatpush2.msra.mxu0 0.0
    %1984 = vmatprep.subr.mxu0 0.0
    %1985 = vmatpush2.msra.mxu0 0.0
    %1986 = vmatprep.subr.mxu0 0.0
    %1987 = vmatpush2.msra.mxu0 0.0
    %1988 = vmatprep.mubr.f32.mxu0 0.0
    %1989 = vmatmul.mubr.f32.gmra.mxu0 %v1922
    %v1990 = vpop.f32.mrf.mxu0
    %v1991 = vadd.f32 0.0, %v1990
    %v1992 = vpop.f32.mrf.mxu0
    %1993 = vdwg.mxu0
    %1996 = vrot.lane.b32.xlu0 %v1915, 16
    %v1997 = vpop.permute.xlu0 %1996
    %1998 = vrot.lane.b32.xlu0 %v1991, 16
    %v1999 = vpop.permute.xlu0 %1998
    %v2002 = vsel %vm207, %v1763, %v1997
    %v2003 = vsel %vm207, %v1839, %v1999
    %v2004 = vld [vmem:[%s2 + $0x14b] sm:$0x1]
    %v2005 = vlaneseq
    %v2006 = vshrl.u32 %v2005, 7
    %v2007 = vsub.s32 0, %v2006
    %v2008 = vrot.slane %v2004, %v2007
    %v2010 = vsel %vm43, %v2002, 0
    %v2013 = vsel %vm43, %v2003, 0
    %2015 = vmatprep.subr.mxu0 0.0
    %2016 = vmatpush1.msra.mxu0 0.0
    %2017 = vmatprep.subr.mxu0 0.0
    %2018 = vmatpush1.msra.mxu0 0.0
    %2019 = vmatprep.subr.mxu0 0.0
    %2020 = vmatpush1.msra.mxu0 0.0
    %2021 = vmatprep.subr.mxu0 0.0
    %2022 = vmatpush1.msra.mxu0 0.0
    %2023 = vmatprep.subr.mxu0 0.0
    %2024 = vmatpush1.msra.mxu0 0.0
    %2025 = vmatprep.subr.mxu0 0.0
    %2026 = vmatpush1.msra.mxu0 0.0
    %2027 = vmatprep.subr.mxu0 0.0
    %2028 = vmatpush1.msra.mxu0 0.0
    %2029 = vmatprep.subr.mxu0 0.0
    %2030 = vmatpush1.msra.mxu0 0.0
    %2031 = vmatprep.subr.mxu0 0.0
    %2032 = vmatpush1.msra.mxu0 0.0
    %2033 = vmatprep.subr.mxu0 0.0
    %2034 = vmatpush1.msra.mxu0 0.0
    %2035 = vmatprep.subr.mxu0 0.0
    %2036 = vmatpush1.msra.mxu0 0.0
    %2037 = vmatprep.subr.mxu0 0.0
    %2038 = vmatpush1.msra.mxu0 0.0
    %2039 = vmatprep.subr.mxu0 0.0
    %2040 = vmatpush1.msra.mxu0 %v1237
    %2041 = vmatprep.subr.mxu0 0.0
    %2042 = vmatpush1.msra.mxu0 %v1236
    %2043 = vmatprep.subr.mxu0 0.0
    %2044 = vmatpush1.msra.mxu0 %v1235
    %2045 = vmatprep.subr.mxu0 0.0
    %2046 = vmatpush1.msra.mxu0 %v1234
    %2047 = vmatprep.subr.mxu0 0.0
    %2048 = vmatpush2.msra.mxu0 0.0
    %2049 = vmatprep.subr.mxu0 0.0
    %2050 = vmatpush2.msra.mxu0 0.0
    %2051 = vmatprep.subr.mxu0 0.0
    %2052 = vmatpush2.msra.mxu0 0.0
    %2053 = vmatprep.subr.mxu0 0.0
    %2054 = vmatpush2.msra.mxu0 0.0
    %2055 = vmatprep.subr.mxu0 0.0
    %2056 = vmatpush2.msra.mxu0 0.0
    %2057 = vmatprep.subr.mxu0 0.0
    %2058 = vmatpush2.msra.mxu0 0.0
    %2059 = vmatprep.subr.mxu0 0.0
    %2060 = vmatpush2.msra.mxu0 0.0
    %2061 = vmatprep.subr.mxu0 0.0
    %2062 = vmatpush2.msra.mxu0 0.0
    %2063 = vmatprep.subr.mxu0 0.0
    %2064 = vmatpush2.msra.mxu0 0.0
    %2065 = vmatprep.subr.mxu0 0.0
    %2066 = vmatpush2.msra.mxu0 0.0
    %2067 = vmatprep.subr.mxu0 0.0
    %2068 = vmatpush2.msra.mxu0 0.0
    %2069 = vmatprep.subr.mxu0 0.0
    %2070 = vmatpush2.msra.mxu0 0.0
    %2071 = vmatprep.subr.mxu0 0.0
    %2072 = vmatpush2.msra.mxu0 0.0
    %2073 = vmatprep.subr.mxu0 0.0
    %2074 = vmatpush2.msra.mxu0 0.0
    %2075 = vmatprep.subr.mxu0 0.0
    %2076 = vmatpush2.msra.mxu0 0.0
    %2077 = vmatprep.subr.mxu0 0.0
    %2078 = vmatpush2.msra.mxu0 0.0
    %2079 = vmatprep.mubr.f32.mxu0 0.0
    %2080 = vmatmul.mubr.f32.gmra.mxu0 %v2010
    %v2081 = vpop.f32.mrf.mxu0
    %v2082 = vadd.f32 %v2008, %v2081
    %v2083 = vpop.f32.mrf.mxu0
    %2084 = vmatprep.mubr.f32.mxu0 0.0
    %2085 = vmatmul.mubr.f32.gmra.mxu0 %v2013
    %v2086 = vpop.f32.mrf.mxu0
    %v2087 = vadd.f32 %v2008, %v2086
    %v2088 = vpop.f32.mrf.mxu0
    %2089 = vdwg.mxu0
    %v2090 = vadd.f32 %v1228, %v2082
    %v2091 = vadd.f32 %v1229, %v2087
    %v2092 = vld [vmem:[%s2 + $0x14c] sm:$0x1]
    %v2093 = vld [vmem:[%s2 + $0x14d] sm:$0x1]
    %v2094 = vsel %vm43, %v2090, 0.0
    %2095 = vadd.xlane.f32.xlu0 %v2094
    %v2096 = vpop.xlane.xlu0 %2095
    %v2097 = vsel %vm43, %v2091, 0.0
    %2098 = vadd.xlane.f32.xlu0 %v2097
    %v2099 = vpop.xlane.xlu0 %2098
    %v2100 = vmul.f32 %v2096, %v50
    %v2101 = vmul.f32 %v2099, %v50
    %v2102 = vsub.f32 %v2090, %v2100
    %v2103 = vsub.f32 %v2091, %v2101
    %v2104 = vmul.f32 %v2102, %v2102
    %v2105 = vmul.f32 %v2103, %v2103
    %v2106 = vsel %vm43, %v2104, 0.0
    %2107 = vadd.xlane.f32.xlu0 %v2106
    %v2108 = vpop.xlane.xlu0 %2107
    %v2109 = vsel %vm43, %v2105, 0.0
    %2110 = vadd.xlane.f32.xlu0 %v2109
    %v2111 = vpop.xlane.xlu0 %2110
    %v2112 = vmul.f32 %v2108, %v50
    %v2113 = vmul.f32 %v2111, %v50
    %v2114 = vadd.f32 %v2112, 1e-12
    %v2115 = vadd.f32 %v2113, 1e-12
    %v2116 = vrsqrt.pop %v2114
    %v2117 = vrsqrt.pop %v2115
    %v2118 = vmul.f32 %v2102, %v2116
    %v2119 = vmul.f32 %v2103, %v2117
    %v2120 = vlaneseq
    %v2121 = vshrl.u32 %v2120, 7
    %v2122 = vsub.s32 0, %v2121
    %v2123 = vrot.slane %v2092, %v2122
    %v2124 = vmul.f32 %v2118, %v2123
    %v2125 = vmul.f32 %v2119, %v2123
    %v2126 = vlaneseq
    %v2127 = vshrl.u32 %v2126, 7
    %v2128 = vsub.s32 0, %v2127
    %v2129 = vrot.slane %v2093, %v2128
    %v2130 = vadd.f32 %v2124, %v2129
    %v2131 = vadd.f32 %v2125, %v2129
    %v2132 = vld [vmem:[%s2 + $0x14e] sm:$0x1]
    %v2133 = vlaneseq
    %v2134 = vshrl.u32 %v2133, 7
    %v2135 = vsub.s32 0, %v2134
    %v2136 = vrot.slane %v2132, %v2135
    %v2138 = vsel %vm43, %v2130, 0
    %v2141 = vsel %vm43, %v2131, 0
    %2143 = vmatprep.subr.mxu0 0.0
    %2144 = vmatpush1.msra.mxu0 0.0
    %2145 = vmatprep.subr.mxu0 0.0
    %2146 = vmatpush1.msra.mxu0 0.0
    %2147 = vmatprep.subr.mxu0 0.0
    %2148 = vmatpush1.msra.mxu0 0.0
    %2149 = vmatprep.subr.mxu0 0.0
    %2150 = vmatpush1.msra.mxu0 0.0
    %2151 = vmatprep.subr.mxu0 0.0
    %2152 = vmatpush1.msra.mxu0 0.0
    %2153 = vmatprep.subr.mxu0 0.0
    %2154 = vmatpush1.msra.mxu0 0.0
    %2155 = vmatprep.subr.mxu0 0.0
    %2156 = vmatpush1.msra.mxu0 0.0
    %2157 = vmatprep.subr.mxu0 0.0
    %2158 = vmatpush1.msra.mxu0 0.0
    %2159 = vmatprep.subr.mxu0 0.0
    %2160 = vmatpush1.msra.mxu0 0.0
    %2161 = vmatprep.subr.mxu0 0.0
    %2162 = vmatpush1.msra.mxu0 0.0
    %2163 = vmatprep.subr.mxu0 0.0
    %2164 = vmatpush1.msra.mxu0 0.0
    %2165 = vmatprep.subr.mxu0 0.0
    %2166 = vmatpush1.msra.mxu0 0.0
    %2167 = vmatprep.subr.mxu0 0.0
    %2168 = vmatpush1.msra.mxu0 %v1241
    %2169 = vmatprep.subr.mxu0 0.0
    %2170 = vmatpush1.msra.mxu0 %v1240
    %2171 = vmatprep.subr.mxu0 0.0
    %2172 = vmatpush1.msra.mxu0 %v1239
    %2173 = vmatprep.subr.mxu0 0.0
    %2174 = vmatpush1.msra.mxu0 %v1238
    %2175 = vmatprep.subr.mxu0 0.0
    %2176 = vmatpush2.msra.mxu0 0.0
    %2177 = vmatprep.subr.mxu0 0.0
    %2178 = vmatpush2.msra.mxu0 0.0
    %2179 = vmatprep.subr.mxu0 0.0
    %2180 = vmatpush2.msra.mxu0 0.0
    %2181 = vmatprep.subr.mxu0 0.0
    %2182 = vmatpush2.msra.mxu0 0.0
    %2183 = vmatprep.subr.mxu0 0.0
    %2184 = vmatpush2.msra.mxu0 0.0
    %2185 = vmatprep.subr.mxu0 0.0
    %2186 = vmatpush2.msra.mxu0 0.0
    %2187 = vmatprep.subr.mxu0 0.0
    %2188 = vmatpush2.msra.mxu0 0.0
    %2189 = vmatprep.subr.mxu0 0.0
    %2190 = vmatpush2.msra.mxu0 0.0
    %2191 = vmatprep.subr.mxu0 0.0
    %2192 = vmatpush2.msra.mxu0 0.0
    %2193 = vmatprep.subr.mxu0 0.0
    %2194 = vmatpush2.msra.mxu0 0.0
    %2195 = vmatprep.subr.mxu0 0.0
    %2196 = vmatpush2.msra.mxu0 0.0
    %2197 = vmatprep.subr.mxu0 0.0
    %2198 = vmatpush2.msra.mxu0 0.0
    %2199 = vmatprep.subr.mxu0 0.0
    %2200 = vmatpush2.msra.mxu0 0.0
    %2201 = vmatprep.subr.mxu0 0.0
    %2202 = vmatpush2.msra.mxu0 0.0
    %2203 = vmatprep.subr.mxu0 0.0
    %2204 = vmatpush2.msra.mxu0 0.0
    %2205 = vmatprep.subr.mxu0 0.0
    %2206 = vmatpush2.msra.mxu0 0.0
    %2207 = vmatprep.mubr.f32.mxu0 0.0
    %2208 = vmatmul.mubr.f32.gmra.mxu0 %v2138
    %v2209 = vpop.f32.mrf.mxu0
    %v2210 = vadd.f32 %v2136, %v2209
    %v2211 = vpop.f32.mrf.mxu0
    %2212 = vmatprep.mubr.f32.mxu0 0.0
    %2213 = vmatmul.mubr.f32.gmra.mxu0 %v2141
    %v2214 = vpop.f32.mrf.mxu0
    %v2215 = vadd.f32 %v2136, %v2214
    %v2216 = vpop.f32.mrf.mxu0
    %2217 = vdwg.mxu0
    %v2218 = vmul.f32 %v2210, %v2210
    %v2219 = vmul.f32 %v2215, %v2215
    %v2220 = vmul.f32 %v2210, %v2218
    %v2221 = vmul.f32 %v2215, %v2219
    %v2222 = vmul.f32 %v2220, 0.044715
    %v2223 = vmul.f32 %v2221, 0.044715
    %v2224 = vadd.f32 %v2210, %v2222
    %v2225 = vadd.f32 %v2215, %v2223
    %v2226 = vmul.f32 %v2224, 0.7978846
    %v2227 = vmul.f32 %v2225, 0.7978846
    %v2228 = vtanh.pop %v2226
    %v2229 = vtanh.pop %v2227
    %v2230 = vadd.f32 %v2228, 1.0
    %v2231 = vadd.f32 %v2229, 1.0
    %v2232 = vmul.f32 %v2230, 0.5
    %v2233 = vmul.f32 %v2231, 0.5
    %v2234 = vmul.f32 %v2210, %v2232
    %v2235 = vmul.f32 %v2215, %v2233
    %v2236 = vld [vmem:[%s2 + $0x14f] sm:$0x1]
    %v2237 = vlaneseq
    %v2238 = vshrl.u32 %v2237, 7
    %v2239 = vsub.s32 0, %v2238
    %v2240 = vrot.slane %v2236, %v2239
    %v2242 = vsel %vm1106, %v2234, 0
    %v2245 = vsel %vm1106, %v2235, 0
    %2247 = vmatprep.subr.mxu0 0.0
    %2248 = vmatpush1.msra.mxu0 0.0
    %2249 = vmatprep.subr.mxu0 0.0
    %2250 = vmatpush1.msra.mxu0 0.0
    %2251 = vmatprep.subr.mxu0 0.0
    %2252 = vmatpush1.msra.mxu0 0.0
    %2253 = vmatprep.subr.mxu0 0.0
    %2254 = vmatpush1.msra.mxu0 0.0
    %2255 = vmatprep.subr.mxu0 0.0
    %2256 = vmatpush1.msra.mxu0 0.0
    %2257 = vmatprep.subr.mxu0 0.0
    %2258 = vmatpush1.msra.mxu0 0.0
    %2259 = vmatprep.subr.mxu0 0.0
    %2260 = vmatpush1.msra.mxu0 0.0
    %2261 = vmatprep.subr.mxu0 0.0
    %2262 = vmatpush1.msra.mxu0 0.0
    %2263 = vmatprep.subr.mxu0 0.0
    %2264 = vmatpush1.msra.mxu0 %v1249
    %2265 = vmatprep.subr.mxu0 0.0
    %2266 = vmatpush1.msra.mxu0 %v1248
    %2267 = vmatprep.subr.mxu0 0.0
    %2268 = vmatpush1.msra.mxu0 %v1247
    %2269 = vmatprep.subr.mxu0 0.0
    %2270 = vmatpush1.msra.mxu0 %v1246
    %2271 = vmatprep.subr.mxu0 0.0
    %2272 = vmatpush1.msra.mxu0 %v1245
    %2273 = vmatprep.subr.mxu0 0.0
    %2274 = vmatpush1.msra.mxu0 %v1244
    %2275 = vmatprep.subr.mxu0 0.0
    %2276 = vmatpush1.msra.mxu0 %v1243
    %2277 = vmatprep.subr.mxu0 0.0
    %2278 = vmatpush1.msra.mxu0 %v1242
    %2279 = vmatprep.subr.mxu0 0.0
    %2280 = vmatpush2.msra.mxu0 0.0
    %2281 = vmatprep.subr.mxu0 0.0
    %2282 = vmatpush2.msra.mxu0 0.0
    %2283 = vmatprep.subr.mxu0 0.0
    %2284 = vmatpush2.msra.mxu0 0.0
    %2285 = vmatprep.subr.mxu0 0.0
    %2286 = vmatpush2.msra.mxu0 0.0
    %2287 = vmatprep.subr.mxu0 0.0
    %2288 = vmatpush2.msra.mxu0 0.0
    %2289 = vmatprep.subr.mxu0 0.0
    %2290 = vmatpush2.msra.mxu0 0.0
    %2291 = vmatprep.subr.mxu0 0.0
    %2292 = vmatpush2.msra.mxu0 0.0
    %2293 = vmatprep.subr.mxu0 0.0
    %2294 = vmatpush2.msra.mxu0 0.0
    %2295 = vmatprep.subr.mxu0 0.0
    %2296 = vmatpush2.msra.mxu0 0.0
    %2297 = vmatprep.subr.mxu0 0.0
    %2298 = vmatpush2.msra.mxu0 0.0
    %2299 = vmatprep.subr.mxu0 0.0
    %2300 = vmatpush2.msra.mxu0 0.0
    %2301 = vmatprep.subr.mxu0 0.0
    %2302 = vmatpush2.msra.mxu0 0.0
    %2303 = vmatprep.subr.mxu0 0.0
    %2304 = vmatpush2.msra.mxu0 0.0
    %2305 = vmatprep.subr.mxu0 0.0
    %2306 = vmatpush2.msra.mxu0 0.0
    %2307 = vmatprep.subr.mxu0 0.0
    %2308 = vmatpush2.msra.mxu0 0.0
    %2309 = vmatprep.subr.mxu0 0.0
    %2310 = vmatpush2.msra.mxu0 0.0
    %2311 = vmatprep.mubr.f32.mxu0 0.0
    %2312 = vmatmul.mubr.f32.gmra.mxu0 %v2242
    %v2313 = vpop.f32.mrf.mxu0
    %v2314 = vadd.f32 %v2240, %v2313
    %v2315 = vpop.f32.mrf.mxu0
    %2316 = vmatprep.mubr.f32.mxu0 0.0
    %2317 = vmatmul.mubr.f32.gmra.mxu0 %v2245
    %v2318 = vpop.f32.mrf.mxu0
    %v2319 = vadd.f32 %v2240, %v2318
    %v2320 = vpop.f32.mrf.mxu0
    %2321 = vdwg.mxu0
    %v2322 = vadd.f32 %v2130, %v2314
    %v2323 = vadd.f32 %v2131, %v2319
    %v2324 = vld [vmem:[%s2 + $0x150] sm:$0x1]
    %v2325 = vld [vmem:[%s2 + $0x151] sm:$0x1]
    %v2326 = vsel %vm43, %v2322, 0.0
    %2327 = vadd.xlane.f32.xlu0 %v2326
    %v2328 = vpop.xlane.xlu0 %2327
    %v2329 = vsel %vm43, %v2323, 0.0
    %2330 = vadd.xlane.f32.xlu0 %v2329
    %v2331 = vpop.xlane.xlu0 %2330
    %v2332 = vmul.f32 %v2328, %v50
    %v2333 = vmul.f32 %v2331, %v50
    %v2334 = vsub.f32 %v2322, %v2332
    %v2335 = vsub.f32 %v2323, %v2333
    %v2336 = vmul.f32 %v2334, %v2334
    %v2337 = vmul.f32 %v2335, %v2335
    %v2338 = vsel %vm43, %v2336, 0.0
    %2339 = vadd.xlane.f32.xlu0 %v2338
    %v2340 = vpop.xlane.xlu0 %2339
    %v2341 = vsel %vm43, %v2337, 0.0
    %2342 = vadd.xlane.f32.xlu0 %v2341
    %v2343 = vpop.xlane.xlu0 %2342
    %v2344 = vmul.f32 %v2340, %v50
    %v2345 = vmul.f32 %v2343, %v50
    %v2346 = vadd.f32 %v2344, 1e-12
    %v2347 = vadd.f32 %v2345, 1e-12
    %v2348 = vrsqrt.pop %v2346
    %v2349 = vrsqrt.pop %v2347
    %v2350 = vmul.f32 %v2334, %v2348
    %v2351 = vmul.f32 %v2335, %v2349
    %v2352 = vlaneseq
    %v2353 = vshrl.u32 %v2352, 7
    %v2354 = vsub.s32 0, %v2353
    %v2355 = vrot.slane %v2324, %v2354
    %v2356 = vmul.f32 %v2350, %v2355
    %v2357 = vmul.f32 %v2351, %v2355
    %v2358 = vlaneseq
    %v2359 = vshrl.u32 %v2358, 7
    %v2360 = vsub.s32 0, %v2359
    %v2361 = vrot.slane %v2325, %v2360
    %v2362 = vadd.f32 %v2356, %v2361
    %v2363 = vadd.f32 %v2357, %v2361
    %v2366 = vrot.slane %v2363, 7
    %vm2367 = vcmask 1041409
    %v2368 = vsel %vm2367, %v2366, %v2362
    %vm2370 = vcmask 254976
    %2371 = vst.msk [vmem:[#allocation2] sm:$0x3] %vm2370, %v2368
    %s2372 = scalar_lea.vmem %s0, 16
    %v2373 = vld [vmem:[%s2372] sm:$0xff]
    %v2374 = vld [vmem:[%s2372 + $0x8] sm:$0xff]
    %s2375 = scalar_lea.vmem %s1, 2
    %v2376 = vld [vmem:[%s2375] sm:$0x3]
    %v2379 = vunpack.c.l.s4 1966171168
    %v2380 = vunpack.c.0.s8 %v2379
    %v2381 = vlaneseq
    %v2382 = vshrl.u32 %v2381, 7
    %v2383 = vsub.s32 %v2380, %v2382
    %v2384 = vrot.slane %v2376, %v2383
    %v2385 = vcombine.high %v2384, %v2384
    %v2387 = vunpack.c.l.s4 1966171168
    %v2388 = vunpack.c.0.s8 %v2387
    %v2389 = vlaneseq
    %v2390 = vshrl.u32 %v2389, 7
    %v2391 = vsub.s32 %v2388, %v2390
    %v2392 = vrot.slane %v2384, %v2391
    %v2394 = vunpack.c.l.s4 1966171168
    %v2395 = vunpack.c.0.s8 %v2394
    %v2396 = vlaneseq
    %v2397 = vshrl.u32 %v2396, 7
    %v2398 = vsub.s32 %v2395, %v2397
    %v2399 = vrot.slane %v2385, %v2398
    %s2400 = scalar_lea.vmem %s2, 344
    %v2401 = vld [vmem:[%s2400] sm:$0x1]
    %v2402 = vld [vmem:[%s2400 + $0x1] sm:$0x1]
    %v2403 = vsel %vm43, %v2373, 0.0
    %2404 = vadd.xlane.f32.xlu0 %v2403
    %v2405 = vpop.xlane.xlu0 %2404
    %v2406 = vsel %vm43, %v2374, 0.0
    %2407 = vadd.xlane.f32.xlu0 %v2406
    %v2408 = vpop.xlane.xlu0 %2407
    %v2409 = vmul.f32 %v2405, %v50
    %v2410 = vmul.f32 %v2408, %v50
    %v2411 = vsub.f32 %v2373, %v2409
    %v2412 = vsub.f32 %v2374, %v2410
    %v2413 = vmul.f32 %v2411, %v2411
    %v2414 = vmul.f32 %v2412, %v2412
    %v2415 = vsel %vm43, %v2413, 0.0
    %2416 = vadd.xlane.f32.xlu0 %v2415
    %v2417 = vpop.xlane.xlu0 %2416
    %v2418 = vsel %vm43, %v2414, 0.0
    %2419 = vadd.xlane.f32.xlu0 %v2418
    %v2420 = vpop.xlane.xlu0 %2419
    %v2421 = vmul.f32 %v2417, %v50
    %v2422 = vmul.f32 %v2420, %v50
    %v2423 = vadd.f32 %v2421, 1e-12
    %v2424 = vadd.f32 %v2422, 1e-12
    %v2425 = vrsqrt.pop %v2423
    %v2426 = vrsqrt.pop %v2424
    %v2427 = vmul.f32 %v2411, %v2425
    %v2428 = vmul.f32 %v2412, %v2426
    %v2429 = vlaneseq
    %v2430 = vshrl.u32 %v2429, 7
    %v2431 = vsub.s32 0, %v2430
    %v2432 = vrot.slane %v2401, %v2431
    %v2433 = vmul.f32 %v2427, %v2432
    %v2434 = vmul.f32 %v2428, %v2432
    %v2435 = vlaneseq
    %v2436 = vshrl.u32 %v2435, 7
    %v2437 = vsub.s32 0, %v2436
    %v2438 = vrot.slane %v2402, %v2437
    %v2439 = vadd.f32 %v2433, %v2438
    %v2440 = vadd.f32 %v2434, %v2438
    %v2441 = vld [vmem:[%s2400 + $0x2] sm:$0xff]
    %v2442 = vld [vmem:[%s2400 + $0xa] sm:$0xff]
    %v2443 = vld [vmem:[%s2400 + $0x12] sm:$0xff]
    %v2444 = vld [vmem:[%s2400 + $0x1a] sm:$0xff]
    %v2445 = vld [vmem:[%s2400 + $0x22] sm:$0xff]
    %v2446 = vld [vmem:[%s2400 + $0x2a] sm:$0xff]
    %v2447 = vld [vmem:[%s2400 + $0x32] sm:$0xff]
    %v2448 = vld [vmem:[%s2400 + $0x3a] sm:$0xff]
    %v2449 = vld [vmem:[%s2400 + $0x42] sm:$0xff]
    %v2450 = vld [vmem:[%s2400 + $0x4a] sm:$0xff]
    %v2451 = vld [vmem:[%s2400 + $0x52] sm:$0xff]
    %v2452 = vld [vmem:[%s2400 + $0x5a] sm:$0xff]
    %v2453 = vld [vmem:[%s2400 + $0x62] sm:$0xff]
    %v2454 = vld [vmem:[%s2400 + $0x6a] sm:$0xff]
    %v2455 = vld [vmem:[%s2400 + $0x72] sm:$0xff]
    %v2456 = vld [vmem:[%s2400 + $0x7a] sm:$0xff]
    %v2457 = vld [vmem:[%s2400 + $0x82] sm:$0xff]
    %v2458 = vld [vmem:[%s2400 + $0x8a] sm:$0xff]
    %v2459 = vld [vmem:[%s2400 + $0x92] sm:$0xff]
    %v2460 = vld [vmem:[%s2400 + $0x9a] sm:$0xff]
    %v2461 = vld [vmem:[%s2400 + $0xa2] sm:$0x1]
    %v2462 = vlaneseq
    %v2463 = vshrl.u32 %v2462, 7
    %v2464 = vsub.s32 0, %v2463
    %v2465 = vrot.slane %v2461, %v2464
    %v2467 = vsel %vm43, %v2439, 0
    %v2470 = vsel %vm43, %v2440, 0
    %2472 = vmatprep.subr.mxu0 0.0
    %2473 = vmatpush1.msra.mxu0 0.0
    %2474 = vmatprep.subr.mxu0 0.0
    %2475 = vmatpush1.msra.mxu0 0.0
    %2476 = vmatprep.subr.mxu0 0.0
    %2477 = vmatpush1.msra.mxu0 0.0
    %2478 = vmatprep.subr.mxu0 0.0
    %2479 = vmatpush1.msra.mxu0 0.0
    %2480 = vmatprep.subr.mxu0 0.0
    %2481 = vmatpush1.msra.mxu0 0.0
    %2482 = vmatprep.subr.mxu0 0.0
    %2483 = vmatpush1.msra.mxu0 0.0
    %2484 = vmatprep.subr.mxu0 0.0
    %2485 = vmatpush1.msra.mxu0 0.0
    %2486 = vmatprep.subr.mxu0 0.0
    %2487 = vmatpush1.msra.mxu0 0.0
    %2488 = vmatprep.subr.mxu0 0.0
    %2489 = vmatpush1.msra.mxu0 0.0
    %2490 = vmatprep.subr.mxu0 0.0
    %2491 = vmatpush1.msra.mxu0 0.0
    %2492 = vmatprep.subr.mxu0 0.0
    %2493 = vmatpush1.msra.mxu0 0.0
    %2494 = vmatprep.subr.mxu0 0.0
    %2495 = vmatpush1.msra.mxu0 0.0
    %2496 = vmatprep.subr.mxu0 0.0
    %2497 = vmatpush1.msra.mxu0 %v2444
    %2498 = vmatprep.subr.mxu0 0.0
    %2499 = vmatpush1.msra.mxu0 %v2443
    %2500 = vmatprep.subr.mxu0 0.0
    %2501 = vmatpush1.msra.mxu0 %v2442
    %2502 = vmatprep.subr.mxu0 0.0
    %2503 = vmatpush1.msra.mxu0 %v2441
    %2504 = vmatprep.subr.mxu0 0.0
    %2505 = vmatpush2.msra.mxu0 0.0
    %2506 = vmatprep.subr.mxu0 0.0
    %2507 = vmatpush2.msra.mxu0 0.0
    %2508 = vmatprep.subr.mxu0 0.0
    %2509 = vmatpush2.msra.mxu0 0.0
    %2510 = vmatprep.subr.mxu0 0.0
    %2511 = vmatpush2.msra.mxu0 0.0
    %2512 = vmatprep.subr.mxu0 0.0
    %2513 = vmatpush2.msra.mxu0 0.0
    %2514 = vmatprep.subr.mxu0 0.0
    %2515 = vmatpush2.msra.mxu0 0.0
    %2516 = vmatprep.subr.mxu0 0.0
    %2517 = vmatpush2.msra.mxu0 0.0
    %2518 = vmatprep.subr.mxu0 0.0
    %2519 = vmatpush2.msra.mxu0 0.0
    %2520 = vmatprep.subr.mxu0 0.0
    %2521 = vmatpush2.msra.mxu0 0.0
    %2522 = vmatprep.subr.mxu0 0.0
    %2523 = vmatpush2.msra.mxu0 0.0
    %2524 = vmatprep.subr.mxu0 0.0
    %2525 = vmatpush2.msra.mxu0 0.0
    %2526 = vmatprep.subr.mxu0 0.0
    %2527 = vmatpush2.msra.mxu0 0.0
    %2528 = vmatprep.subr.mxu0 0.0
    %2529 = vmatpush2.msra.mxu0 0.0
    %2530 = vmatprep.subr.mxu0 0.0
    %2531 = vmatpush2.msra.mxu0 0.0
    %2532 = vmatprep.subr.mxu0 0.0
    %2533 = vmatpush2.msra.mxu0 0.0
    %2534 = vmatprep.subr.mxu0 0.0
    %2535 = vmatpush2.msra.mxu0 0.0
    %2536 = vmatprep.mubr.f32.mxu0 0.0
    %2537 = vmatmul.mubr.f32.gmra.mxu0 %v2467
    %v2538 = vpop.f32.mrf.mxu0
    %v2539 = vadd.f32 %v2465, %v2538
    %v2540 = vpop.f32.mrf.mxu0
    %2541 = vmatprep.mubr.f32.mxu0 0.0
    %2542 = vmatmul.mubr.f32.gmra.mxu0 %v2470
    %v2543 = vpop.f32.mrf.mxu0
    %v2544 = vadd.f32 %v2465, %v2543
    %v2545 = vpop.f32.mrf.mxu0
    %2546 = vdwg.mxu0
    %2549 = vrot.lane.b32.xlu0 %v2539, 112
    %v2550 = vpop.permute.xlu0 %2549
    %2551 = vrot.lane.b32.xlu0 %v2544, 112
    %v2552 = vpop.permute.xlu0 %2551
    %v2553 = vlaneseq
    %v2554 = vshrl.u32 %v2553, 7
    %v2555 = vsub.s32 0, %v2554
    %v2556 = vrot.slane %v2392, %v2555
    %v2557 = vlaneseq
    %v2558 = vshrl.u32 %v2557, 7
    %v2559 = vsub.s32 0, %v2558
    %v2560 = vrot.slane %v2399, %v2559
    %2563 = vrot.lane.b32.xlu0 %v2539, 96
    %v2564 = vpop.permute.xlu0 %2563
    %v2565 = vsel %vm207, %v2539, 0
    %v2567 = vsel %vm207, %v2564, 0
    %2569 = vmatprep.subr.mxu0 0.0
    %2570 = vmatpush1.xpose.msra.mxu0 0.0
    %2571 = vmatprep.subr.mxu0 0.0
    %2572 = vmatpush1.xpose.msra.mxu0 0.0
    %2573 = vmatprep.subr.mxu0 0.0
    %2574 = vmatpush1.xpose.msra.mxu0 0.0
    %2575 = vmatprep.subr.mxu0 0.0
    %2576 = vmatpush1.xpose.msra.mxu0 0.0
    %2577 = vmatprep.subr.mxu0 0.0
    %2578 = vmatpush1.xpose.msra.mxu0 0.0
    %2579 = vmatprep.subr.mxu0 0.0
    %2580 = vmatpush1.xpose.msra.mxu0 0.0
    %2581 = vmatprep.subr.mxu0 0.0
    %2582 = vmatpush1.xpose.msra.mxu0 0.0
    %2583 = vmatprep.subr.mxu0 0.0
    %2584 = vmatpush1.xpose.msra.mxu0 0.0
    %2585 = vmatprep.subr.mxu0 0.0
    %2586 = vmatpush1.xpose.msra.mxu0 0.0
    %2587 = vmatprep.subr.mxu0 0.0
    %2588 = vmatpush1.xpose.msra.mxu0 0.0
    %2589 = vmatprep.subr.mxu0 0.0
    %2590 = vmatpush1.xpose.msra.mxu0 0.0
    %2591 = vmatprep.subr.mxu0 0.0
    %2592 = vmatpush1.xpose.msra.mxu0 0.0
    %2593 = vmatprep.subr.mxu0 0.0
    %2594 = vmatpush1.xpose.msra.mxu0 0.0
    %2595 = vmatprep.subr.mxu0 0.0
    %2596 = vmatpush1.xpose.msra.mxu0 0.0
    %2597 = vmatprep.subr.mxu0 0.0
    %2598 = vmatpush1.xpose.msra.mxu0 0.0
    %2599 = vmatprep.subr.mxu0 0.0
    %2600 = vmatpush1.xpose.msra.mxu0 %v2567
    %2601 = vmatprep.subr.mxu0 0.0
    %2602 = vmatpush2.xpose.msra.mxu0 0.0
    %2603 = vmatprep.subr.mxu0 0.0
    %2604 = vmatpush2.xpose.msra.mxu0 0.0
    %2605 = vmatprep.subr.mxu0 0.0
    %2606 = vmatpush2.xpose.msra.mxu0 0.0
    %2607 = vmatprep.subr.mxu0 0.0
    %2608 = vmatpush2.xpose.msra.mxu0 0.0
    %2609 = vmatprep.subr.mxu0 0.0
    %2610 = vmatpush2.xpose.msra.mxu0 0.0
    %2611 = vmatprep.subr.mxu0 0.0
    %2612 = vmatpush2.xpose.msra.mxu0 0.0
    %2613 = vmatprep.subr.mxu0 0.0
    %2614 = vmatpush2.xpose.msra.mxu0 0.0
    %2615 = vmatprep.subr.mxu0 0.0
    %2616 = vmatpush2.xpose.msra.mxu0 0.0
    %2617 = vmatprep.subr.mxu0 0.0
    %2618 = vmatpush2.xpose.msra.mxu0 0.0
    %2619 = vmatprep.subr.mxu0 0.0
    %2620 = vmatpush2.xpose.msra.mxu0 0.0
    %2621 = vmatprep.subr.mxu0 0.0
    %2622 = vmatpush2.xpose.msra.mxu0 0.0
    %2623 = vmatprep.subr.mxu0 0.0
    %2624 = vmatpush2.xpose.msra.mxu0 0.0
    %2625 = vmatprep.subr.mxu0 0.0
    %2626 = vmatpush2.xpose.msra.mxu0 0.0
    %2627 = vmatprep.subr.mxu0 0.0
    %2628 = vmatpush2.xpose.msra.mxu0 0.0
    %2629 = vmatprep.subr.mxu0 0.0
    %2630 = vmatpush2.xpose.msra.mxu0 0.0
    %2631 = vmatprep.subr.mxu0 0.0
    %2632 = vmatpush2.xpose.msra.mxu0 0.0
    %2633 = vmatprep.mubr.f32.mxu0 0.0
    %2634 = vmatmul.mubr.f32.gmra.mxu0 %v2565
    %v2635 = vpop.f32.mrf.mxu0
    %v2636 = vadd.f32 %v2556, %v2635
    %v2637 = vpop.f32.mrf.mxu0
    %2638 = vdwg.mxu0
    %2639 = vrot.lane.b32.xlu0 %v2544, 96
    %v2640 = vpop.permute.xlu0 %2639
    %v2641 = vsel %vm207, %v2544, 0
    %v2643 = vsel %vm207, %v2640, 0
    %2645 = vmatprep.subr.mxu0 0.0
    %2646 = vmatpush1.xpose.msra.mxu0 0.0
    %2647 = vmatprep.subr.mxu0 0.0
    %2648 = vmatpush1.xpose.msra.mxu0 0.0
    %2649 = vmatprep.subr.mxu0 0.0
    %2650 = vmatpush1.xpose.msra.mxu0 0.0
    %2651 = vmatprep.subr.mxu0 0.0
    %2652 = vmatpush1.xpose.msra.mxu0 0.0
    %2653 = vmatprep.subr.mxu0 0.0
    %2654 = vmatpush1.xpose.msra.mxu0 0.0
    %2655 = vmatprep.subr.mxu0 0.0
    %2656 = vmatpush1.xpose.msra.mxu0 0.0
    %2657 = vmatprep.subr.mxu0 0.0
    %2658 = vmatpush1.xpose.msra.mxu0 0.0
    %2659 = vmatprep.subr.mxu0 0.0
    %2660 = vmatpush1.xpose.msra.mxu0 0.0
    %2661 = vmatprep.subr.mxu0 0.0
    %2662 = vmatpush1.xpose.msra.mxu0 0.0
    %2663 = vmatprep.subr.mxu0 0.0
    %2664 = vmatpush1.xpose.msra.mxu0 0.0
    %2665 = vmatprep.subr.mxu0 0.0
    %2666 = vmatpush1.xpose.msra.mxu0 0.0
    %2667 = vmatprep.subr.mxu0 0.0
    %2668 = vmatpush1.xpose.msra.mxu0 0.0
    %2669 = vmatprep.subr.mxu0 0.0
    %2670 = vmatpush1.xpose.msra.mxu0 0.0
    %2671 = vmatprep.subr.mxu0 0.0
    %2672 = vmatpush1.xpose.msra.mxu0 0.0
    %2673 = vmatprep.subr.mxu0 0.0
    %2674 = vmatpush1.xpose.msra.mxu0 0.0
    %2675 = vmatprep.subr.mxu0 0.0
    %2676 = vmatpush1.xpose.msra.mxu0 %v2643
    %2677 = vmatprep.subr.mxu0 0.0
    %2678 = vmatpush2.xpose.msra.mxu0 0.0
    %2679 = vmatprep.subr.mxu0 0.0
    %2680 = vmatpush2.xpose.msra.mxu0 0.0
    %2681 = vmatprep.subr.mxu0 0.0
    %2682 = vmatpush2.xpose.msra.mxu0 0.0
    %2683 = vmatprep.subr.mxu0 0.0
    %2684 = vmatpush2.xpose.msra.mxu0 0.0
    %2685 = vmatprep.subr.mxu0 0.0
    %2686 = vmatpush2.xpose.msra.mxu0 0.0
    %2687 = vmatprep.subr.mxu0 0.0
    %2688 = vmatpush2.xpose.msra.mxu0 0.0
    %2689 = vmatprep.subr.mxu0 0.0
    %2690 = vmatpush2.xpose.msra.mxu0 0.0
    %2691 = vmatprep.subr.mxu0 0.0
    %2692 = vmatpush2.xpose.msra.mxu0 0.0
    %2693 = vmatprep.subr.mxu0 0.0
    %2694 = vmatpush2.xpose.msra.mxu0 0.0
    %2695 = vmatprep.subr.mxu0 0.0
    %2696 = vmatpush2.xpose.msra.mxu0 0.0
    %2697 = vmatprep.subr.mxu0 0.0
    %2698 = vmatpush2.xpose.msra.mxu0 0.0
    %2699 = vmatprep.subr.mxu0 0.0
    %2700 = vmatpush2.xpose.msra.mxu0 0.0
    %2701 = vmatprep.subr.mxu0 0.0
    %2702 = vmatpush2.xpose.msra.mxu0 0.0
    %2703 = vmatprep.subr.mxu0 0.0
    %2704 = vmatpush2.xpose.msra.mxu0 0.0
    %2705 = vmatprep.subr.mxu0 0.0
    %2706 = vmatpush2.xpose.msra.mxu0 0.0
    %2707 = vmatprep.subr.mxu0 0.0
    %2708 = vmatpush2.xpose.msra.mxu0 0.0
    %2709 = vmatprep.mubr.f32.mxu0 0.0
    %2710 = vmatmul.mubr.f32.gmra.mxu0 %v2641
    %v2711 = vpop.f32.mrf.mxu0
    %v2712 = vadd.f32 %v2560, %v2711
    %v2713 = vpop.f32.mrf.mxu0
    %2714 = vdwg.mxu0
    %2715 = vrot.lane.b32.xlu0 %v2550, 96
    %v2716 = vpop.permute.xlu0 %2715
    %v2717 = vsel %vm207, %v2550, 0
    %v2719 = vsel %vm207, %v2716, 0
    %2721 = vmatprep.subr.mxu0 0.0
    %2722 = vmatpush1.xpose.msra.mxu0 0.0
    %2723 = vmatprep.subr.mxu0 0.0
    %2724 = vmatpush1.xpose.msra.mxu0 0.0
    %2725 = vmatprep.subr.mxu0 0.0
    %2726 = vmatpush1.xpose.msra.mxu0 0.0
    %2727 = vmatprep.subr.mxu0 0.0
    %2728 = vmatpush1.xpose.msra.mxu0 0.0
    %2729 = vmatprep.subr.mxu0 0.0
    %2730 = vmatpush1.xpose.msra.mxu0 0.0
    %2731 = vmatprep.subr.mxu0 0.0
    %2732 = vmatpush1.xpose.msra.mxu0 0.0
    %2733 = vmatprep.subr.mxu0 0.0
    %2734 = vmatpush1.xpose.msra.mxu0 0.0
    %2735 = vmatprep.subr.mxu0 0.0
    %2736 = vmatpush1.xpose.msra.mxu0 0.0
    %2737 = vmatprep.subr.mxu0 0.0
    %2738 = vmatpush1.xpose.msra.mxu0 0.0
    %2739 = vmatprep.subr.mxu0 0.0
    %2740 = vmatpush1.xpose.msra.mxu0 0.0
    %2741 = vmatprep.subr.mxu0 0.0
    %2742 = vmatpush1.xpose.msra.mxu0 0.0
    %2743 = vmatprep.subr.mxu0 0.0
    %2744 = vmatpush1.xpose.msra.mxu0 0.0
    %2745 = vmatprep.subr.mxu0 0.0
    %2746 = vmatpush1.xpose.msra.mxu0 0.0
    %2747 = vmatprep.subr.mxu0 0.0
    %2748 = vmatpush1.xpose.msra.mxu0 0.0
    %2749 = vmatprep.subr.mxu0 0.0
    %2750 = vmatpush1.xpose.msra.mxu0 0.0
    %2751 = vmatprep.subr.mxu0 0.0
    %2752 = vmatpush1.xpose.msra.mxu0 %v2719
    %2753 = vmatprep.subr.mxu0 0.0
    %2754 = vmatpush2.xpose.msra.mxu0 0.0
    %2755 = vmatprep.subr.mxu0 0.0
    %2756 = vmatpush2.xpose.msra.mxu0 0.0
    %2757 = vmatprep.subr.mxu0 0.0
    %2758 = vmatpush2.xpose.msra.mxu0 0.0
    %2759 = vmatprep.subr.mxu0 0.0
    %2760 = vmatpush2.xpose.msra.mxu0 0.0
    %2761 = vmatprep.subr.mxu0 0.0
    %2762 = vmatpush2.xpose.msra.mxu0 0.0
    %2763 = vmatprep.subr.mxu0 0.0
    %2764 = vmatpush2.xpose.msra.mxu0 0.0
    %2765 = vmatprep.subr.mxu0 0.0
    %2766 = vmatpush2.xpose.msra.mxu0 0.0
    %2767 = vmatprep.subr.mxu0 0.0
    %2768 = vmatpush2.xpose.msra.mxu0 0.0
    %2769 = vmatprep.subr.mxu0 0.0
    %2770 = vmatpush2.xpose.msra.mxu0 0.0
    %2771 = vmatprep.subr.mxu0 0.0
    %2772 = vmatpush2.xpose.msra.mxu0 0.0
    %2773 = vmatprep.subr.mxu0 0.0
    %2774 = vmatpush2.xpose.msra.mxu0 0.0
    %2775 = vmatprep.subr.mxu0 0.0
    %2776 = vmatpush2.xpose.msra.mxu0 0.0
    %2777 = vmatprep.subr.mxu0 0.0
    %2778 = vmatpush2.xpose.msra.mxu0 0.0
    %2779 = vmatprep.subr.mxu0 0.0
    %2780 = vmatpush2.xpose.msra.mxu0 0.0
    %2781 = vmatprep.subr.mxu0 0.0
    %2782 = vmatpush2.xpose.msra.mxu0 0.0
    %2783 = vmatprep.subr.mxu0 0.0
    %2784 = vmatpush2.xpose.msra.mxu0 0.0
    %2785 = vmatprep.mubr.f32.mxu0 0.0
    %2786 = vmatmul.mubr.f32.gmra.mxu0 %v2717
    %v2787 = vpop.f32.mrf.mxu0
    %v2788 = vadd.f32 %v2556, %v2787
    %v2789 = vpop.f32.mrf.mxu0
    %2790 = vdwg.mxu0
    %2791 = vrot.lane.b32.xlu0 %v2552, 96
    %v2792 = vpop.permute.xlu0 %2791
    %v2793 = vsel %vm207, %v2552, 0
    %v2795 = vsel %vm207, %v2792, 0
    %2797 = vmatprep.subr.mxu0 0.0
    %2798 = vmatpush1.xpose.msra.mxu0 0.0
    %2799 = vmatprep.subr.mxu0 0.0
    %2800 = vmatpush1.xpose.msra.mxu0 0.0
    %2801 = vmatprep.subr.mxu0 0.0
    %2802 = vmatpush1.xpose.msra.mxu0 0.0
    %2803 = vmatprep.subr.mxu0 0.0
    %2804 = vmatpush1.xpose.msra.mxu0 0.0
    %2805 = vmatprep.subr.mxu0 0.0
    %2806 = vmatpush1.xpose.msra.mxu0 0.0
    %2807 = vmatprep.subr.mxu0 0.0
    %2808 = vmatpush1.xpose.msra.mxu0 0.0
    %2809 = vmatprep.subr.mxu0 0.0
    %2810 = vmatpush1.xpose.msra.mxu0 0.0
    %2811 = vmatprep.subr.mxu0 0.0
    %2812 = vmatpush1.xpose.msra.mxu0 0.0
    %2813 = vmatprep.subr.mxu0 0.0
    %2814 = vmatpush1.xpose.msra.mxu0 0.0
    %2815 = vmatprep.subr.mxu0 0.0
    %2816 = vmatpush1.xpose.msra.mxu0 0.0
    %2817 = vmatprep.subr.mxu0 0.0
    %2818 = vmatpush1.xpose.msra.mxu0 0.0
    %2819 = vmatprep.subr.mxu0 0.0
    %2820 = vmatpush1.xpose.msra.mxu0 0.0
    %2821 = vmatprep.subr.mxu0 0.0
    %2822 = vmatpush1.xpose.msra.mxu0 0.0
    %2823 = vmatprep.subr.mxu0 0.0
    %2824 = vmatpush1.xpose.msra.mxu0 0.0
    %2825 = vmatprep.subr.mxu0 0.0
    %2826 = vmatpush1.xpose.msra.mxu0 0.0
    %2827 = vmatprep.subr.mxu0 0.0
    %2828 = vmatpush1.xpose.msra.mxu0 %v2795
    %2829 = vmatprep.subr.mxu0 0.0
    %2830 = vmatpush2.xpose.msra.mxu0 0.0
    %2831 = vmatprep.subr.mxu0 0.0
    %2832 = vmatpush2.xpose.msra.mxu0 0.0
    %2833 = vmatprep.subr.mxu0 0.0
    %2834 = vmatpush2.xpose.msra.mxu0 0.0
    %2835 = vmatprep.subr.mxu0 0.0
    %2836 = vmatpush2.xpose.msra.mxu0 0.0
    %2837 = vmatprep.subr.mxu0 0.0
    %2838 = vmatpush2.xpose.msra.mxu0 0.0
    %2839 = vmatprep.subr.mxu0 0.0
    %2840 = vmatpush2.xpose.msra.mxu0 0.0
    %2841 = vmatprep.subr.mxu0 0.0
    %2842 = vmatpush2.xpose.msra.mxu0 0.0
    %2843 = vmatprep.subr.mxu0 0.0
    %2844 = vmatpush2.xpose.msra.mxu0 0.0
    %2845 = vmatprep.subr.mxu0 0.0
    %2846 = vmatpush2.xpose.msra.mxu0 0.0
    %2847 = vmatprep.subr.mxu0 0.0
    %2848 = vmatpush2.xpose.msra.mxu0 0.0
    %2849 = vmatprep.subr.mxu0 0.0
    %2850 = vmatpush2.xpose.msra.mxu0 0.0
    %2851 = vmatprep.subr.mxu0 0.0
    %2852 = vmatpush2.xpose.msra.mxu0 0.0
    %2853 = vmatprep.subr.mxu0 0.0
    %2854 = vmatpush2.xpose.msra.mxu0 0.0
    %2855 = vmatprep.subr.mxu0 0.0
    %2856 = vmatpush2.xpose.msra.mxu0 0.0
    %2857 = vmatprep.subr.mxu0 0.0
    %2858 = vmatpush2.xpose.msra.mxu0 0.0
    %2859 = vmatprep.subr.mxu0 0.0
    %2860 = vmatpush2.xpose.msra.mxu0 0.0
    %2861 = vmatprep.mubr.f32.mxu0 0.0
    %2862 = vmatmul.mubr.f32.gmra.mxu0 %v2793
    %v2863 = vpop.f32.mrf.mxu0
    %v2864 = vadd.f32 %v2560, %v2863
    %v2865 = vpop.f32.mrf.mxu0
    %2866 = vdwg.mxu0
    %v2867 = vsel %vm510, %v2636, -inf
    %2868 = vmax.xlane.f32.xlu0 %v2867
    %v2869 = vpop.xlane.xlu0 %2868
    %v2870 = vsel %vm510, %v2712, -inf
    %2871 = vmax.xlane.f32.xlu0 %v2870
    %v2872 = vpop.xlane.xlu0 %2871
    %v2873 = vsel %vm510, %v2788, -inf
    %2874 = vmax.xlane.f32.xlu0 %v2873
    %v2875 = vpop.xlane.xlu0 %2874
    %v2876 = vsel %vm510, %v2864, -inf
    %2877 = vmax.xlane.f32.xlu0 %v2876
    %v2878 = vpop.xlane.xlu0 %2877
    %v2879 = vsub.f32 %v2636, %v2869
    %v2880 = vsub.f32 %v2712, %v2872
    %v2881 = vsub.f32 %v2788, %v2875
    %v2882 = vsub.f32 %v2864, %v2878
    %v2883 = vmul.f32 %v2879, 1.442695
    %v2884 = vpow.pop %v2883
    %v2885 = vmul.f32 %v2880, 1.442695
    %v2886 = vpow.pop %v2885
    %v2887 = vmul.f32 %v2881, 1.442695
    %v2888 = vpow.pop %v2887
    %v2889 = vmul.f32 %v2882, 1.442695
    %v2890 = vpow.pop %v2889
    %v2891 = vsel %vm510, %v2884, 0.0
    %2892 = vadd.xlane.f32.xlu0 %v2891
    %v2893 = vpop.xlane.xlu0 %2892
    %v2894 = vsel %vm510, %v2886, 0.0
    %2895 = vadd.xlane.f32.xlu0 %v2894
    %v2896 = vpop.xlane.xlu0 %2895
    %v2897 = vsel %vm510, %v2888, 0.0
    %2898 = vadd.xlane.f32.xlu0 %v2897
    %v2899 = vpop.xlane.xlu0 %2898
    %v2900 = vsel %vm510, %v2890, 0.0
    %2901 = vadd.xlane.f32.xlu0 %v2900
    %v2902 = vpop.xlane.xlu0 %2901
    %v2903 = vrcp.pop %v2893
    %v2904 = vmul.f32 %v2884, %v2903
    %v2905 = vrcp.pop %v2896
    %v2906 = vmul.f32 %v2886, %v2905
    %v2907 = vrcp.pop %v2899
    %v2908 = vmul.f32 %v2888, %v2907
    %v2909 = vrcp.pop %v2902
    %v2910 = vmul.f32 %v2890, %v2909
    %2911 = vrot.lane.b32.xlu0 %v2539, 64
    %v2912 = vpop.permute.xlu0 %2911
    %v2915 = vsel %vm510, %v2904, 0
    %2917 = vmatprep.subr.mxu0 0.0
    %2918 = vmatpush1.msra.mxu0 0.0
    %2919 = vmatprep.subr.mxu0 0.0
    %2920 = vmatpush1.msra.mxu0 0.0
    %2921 = vmatprep.subr.mxu0 0.0
    %2922 = vmatpush1.msra.mxu0 0.0
    %2923 = vmatprep.subr.mxu0 0.0
    %2924 = vmatpush1.msra.mxu0 0.0
    %2925 = vmatprep.subr.mxu0 0.0
    %2926 = vmatpush1.msra.mxu0 0.0
    %2927 = vmatprep.subr.mxu0 0.0
    %2928 = vmatpush1.msra.mxu0 0.0
    %2929 = vmatprep.subr.mxu0 0.0
    %2930 = vmatpush1.msra.mxu0 0.0
    %2931 = vmatprep.subr.mxu0 0.0
    %2932 = vmatpush1.msra.mxu0 0.0
    %2933 = vmatprep.subr.mxu0 0.0
    %2934 = vmatpush1.msra.mxu0 0.0
    %2935 = vmatprep.subr.mxu0 0.0
    %2936 = vmatpush1.msra.mxu0 0.0
    %2937 = vmatprep.subr.mxu0 0.0
    %2938 = vmatpush1.msra.mxu0 0.0
    %2939 = vmatprep.subr.mxu0 0.0
    %2940 = vmatpush1.msra.mxu0 0.0
    %2941 = vmatprep.subr.mxu0 0.0
    %2942 = vmatpush1.msra.mxu0 0.0
    %2943 = vmatprep.subr.mxu0 0.0
    %2944 = vmatpush1.msra.mxu0 0.0
    %2945 = vmatprep.subr.mxu0 0.0
    %2946 = vmatpush1.msra.mxu0 0.0
    %2947 = vmatprep.subr.mxu0 0.0
    %2948 = vmatpush1.msra.mxu0 %v2912
    %2949 = vmatprep.subr.mxu0 0.0
    %2950 = vmatpush2.msra.mxu0 0.0
    %2951 = vmatprep.subr.mxu0 0.0
    %2952 = vmatpush2.msra.mxu0 0.0
    %2953 = vmatprep.subr.mxu0 0.0
    %2954 = vmatpush2.msra.mxu0 0.0
    %2955 = vmatprep.subr.mxu0 0.0
    %2956 = vmatpush2.msra.mxu0 0.0
    %2957 = vmatprep.subr.mxu0 0.0
    %2958 = vmatpush2.msra.mxu0 0.0
    %2959 = vmatprep.subr.mxu0 0.0
    %2960 = vmatpush2.msra.mxu0 0.0
    %2961 = vmatprep.subr.mxu0 0.0
    %2962 = vmatpush2.msra.mxu0 0.0
    %2963 = vmatprep.subr.mxu0 0.0
    %2964 = vmatpush2.msra.mxu0 0.0
    %2965 = vmatprep.subr.mxu0 0.0
    %2966 = vmatpush2.msra.mxu0 0.0
    %2967 = vmatprep.subr.mxu0 0.0
    %2968 = vmatpush2.msra.mxu0 0.0
    %2969 = vmatprep.subr.mxu0 0.0
    %2970 = vmatpush2.msra.mxu0 0.0
    %2971 = vmatprep.subr.mxu0 0.0
    %2972 = vmatpush2.msra.mxu0 0.0
    %2973 = vmatprep.subr.mxu0 0.0
    %2974 = vmatpush2.msra.mxu0 0.0
    %2975 = vmatprep.subr.mxu0 0.0
    %2976 = vmatpush2.msra.mxu0 0.0
    %2977 = vmatprep.subr.mxu0 0.0
    %2978 = vmatpush2.msra.mxu0 0.0
    %2979 = vmatprep.subr.mxu0 0.0
    %2980 = vmatpush2.msra.mxu0 0.0
    %2981 = vmatprep.mubr.f32.mxu0 0.0
    %2982 = vmatmul.mubr.f32.gmra.mxu0 %v2915
    %v2983 = vpop.f32.mrf.mxu0
    %v2984 = vadd.f32 0.0, %v2983
    %v2985 = vpop.f32.mrf.mxu0
    %2986 = vdwg.mxu0
    %2987 = vrot.lane.b32.xlu0 %v2544, 64
    %v2988 = vpop.permute.xlu0 %2987
    %v2991 = vsel %vm510, %v2906, 0
    %2993 = vmatprep.subr.mxu0 0.0
    %2994 = vmatpush1.msra.mxu0 0.0
    %2995 = vmatprep.subr.mxu0 0.0
    %2996 = vmatpush1.msra.mxu0 0.0
    %2997 = vmatprep.subr.mxu0 0.0
    %2998 = vmatpush1.msra.mxu0 0.0
    %2999 = vmatprep.subr.mxu0 0.0
    %3000 = vmatpush1.msra.mxu0 0.0
    %3001 = vmatprep.subr.mxu0 0.0
    %3002 = vmatpush1.msra.mxu0 0.0
    %3003 = vmatprep.subr.mxu0 0.0
    %3004 = vmatpush1.msra.mxu0 0.0
    %3005 = vmatprep.subr.mxu0 0.0
    %3006 = vmatpush1.msra.mxu0 0.0
    %3007 = vmatprep.subr.mxu0 0.0
    %3008 = vmatpush1.msra.mxu0 0.0
    %3009 = vmatprep.subr.mxu0 0.0
    %3010 = vmatpush1.msra.mxu0 0.0
    %3011 = vmatprep.subr.mxu0 0.0
    %3012 = vmatpush1.msra.mxu0 0.0
    %3013 = vmatprep.subr.mxu0 0.0
    %3014 = vmatpush1.msra.mxu0 0.0
    %3015 = vmatprep.subr.mxu0 0.0
    %3016 = vmatpush1.msra.mxu0 0.0
    %3017 = vmatprep.subr.mxu0 0.0
    %3018 = vmatpush1.msra.mxu0 0.0
    %3019 = vmatprep.subr.mxu0 0.0
    %3020 = vmatpush1.msra.mxu0 0.0
    %3021 = vmatprep.subr.mxu0 0.0
    %3022 = vmatpush1.msra.mxu0 0.0
    %3023 = vmatprep.subr.mxu0 0.0
    %3024 = vmatpush1.msra.mxu0 %v2988
    %3025 = vmatprep.subr.mxu0 0.0
    %3026 = vmatpush2.msra.mxu0 0.0
    %3027 = vmatprep.subr.mxu0 0.0
    %3028 = vmatpush2.msra.mxu0 0.0
    %3029 = vmatprep.subr.mxu0 0.0
    %3030 = vmatpush2.msra.mxu0 0.0
    %3031 = vmatprep.subr.mxu0 0.0
    %3032 = vmatpush2.msra.mxu0 0.0
    %3033 = vmatprep.subr.mxu0 0.0
    %3034 = vmatpush2.msra.mxu0 0.0
    %3035 = vmatprep.subr.mxu0 0.0
    %3036 = vmatpush2.msra.mxu0 0.0
    %3037 = vmatprep.subr.mxu0 0.0
    %3038 = vmatpush2.msra.mxu0 0.0
    %3039 = vmatprep.subr.mxu0 0.0
    %3040 = vmatpush2.msra.mxu0 0.0
    %3041 = vmatprep.subr.mxu0 0.0
    %3042 = vmatpush2.msra.mxu0 0.0
    %3043 = vmatprep.subr.mxu0 0.0
    %3044 = vmatpush2.msra.mxu0 0.0
    %3045 = vmatprep.subr.mxu0 0.0
    %3046 = vmatpush2.msra.mxu0 0.0
    %3047 = vmatprep.subr.mxu0 0.0
    %3048 = vmatpush2.msra.mxu0 0.0
    %3049 = vmatprep.subr.mxu0 0.0
    %3050 = vmatpush2.msra.mxu0 0.0
    %3051 = vmatprep.subr.mxu0 0.0
    %3052 = vmatpush2.msra.mxu0 0.0
    %3053 = vmatprep.subr.mxu0 0.0
    %3054 = vmatpush2.msra.mxu0 0.0
    %3055 = vmatprep.subr.mxu0 0.0
    %3056 = vmatpush2.msra.mxu0 0.0
    %3057 = vmatprep.mubr.f32.mxu0 0.0
    %3058 = vmatmul.mubr.f32.gmra.mxu0 %v2991
    %v3059 = vpop.f32.mrf.mxu0
    %v3060 = vadd.f32 0.0, %v3059
    %v3061 = vpop.f32.mrf.mxu0
    %3062 = vdwg.mxu0
    %3063 = vrot.lane.b32.xlu0 %v2550, 64
    %v3064 = vpop.permute.xlu0 %3063
    %v3067 = vsel %vm510, %v2908, 0
    %3069 = vmatprep.subr.mxu0 0.0
    %3070 = vmatpush1.msra.mxu0 0.0
    %3071 = vmatprep.subr.mxu0 0.0
    %3072 = vmatpush1.msra.mxu0 0.0
    %3073 = vmatprep.subr.mxu0 0.0
    %3074 = vmatpush1.msra.mxu0 0.0
    %3075 = vmatprep.subr.mxu0 0.0
    %3076 = vmatpush1.msra.mxu0 0.0
    %3077 = vmatprep.subr.mxu0 0.0
    %3078 = vmatpush1.msra.mxu0 0.0
    %3079 = vmatprep.subr.mxu0 0.0
    %3080 = vmatpush1.msra.mxu0 0.0
    %3081 = vmatprep.subr.mxu0 0.0
    %3082 = vmatpush1.msra.mxu0 0.0
    %3083 = vmatprep.subr.mxu0 0.0
    %3084 = vmatpush1.msra.mxu0 0.0
    %3085 = vmatprep.subr.mxu0 0.0
    %3086 = vmatpush1.msra.mxu0 0.0
    %3087 = vmatprep.subr.mxu0 0.0
    %3088 = vmatpush1.msra.mxu0 0.0
    %3089 = vmatprep.subr.mxu0 0.0
    %3090 = vmatpush1.msra.mxu0 0.0
    %3091 = vmatprep.subr.mxu0 0.0
    %3092 = vmatpush1.msra.mxu0 0.0
    %3093 = vmatprep.subr.mxu0 0.0
    %3094 = vmatpush1.msra.mxu0 0.0
    %3095 = vmatprep.subr.mxu0 0.0
    %3096 = vmatpush1.msra.mxu0 0.0
    %3097 = vmatprep.subr.mxu0 0.0
    %3098 = vmatpush1.msra.mxu0 0.0
    %3099 = vmatprep.subr.mxu0 0.0
    %3100 = vmatpush1.msra.mxu0 %v3064
    %3101 = vmatprep.subr.mxu0 0.0
    %3102 = vmatpush2.msra.mxu0 0.0
    %3103 = vmatprep.subr.mxu0 0.0
    %3104 = vmatpush2.msra.mxu0 0.0
    %3105 = vmatprep.subr.mxu0 0.0
    %3106 = vmatpush2.msra.mxu0 0.0
    %3107 = vmatprep.subr.mxu0 0.0
    %3108 = vmatpush2.msra.mxu0 0.0
    %3109 = vmatprep.subr.mxu0 0.0
    %3110 = vmatpush2.msra.mxu0 0.0
    %3111 = vmatprep.subr.mxu0 0.0
    %3112 = vmatpush2.msra.mxu0 0.0
    %3113 = vmatprep.subr.mxu0 0.0
    %3114 = vmatpush2.msra.mxu0 0.0
    %3115 = vmatprep.subr.mxu0 0.0
    %3116 = vmatpush2.msra.mxu0 0.0
    %3117 = vmatprep.subr.mxu0 0.0
    %3118 = vmatpush2.msra.mxu0 0.0
    %3119 = vmatprep.subr.mxu0 0.0
    %3120 = vmatpush2.msra.mxu0 0.0
    %3121 = vmatprep.subr.mxu0 0.0
    %3122 = vmatpush2.msra.mxu0 0.0
    %3123 = vmatprep.subr.mxu0 0.0
    %3124 = vmatpush2.msra.mxu0 0.0
    %3125 = vmatprep.subr.mxu0 0.0
    %3126 = vmatpush2.msra.mxu0 0.0
    %3127 = vmatprep.subr.mxu0 0.0
    %3128 = vmatpush2.msra.mxu0 0.0
    %3129 = vmatprep.subr.mxu0 0.0
    %3130 = vmatpush2.msra.mxu0 0.0
    %3131 = vmatprep.subr.mxu0 0.0
    %3132 = vmatpush2.msra.mxu0 0.0
    %3133 = vmatprep.mubr.f32.mxu0 0.0
    %3134 = vmatmul.mubr.f32.gmra.mxu0 %v3067
    %v3135 = vpop.f32.mrf.mxu0
    %v3136 = vadd.f32 0.0, %v3135
    %v3137 = vpop.f32.mrf.mxu0
    %3138 = vdwg.mxu0
    %3139 = vrot.lane.b32.xlu0 %v2552, 64
    %v3140 = vpop.permute.xlu0 %3139
    %v3143 = vsel %vm510, %v2910, 0
    %3145 = vmatprep.subr.mxu0 0.0
    %3146 = vmatpush1.msra.mxu0 0.0
    %3147 = vmatprep.subr.mxu0 0.0
    %3148 = vmatpush1.msra.mxu0 0.0
    %3149 = vmatprep.subr.mxu0 0.0
    %3150 = vmatpush1.msra.mxu0 0.0
    %3151 = vmatprep.subr.mxu0 0.0
    %3152 = vmatpush1.msra.mxu0 0.0
    %3153 = vmatprep.subr.mxu0 0.0
    %3154 = vmatpush1.msra.mxu0 0.0
    %3155 = vmatprep.subr.mxu0 0.0
    %3156 = vmatpush1.msra.mxu0 0.0
    %3157 = vmatprep.subr.mxu0 0.0
    %3158 = vmatpush1.msra.mxu0 0.0
    %3159 = vmatprep.subr.mxu0 0.0
    %3160 = vmatpush1.msra.mxu0 0.0
    %3161 = vmatprep.subr.mxu0 0.0
    %3162 = vmatpush1.msra.mxu0 0.0
    %3163 = vmatprep.subr.mxu0 0.0
    %3164 = vmatpush1.msra.mxu0 0.0
    %3165 = vmatprep.subr.mxu0 0.0
    %3166 = vmatpush1.msra.mxu0 0.0
    %3167 = vmatprep.subr.mxu0 0.0
    %3168 = vmatpush1.msra.mxu0 0.0
    %3169 = vmatprep.subr.mxu0 0.0
    %3170 = vmatpush1.msra.mxu0 0.0
    %3171 = vmatprep.subr.mxu0 0.0
    %3172 = vmatpush1.msra.mxu0 0.0
    %3173 = vmatprep.subr.mxu0 0.0
    %3174 = vmatpush1.msra.mxu0 0.0
    %3175 = vmatprep.subr.mxu0 0.0
    %3176 = vmatpush1.msra.mxu0 %v3140
    %3177 = vmatprep.subr.mxu0 0.0
    %3178 = vmatpush2.msra.mxu0 0.0
    %3179 = vmatprep.subr.mxu0 0.0
    %3180 = vmatpush2.msra.mxu0 0.0
    %3181 = vmatprep.subr.mxu0 0.0
    %3182 = vmatpush2.msra.mxu0 0.0
    %3183 = vmatprep.subr.mxu0 0.0
    %3184 = vmatpush2.msra.mxu0 0.0
    %3185 = vmatprep.subr.mxu0 0.0
    %3186 = vmatpush2.msra.mxu0 0.0
    %3187 = vmatprep.subr.mxu0 0.0
    %3188 = vmatpush2.msra.mxu0 0.0
    %3189 = vmatprep.subr.mxu0 0.0
    %3190 = vmatpush2.msra.mxu0 0.0
    %3191 = vmatprep.subr.mxu0 0.0
    %3192 = vmatpush2.msra.mxu0 0.0
    %3193 = vmatprep.subr.mxu0 0.0
    %3194 = vmatpush2.msra.mxu0 0.0
    %3195 = vmatprep.subr.mxu0 0.0
    %3196 = vmatpush2.msra.mxu0 0.0
    %3197 = vmatprep.subr.mxu0 0.0
    %3198 = vmatpush2.msra.mxu0 0.0
    %3199 = vmatprep.subr.mxu0 0.0
    %3200 = vmatpush2.msra.mxu0 0.0
    %3201 = vmatprep.subr.mxu0 0.0
    %3202 = vmatpush2.msra.mxu0 0.0
    %3203 = vmatprep.subr.mxu0 0.0
    %3204 = vmatpush2.msra.mxu0 0.0
    %3205 = vmatprep.subr.mxu0 0.0
    %3206 = vmatpush2.msra.mxu0 0.0
    %3207 = vmatprep.subr.mxu0 0.0
    %3208 = vmatpush2.msra.mxu0 0.0
    %3209 = vmatprep.mubr.f32.mxu0 0.0
    %3210 = vmatmul.mubr.f32.gmra.mxu0 %v3143
    %v3211 = vpop.f32.mrf.mxu0
    %v3212 = vadd.f32 0.0, %v3211
    %v3213 = vpop.f32.mrf.mxu0
    %3214 = vdwg.mxu0
    %3217 = vrot.lane.b32.xlu0 %v3136, 16
    %v3218 = vpop.permute.xlu0 %3217
    %3219 = vrot.lane.b32.xlu0 %v3212, 16
    %v3220 = vpop.permute.xlu0 %3219
    %v3223 = vsel %vm207, %v2984, %v3218
    %v3224 = vsel %vm207, %v3060, %v3220
    %v3225 = vld [vmem:[%s2400 + $0xa3] sm:$0x1]
    %v3226 = vlaneseq
    %v3227 = vshrl.u32 %v3226, 7
    %v3228 = vsub.s32 0, %v3227
    %v3229 = vrot.slane %v3225, %v3228
    %v3231 = vsel %vm43, %v3223, 0
    %v3234 = vsel %vm43, %v3224, 0
    %3236 = vmatprep.subr.mxu0 0.0
    %3237 = vmatpush1.msra.mxu0 0.0
    %3238 = vmatprep.subr.mxu0 0.0
    %3239 = vmatpush1.msra.mxu0 0.0
    %3240 = vmatprep.subr.mxu0 0.0
    %3241 = vmatpush1.msra.mxu0 0.0
    %3242 = vmatprep.subr.mxu0 0.0
    %3243 = vmatpush1.msra.mxu0 0.0
    %3244 = vmatprep.subr.mxu0 0.0
    %3245 = vmatpush1.msra.mxu0 0.0
    %3246 = vmatprep.subr.mxu0 0.0
    %3247 = vmatpush1.msra.mxu0 0.0
    %3248 = vmatprep.subr.mxu0 0.0
    %3249 = vmatpush1.msra.mxu0 0.0
    %3250 = vmatprep.subr.mxu0 0.0
    %3251 = vmatpush1.msra.mxu0 0.0
    %3252 = vmatprep.subr.mxu0 0.0
    %3253 = vmatpush1.msra.mxu0 0.0
    %3254 = vmatprep.subr.mxu0 0.0
    %3255 = vmatpush1.msra.mxu0 0.0
    %3256 = vmatprep.subr.mxu0 0.0
    %3257 = vmatpush1.msra.mxu0 0.0
    %3258 = vmatprep.subr.mxu0 0.0
    %3259 = vmatpush1.msra.mxu0 0.0
    %3260 = vmatprep.subr.mxu0 0.0
    %3261 = vmatpush1.msra.mxu0 %v2448
    %3262 = vmatprep.subr.mxu0 0.0
    %3263 = vmatpush1.msra.mxu0 %v2447
    %3264 = vmatprep.subr.mxu0 0.0
    %3265 = vmatpush1.msra.mxu0 %v2446
    %3266 = vmatprep.subr.mxu0 0.0
    %3267 = vmatpush1.msra.mxu0 %v2445
    %3268 = vmatprep.subr.mxu0 0.0
    %3269 = vmatpush2.msra.mxu0 0.0
    %3270 = vmatprep.subr.mxu0 0.0
    %3271 = vmatpush2.msra.mxu0 0.0
    %3272 = vmatprep.subr.mxu0 0.0
    %3273 = vmatpush2.msra.mxu0 0.0
    %3274 = vmatprep.subr.mxu0 0.0
    %3275 = vmatpush2.msra.mxu0 0.0
    %3276 = vmatprep.subr.mxu0 0.0
    %3277 = vmatpush2.msra.mxu0 0.0
    %3278 = vmatprep.subr.mxu0 0.0
    %3279 = vmatpush2.msra.mxu0 0.0
    %3280 = vmatprep.subr.mxu0 0.0
    %3281 = vmatpush2.msra.mxu0 0.0
    %3282 = vmatprep.subr.mxu0 0.0
    %3283 = vmatpush2.msra.mxu0 0.0
    %3284 = vmatprep.subr.mxu0 0.0
    %3285 = vmatpush2.msra.mxu0 0.0
    %3286 = vmatprep.subr.mxu0 0.0
    %3287 = vmatpush2.msra.mxu0 0.0
    %3288 = vmatprep.subr.mxu0 0.0
    %3289 = vmatpush2.msra.mxu0 0.0
    %3290 = vmatprep.subr.mxu0 0.0
    %3291 = vmatpush2.msra.mxu0 0.0
    %3292 = vmatprep.subr.mxu0 0.0
    %3293 = vmatpush2.msra.mxu0 0.0
    %3294 = vmatprep.subr.mxu0 0.0
    %3295 = vmatpush2.msra.mxu0 0.0
    %3296 = vmatprep.subr.mxu0 0.0
    %3297 = vmatpush2.msra.mxu0 0.0
    %3298 = vmatprep.subr.mxu0 0.0
    %3299 = vmatpush2.msra.mxu0 0.0
    %3300 = vmatprep.mubr.f32.mxu0 0.0
    %3301 = vmatmul.mubr.f32.gmra.mxu0 %v3231
    %v3302 = vpop.f32.mrf.mxu0
    %v3303 = vadd.f32 %v3229, %v3302
    %v3304 = vpop.f32.mrf.mxu0
    %3305 = vmatprep.mubr.f32.mxu0 0.0
    %3306 = vmatmul.mubr.f32.gmra.mxu0 %v3234
    %v3307 = vpop.f32.mrf.mxu0
    %v3308 = vadd.f32 %v3229, %v3307
    %v3309 = vpop.f32.mrf.mxu0
    %3310 = vdwg.mxu0
    %v3311 = vadd.f32 %v2439, %v3303
    %v3312 = vadd.f32 %v2440, %v3308
    %v3313 = vld [vmem:[%s2400 + $0xa4] sm:$0x1]
    %v3314 = vld [vmem:[%s2400 + $0xa5] sm:$0x1]
    %v3315 = vsel %vm43, %v3311, 0.0
    %3316 = vadd.xlane.f32.xlu0 %v3315
    %v3317 = vpop.xlane.xlu0 %3316
    %v3318 = vsel %vm43, %v3312, 0.0
    %3319 = vadd.xlane.f32.xlu0 %v3318
    %v3320 = vpop.xlane.xlu0 %3319
    %v3321 = vmul.f32 %v3317, %v50
    %v3322 = vmul.f32 %v3320, %v50
    %v3323 = vsub.f32 %v3311, %v3321
    %v3324 = vsub.f32 %v3312, %v3322
    %v3325 = vmul.f32 %v3323, %v3323
    %v3326 = vmul.f32 %v3324, %v3324
    %v3327 = vsel %vm43, %v3325, 0.0
    %3328 = vadd.xlane.f32.xlu0 %v3327
    %v3329 = vpop.xlane.xlu0 %3328
    %v3330 = vsel %vm43, %v3326, 0.0
    %3331 = vadd.xlane.f32.xlu0 %v3330
    %v3332 = vpop.xlane.xlu0 %3331
    %v3333 = vmul.f32 %v3329, %v50
    %v3334 = vmul.f32 %v3332, %v50
    %v3335 = vadd.f32 %v3333, 1e-12
    %v3336 = vadd.f32 %v3334, 1e-12
    %v3337 = vrsqrt.pop %v3335
    %v3338 = vrsqrt.pop %v3336
    %v3339 = vmul.f32 %v3323, %v3337
    %v3340 = vmul.f32 %v3324, %v3338
    %v3341 = vlaneseq
    %v3342 = vshrl.u32 %v3341, 7
    %v3343 = vsub.s32 0, %v3342
    %v3344 = vrot.slane %v3313, %v3343
    %v3345 = vmul.f32 %v3339, %v3344
    %v3346 = vmul.f32 %v3340, %v3344
    %v3347 = vlaneseq
    %v3348 = vshrl.u32 %v3347, 7
    %v3349 = vsub.s32 0, %v3348
    %v3350 = vrot.slane %v3314, %v3349
    %v3351 = vadd.f32 %v3345, %v3350
    %v3352 = vadd.f32 %v3346, %v3350
    %v3353 = vld [vmem:[%s2400 + $0xa6] sm:$0x1]
    %v3354 = vlaneseq
    %v3355 = vshrl.u32 %v3354, 7
    %v3356 = vsub.s32 0, %v3355
    %v3357 = vrot.slane %v3353, %v3356
    %v3359 = vsel %vm43, %v3351, 0
    %v3362 = vsel %vm43, %v3352, 0
    %3364 = vmatprep.subr.mxu0 0.0
    %3365 = vmatpush1.msra.mxu0 0.0
    %3366 = vmatprep.subr.mxu0 0.0
    %3367 = vmatpush1.msra.mxu0 0.0
    %3368 = vmatprep.subr.mxu0 0.0
    %3369 = vmatpush1.msra.mxu0 0.0
    %3370 = vmatprep.subr.mxu0 0.0
    %3371 = vmatpush1.msra.mxu0 0.0
    %3372 = vmatprep.subr.mxu0 0.0
    %3373 = vmatpush1.msra.mxu0 0.0
    %3374 = vmatprep.subr.mxu0 0.0
    %3375 = vmatpush1.msra.mxu0 0.0
    %3376 = vmatprep.subr.mxu0 0.0
    %3377 = vmatpush1.msra.mxu0 0.0
    %3378 = vmatprep.subr.mxu0 0.0
    %3379 = vmatpush1.msra.mxu0 0.0
    %3380 = vmatprep.subr.mxu0 0.0
    %3381 = vmatpush1.msra.mxu0 0.0
    %3382 = vmatprep.subr.mxu0 0.0
    %3383 = vmatpush1.msra.mxu0 0.0
    %3384 = vmatprep.subr.mxu0 0.0
    %3385 = vmatpush1.msra.mxu0 0.0
    %3386 = vmatprep.subr.mxu0 0.0
    %3387 = vmatpush1.msra.mxu0 0.0
    %3388 = vmatprep.subr.mxu0 0.0
    %3389 = vmatpush1.msra.mxu0 %v2452
    %3390 = vmatprep.subr.mxu0 0.0
    %3391 = vmatpush1.msra.mxu0 %v2451
    %3392 = vmatprep.subr.mxu0 0.0
    %3393 = vmatpush1.msra.mxu0 %v2450
    %3394 = vmatprep.subr.mxu0 0.0
    %3395 = vmatpush1.msra.mxu0 %v2449
    %3396 = vmatprep.subr.mxu0 0.0
    %3397 = vmatpush2.msra.mxu0 0.0
    %3398 = vmatprep.subr.mxu0 0.0
    %3399 = vmatpush2.msra.mxu0 0.0
    %3400 = vmatprep.subr.mxu0 0.0
    %3401 = vmatpush2.msra.mxu0 0.0
    %3402 = vmatprep.subr.mxu0 0.0
    %3403 = vmatpush2.msra.mxu0 0.0
    %3404 = vmatprep.subr.mxu0 0.0
    %3405 = vmatpush2.msra.mxu0 0.0
    %3406 = vmatprep.subr.mxu0 0.0
    %3407 = vmatpush2.msra.mxu0 0.0
    %3408 = vmatprep.subr.mxu0 0.0
    %3409 = vmatpush2.msra.mxu0 0.0
    %3410 = vmatprep.subr.mxu0 0.0
    %3411 = vmatpush2.msra.mxu0 0.0
    %3412 = vmatprep.subr.mxu0 0.0
    %3413 = vmatpush2.msra.mxu0 0.0
    %3414 = vmatprep.subr.mxu0 0.0
    %3415 = vmatpush2.msra.mxu0 0.0
    %3416 = vmatprep.subr.mxu0 0.0
    %3417 = vmatpush2.msra.mxu0 0.0
    %3418 = vmatprep.subr.mxu0 0.0
    %3419 = vmatpush2.msra.mxu0 0.0
    %3420 = vmatprep.subr.mxu0 0.0
    %3421 = vmatpush2.msra.mxu0 0.0
    %3422 = vmatprep.subr.mxu0 0.0
    %3423 = vmatpush2.msra.mxu0 0.0
    %3424 = vmatprep.subr.mxu0 0.0
    %3425 = vmatpush2.msra.mxu0 0.0
    %3426 = vmatprep.subr.mxu0 0.0
    %3427 = vmatpush2.msra.mxu0 0.0
    %3428 = vmatprep.mubr.f32.mxu0 0.0
    %3429 = vmatmul.mubr.f32.gmra.mxu0 %v3359
    %v3430 = vpop.f32.mrf.mxu0
    %v3431 = vadd.f32 %v3357, %v3430
    %v3432 = vpop.f32.mrf.mxu0
    %3433 = vmatprep.mubr.f32.mxu0 0.0
    %3434 = vmatmul.mubr.f32.gmra.mxu0 %v3362
    %v3435 = vpop.f32.mrf.mxu0
    %v3436 = vadd.f32 %v3357, %v3435
    %v3437 = vpop.f32.mrf.mxu0
    %3438 = vdwg.mxu0
    %v3439 = vmul.f32 %v3431, %v3431
    %v3440 = vmul.f32 %v3436, %v3436
    %v3441 = vmul.f32 %v3431, %v3439
    %v3442 = vmul.f32 %v3436, %v3440
    %v3443 = vmul.f32 %v3441, 0.044715
    %v3444 = vmul.f32 %v3442, 0.044715
    %v3445 = vadd.f32 %v3431, %v3443
    %v3446 = vadd.f32 %v3436, %v3444
    %v3447 = vmul.f32 %v3445, 0.7978846
    %v3448 = vmul.f32 %v3446, 0.7978846
    %v3449 = vtanh.pop %v3447
    %v3450 = vtanh.pop %v3448
    %v3451 = vadd.f32 %v3449, 1.0
    %v3452 = vadd.f32 %v3450, 1.0
    %v3453 = vmul.f32 %v3451, 0.5
    %v3454 = vmul.f32 %v3452, 0.5
    %v3455 = vmul.f32 %v3431, %v3453
    %v3456 = vmul.f32 %v3436, %v3454
    %v3457 = vld [vmem:[%s2400 + $0xa7] sm:$0x1]
    %v3458 = vlaneseq
    %v3459 = vshrl.u32 %v3458, 7
    %v3460 = vsub.s32 0, %v3459
    %v3461 = vrot.slane %v3457, %v3460
    %v3463 = vsel %vm1106, %v3455, 0
    %v3466 = vsel %vm1106, %v3456, 0
    %3468 = vmatprep.subr.mxu0 0.0
    %3469 = vmatpush1.msra.mxu0 0.0
    %3470 = vmatprep.subr.mxu0 0.0
    %3471 = vmatpush1.msra.mxu0 0.0
    %3472 = vmatprep.subr.mxu0 0.0
    %3473 = vmatpush1.msra.mxu0 0.0
    %3474 = vmatprep.subr.mxu0 0.0
    %3475 = vmatpush1.msra.mxu0 0.0
    %3476 = vmatprep.subr.mxu0 0.0
    %3477 = vmatpush1.msra.mxu0 0.0
    %3478 = vmatprep.subr.mxu0 0.0
    %3479 = vmatpush1.msra.mxu0 0.0
    %3480 = vmatprep.subr.mxu0 0.0
    %3481 = vmatpush1.msra.mxu0 0.0
    %3482 = vmatprep.subr.mxu0 0.0
    %3483 = vmatpush1.msra.mxu0 0.0
    %3484 = vmatprep.subr.mxu0 0.0
    %3485 = vmatpush1.msra.mxu0 %v2460
    %3486 = vmatprep.subr.mxu0 0.0
    %3487 = vmatpush1.msra.mxu0 %v2459
    %3488 = vmatprep.subr.mxu0 0.0
    %3489 = vmatpush1.msra.mxu0 %v2458
    %3490 = vmatprep.subr.mxu0 0.0
    %3491 = vmatpush1.msra.mxu0 %v2457
    %3492 = vmatprep.subr.mxu0 0.0
    %3493 = vmatpush1.msra.mxu0 %v2456
    %3494 = vmatprep.subr.mxu0 0.0
    %3495 = vmatpush1.msra.mxu0 %v2455
    %3496 = vmatprep.subr.mxu0 0.0
    %3497 = vmatpush1.msra.mxu0 %v2454
    %3498 = vmatprep.subr.mxu0 0.0
    %3499 = vmatpush1.msra.mxu0 %v2453
    %3500 = vmatprep.subr.mxu0 0.0
    %3501 = vmatpush2.msra.mxu0 0.0
    %3502 = vmatprep.subr.mxu0 0.0
    %3503 = vmatpush2.msra.mxu0 0.0
    %3504 = vmatprep.subr.mxu0 0.0
    %3505 = vmatpush2.msra.mxu0 0.0
    %3506 = vmatprep.subr.mxu0 0.0
    %3507 = vmatpush2.msra.mxu0 0.0
    %3508 = vmatprep.subr.mxu0 0.0
    %3509 = vmatpush2.msra.mxu0 0.0
    %3510 = vmatprep.subr.mxu0 0.0
    %3511 = vmatpush2.msra.mxu0 0.0
    %3512 = vmatprep.subr.mxu0 0.0
    %3513 = vmatpush2.msra.mxu0 0.0
    %3514 = vmatprep.subr.mxu0 0.0
    %3515 = vmatpush2.msra.mxu0 0.0
    %3516 = vmatprep.subr.mxu0 0.0
    %3517 = vmatpush2.msra.mxu0 0.0
    %3518 = vmatprep.subr.mxu0 0.0
    %3519 = vmatpush2.msra.mxu0 0.0
    %3520 = vmatprep.subr.mxu0 0.0
    %3521 = vmatpush2.msra.mxu0 0.0
    %3522 = vmatprep.subr.mxu0 0.0
    %3523 = vmatpush2.msra.mxu0 0.0
    %3524 = vmatprep.subr.mxu0 0.0
    %3525 = vmatpush2.msra.mxu0 0.0
    %3526 = vmatprep.subr.mxu0 0.0
    %3527 = vmatpush2.msra.mxu0 0.0
    %3528 = vmatprep.subr.mxu0 0.0
    %3529 = vmatpush2.msra.mxu0 0.0
    %3530 = vmatprep.subr.mxu0 0.0
    %3531 = vmatpush2.msra.mxu0 0.0
    %3532 = vmatprep.mubr.f32.mxu0 0.0
    %3533 = vmatmul.mubr.f32.gmra.mxu0 %v3463
    %v3534 = vpop.f32.mrf.mxu0
    %v3535 = vadd.f32 %v3461, %v3534
    %v3536 = vpop.f32.mrf.mxu0
    %3537 = vmatprep.mubr.f32.mxu0 0.0
    %3538 = vmatmul.mubr.f32.gmra.mxu0 %v3466
    %v3539 = vpop.f32.mrf.mxu0
    %v3540 = vadd.f32 %v3461, %v3539
    %v3541 = vpop.f32.mrf.mxu0
    %3542 = vdwg.mxu0
    %v3543 = vadd.f32 %v3351, %v3535
    %v3544 = vadd.f32 %v3352, %v3540
    %v3545 = vld [vmem:[%s2400 + $0xa8] sm:$0x1]
    %v3546 = vld [vmem:[%s2400 + $0xa9] sm:$0x1]
    %v3547 = vsel %vm43, %v3543, 0.0
    %3548 = vadd.xlane.f32.xlu0 %v3547
    %v3549 = vpop.xlane.xlu0 %3548
    %v3550 = vsel %vm43, %v3544, 0.0
    %3551 = vadd.xlane.f32.xlu0 %v3550
    %v3552 = vpop.xlane.xlu0 %3551
    %v3553 = vmul.f32 %v3549, %v50
    %v3554 = vmul.f32 %v3552, %v50
    %v3555 = vsub.f32 %v3543, %v3553
    %v3556 = vsub.f32 %v3544, %v3554
    %v3557 = vmul.f32 %v3555, %v3555
    %v3558 = vmul.f32 %v3556, %v3556
    %v3559 = vsel %vm43, %v3557, 0.0
    %3560 = vadd.xlane.f32.xlu0 %v3559
    %v3561 = vpop.xlane.xlu0 %3560
    %v3562 = vsel %vm43, %v3558, 0.0
    %3563 = vadd.xlane.f32.xlu0 %v3562
    %v3564 = vpop.xlane.xlu0 %3563
    %v3565 = vmul.f32 %v3561, %v50
    %v3566 = vmul.f32 %v3564, %v50
    %v3567 = vadd.f32 %v3565, 1e-12
    %v3568 = vadd.f32 %v3566, 1e-12
    %v3569 = vrsqrt.pop %v3567
    %v3570 = vrsqrt.pop %v3568
    %v3571 = vmul.f32 %v3555, %v3569
    %v3572 = vmul.f32 %v3556, %v3570
    %v3573 = vlaneseq
    %v3574 = vshrl.u32 %v3573, 7
    %v3575 = vsub.s32 0, %v3574
    %v3576 = vrot.slane %v3545, %v3575
    %v3577 = vmul.f32 %v3571, %v3576
    %v3578 = vmul.f32 %v3572, %v3576
    %v3579 = vlaneseq
    %v3580 = vshrl.u32 %v3579, 7
    %v3581 = vsub.s32 0, %v3580
    %v3582 = vrot.slane %v3546, %v3581
    %v3583 = vadd.f32 %v3577, %v3582
    %v3584 = vadd.f32 %v3578, %v3582
    %v3585 = vld [vmem:[%s2400 + $0xaa] sm:$0xff]
    %v3586 = vld [vmem:[%s2400 + $0xb2] sm:$0xff]
    %v3587 = vld [vmem:[%s2400 + $0xba] sm:$0xff]
    %v3588 = vld [vmem:[%s2400 + $0xc2] sm:$0xff]
    %v3589 = vld [vmem:[%s2400 + $0xca] sm:$0xff]
    %v3590 = vld [vmem:[%s2400 + $0xd2] sm:$0xff]
    %v3591 = vld [vmem:[%s2400 + $0xda] sm:$0xff]
    %v3592 = vld [vmem:[%s2400 + $0xe2] sm:$0xff]
    %v3593 = vld [vmem:[%s2400 + $0xea] sm:$0xff]
    %v3594 = vld [vmem:[%s2400 + $0xf2] sm:$0xff]
    %v3595 = vld [vmem:[%s2400 + $0xfa] sm:$0xff]
    %v3596 = vld [vmem:[%s2400 + $0x102] sm:$0xff]
    %v3597 = vld [vmem:[%s2400 + $0x10a] sm:$0xff]
    %v3598 = vld [vmem:[%s2400 + $0x112] sm:$0xff]
    %v3599 = vld [vmem:[%s2400 + $0x11a] sm:$0xff]
    %v3600 = vld [vmem:[%s2400 + $0x122] sm:$0xff]
    %v3601 = vld [vmem:[%s2400 + $0x12a] sm:$0xff]
    %v3602 = vld [vmem:[%s2400 + $0x132] sm:$0xff]
    %v3603 = vld [vmem:[%s2400 + $0x13a] sm:$0xff]
    %v3604 = vld [vmem:[%s2400 + $0x142] sm:$0xff]
    %v3605 = vld [vmem:[%s2400 + $0x14a] sm:$0x1]
    %v3606 = vlaneseq
    %v3607 = vshrl.u32 %v3606, 7
    %v3608 = vsub.s32 0, %v3607
    %v3609 = vrot.slane %v3605, %v3608
    %v3611 = vsel %vm43, %v3583, 0
    %v3614 = vsel %vm43, %v3584, 0
    %3616 = vmatprep.subr.mxu0 0.0
    %3617 = vmatpush1.msra.mxu0 0.0
    %3618 = vmatprep.subr.mxu0 0.0
    %3619 = vmatpush1.msra.mxu0 0.0
    %3620 = vmatprep.subr.mxu0 0.0
    %3621 = vmatpush1.msra.mxu0 0.0
    %3622 = vmatprep.subr.mxu0 0.0
    %3623 = vmatpush1.msra.mxu0 0.0
    %3624 = vmatprep.subr.mxu0 0.0
    %3625 = vmatpush1.msra.mxu0 0.0
    %3626 = vmatprep.subr.mxu0 0.0
    %3627 = vmatpush1.msra.mxu0 0.0
    %3628 = vmatprep.subr.mxu0 0.0
    %3629 = vmatpush1.msra.mxu0 0.0
    %3630 = vmatprep.subr.mxu0 0.0
    %3631 = vmatpush1.msra.mxu0 0.0
    %3632 = vmatprep.subr.mxu0 0.0
    %3633 = vmatpush1.msra.mxu0 0.0
    %3634 = vmatprep.subr.mxu0 0.0
    %3635 = vmatpush1.msra.mxu0 0.0
    %3636 = vmatprep.subr.mxu0 0.0
    %3637 = vmatpush1.msra.mxu0 0.0
    %3638 = vmatprep.subr.mxu0 0.0
    %3639 = vmatpush1.msra.mxu0 0.0
    %3640 = vmatprep.subr.mxu0 0.0
    %3641 = vmatpush1.msra.mxu0 %v3588
    %3642 = vmatprep.subr.mxu0 0.0
    %3643 = vmatpush1.msra.mxu0 %v3587
    %3644 = vmatprep.subr.mxu0 0.0
    %3645 = vmatpush1.msra.mxu0 %v3586
    %3646 = vmatprep.subr.mxu0 0.0
    %3647 = vmatpush1.msra.mxu0 %v3585
    %3648 = vmatprep.subr.mxu0 0.0
    %3649 = vmatpush2.msra.mxu0 0.0
    %3650 = vmatprep.subr.mxu0 0.0
    %3651 = vmatpush2.msra.mxu0 0.0
    %3652 = vmatprep.subr.mxu0 0.0
    %3653 = vmatpush2.msra.mxu0 0.0
    %3654 = vmatprep.subr.mxu0 0.0
    %3655 = vmatpush2.msra.mxu0 0.0
    %3656 = vmatprep.subr.mxu0 0.0
    %3657 = vmatpush2.msra.mxu0 0.0
    %3658 = vmatprep.subr.mxu0 0.0
    %3659 = vmatpush2.msra.mxu0 0.0
    %3660 = vmatprep.subr.mxu0 0.0
    %3661 = vmatpush2.msra.mxu0 0.0
    %3662 = vmatprep.subr.mxu0 0.0
    %3663 = vmatpush2.msra.mxu0 0.0
    %3664 = vmatprep.subr.mxu0 0.0
    %3665 = vmatpush2.msra.mxu0 0.0
    %3666 = vmatprep.subr.mxu0 0.0
    %3667 = vmatpush2.msra.mxu0 0.0
    %3668 = vmatprep.subr.mxu0 0.0
    %3669 = vmatpush2.msra.mxu0 0.0
    %3670 = vmatprep.subr.mxu0 0.0
    %3671 = vmatpush2.msra.mxu0 0.0
    %3672 = vmatprep.subr.mxu0 0.0
    %3673 = vmatpush2.msra.mxu0 0.0
    %3674 = vmatprep.subr.mxu0 0.0
    %3675 = vmatpush2.msra.mxu0 0.0
    %3676 = vmatprep.subr.mxu0 0.0
    %3677 = vmatpush2.msra.mxu0 0.0
    %3678 = vmatprep.subr.mxu0 0.0
    %3679 = vmatpush2.msra.mxu0 0.0
    %3680 = vmatprep.mubr.f32.mxu0 0.0
    %3681 = vmatmul.mubr.f32.gmra.mxu0 %v3611
    %v3682 = vpop.f32.mrf.mxu0
    %v3683 = vadd.f32 %v3609, %v3682
    %v3684 = vpop.f32.mrf.mxu0
    %3685 = vmatprep.mubr.f32.mxu0 0.0
    %3686 = vmatmul.mubr.f32.gmra.mxu0 %v3614
    %v3687 = vpop.f32.mrf.mxu0
    %v3688 = vadd.f32 %v3609, %v3687
    %v3689 = vpop.f32.mrf.mxu0
    %3690 = vdwg.mxu0
    %3693 = vrot.lane.b32.xlu0 %v3683, 112
    %v3694 = vpop.permute.xlu0 %3693
    %3695 = vrot.lane.b32.xlu0 %v3688, 112
    %v3696 = vpop.permute.xlu0 %3695
    %3697 = vrot.lane.b32.xlu0 %v3683, 96
    %v3698 = vpop.permute.xlu0 %3697
    %v3699 = vsel %vm207, %v3683, 0
    %v3701 = vsel %vm207, %v3698, 0
    %3703 = vmatprep.subr.mxu0 0.0
    %3704 = vmatpush1.xpose.msra.mxu0 0.0
    %3705 = vmatprep.subr.mxu0 0.0
    %3706 = vmatpush1.xpose.msra.mxu0 0.0
    %3707 = vmatprep.subr.mxu0 0.0
    %3708 = vmatpush1.xpose.msra.mxu0 0.0
    %3709 = vmatprep.subr.mxu0 0.0
    %3710 = vmatpush1.xpose.msra.mxu0 0.0
    %3711 = vmatprep.subr.mxu0 0.0
    %3712 = vmatpush1.xpose.msra.mxu0 0.0
    %3713 = vmatprep.subr.mxu0 0.0
    %3714 = vmatpush1.xpose.msra.mxu0 0.0
    %3715 = vmatprep.subr.mxu0 0.0
    %3716 = vmatpush1.xpose.msra.mxu0 0.0
    %3717 = vmatprep.subr.mxu0 0.0
    %3718 = vmatpush1.xpose.msra.mxu0 0.0
    %3719 = vmatprep.subr.mxu0 0.0
    %3720 = vmatpush1.xpose.msra.mxu0 0.0
    %3721 = vmatprep.subr.mxu0 0.0
    %3722 = vmatpush1.xpose.msra.mxu0 0.0
    %3723 = vmatprep.subr.mxu0 0.0
    %3724 = vmatpush1.xpose.msra.mxu0 0.0
    %3725 = vmatprep.subr.mxu0 0.0
    %3726 = vmatpush1.xpose.msra.mxu0 0.0
    %3727 = vmatprep.subr.mxu0 0.0
    %3728 = vmatpush1.xpose.msra.mxu0 0.0
    %3729 = vmatprep.subr.mxu0 0.0
    %3730 = vmatpush1.xpose.msra.mxu0 0.0
    %3731 = vmatprep.subr.mxu0 0.0
    %3732 = vmatpush1.xpose.msra.mxu0 0.0
    %3733 = vmatprep.subr.mxu0 0.0
    %3734 = vmatpush1.xpose.msra.mxu0 %v3701
    %3735 = vmatprep.subr.mxu0 0.0
    %3736 = vmatpush2.xpose.msra.mxu0 0.0
    %3737 = vmatprep.subr.mxu0 0.0
    %3738 = vmatpush2.xpose.msra.mxu0 0.0
    %3739 = vmatprep.subr.mxu0 0.0
    %3740 = vmatpush2.xpose.msra.mxu0 0.0
    %3741 = vmatprep.subr.mxu0 0.0
    %3742 = vmatpush2.xpose.msra.mxu0 0.0
    %3743 = vmatprep.subr.mxu0 0.0
    %3744 = vmatpush2.xpose.msra.mxu0 0.0
    %3745 = vmatprep.subr.mxu0 0.0
    %3746 = vmatpush2.xpose.msra.mxu0 0.0
    %3747 = vmatprep.subr.mxu0 0.0
    %3748 = vmatpush2.xpose.msra.mxu0 0.0
    %3749 = vmatprep.subr.mxu0 0.0
    %3750 = vmatpush2.xpose.msra.mxu0 0.0
    %3751 = vmatprep.subr.mxu0 0.0
    %3752 = vmatpush2.xpose.msra.mxu0 0.0
    %3753 = vmatprep.subr.mxu0 0.0
    %3754 = vmatpush2.xpose.msra.mxu0 0.0
    %3755 = vmatprep.subr.mxu0 0.0
    %3756 = vmatpush2.xpose.msra.mxu0 0.0
    %3757 = vmatprep.subr.mxu0 0.0
    %3758 = vmatpush2.xpose.msra.mxu0 0.0
    %3759 = vmatprep.subr.mxu0 0.0
    %3760 = vmatpush2.xpose.msra.mxu0 0.0
    %3761 = vmatprep.subr.mxu0 0.0
    %3762 = vmatpush2.xpose.msra.mxu0 0.0
    %3763 = vmatprep.subr.mxu0 0.0
    %3764 = vmatpush2.xpose.msra.mxu0 0.0
    %3765 = vmatprep.subr.mxu0 0.0
    %3766 = vmatpush2.xpose.msra.mxu0 0.0
    %3767 = vmatprep.mubr.f32.mxu0 0.0
    %3768 = vmatmul.mubr.f32.gmra.mxu0 %v3699
    %v3769 = vpop.f32.mrf.mxu0
    %v3770 = vadd.f32 %v2556, %v3769
    %v3771 = vpop.f32.mrf.mxu0
    %3772 = vdwg.mxu0
    %3773 = vrot.lane.b32.xlu0 %v3688, 96
    %v3774 = vpop.permute.xlu0 %3773
    %v3775 = vsel %vm207, %v3688, 0
    %v3777 = vsel %vm207, %v3774, 0
    %3779 = vmatprep.subr.mxu0 0.0
    %3780 = vmatpush1.xpose.msra.mxu0 0.0
    %3781 = vmatprep.subr.mxu0 0.0
    %3782 = vmatpush1.xpose.msra.mxu0 0.0
    %3783 = vmatprep.subr.mxu0 0.0
    %3784 = vmatpush1.xpose.msra.mxu0 0.0
    %3785 = vmatprep.subr.mxu0 0.0
    %3786 = vmatpush1.xpose.msra.mxu0 0.0
    %3787 = vmatprep.subr.mxu0 0.0
    %3788 = vmatpush1.xpose.msra.mxu0 0.0
    %3789 = vmatprep.subr.mxu0 0.0
    %3790 = vmatpush1.xpose.msra.mxu0 0.0
    %3791 = vmatprep.subr.mxu0 0.0
    %3792 = vmatpush1.xpose.msra.mxu0 0.0
    %3793 = vmatprep.subr.mxu0 0.0
    %3794 = vmatpush1.xpose.msra.mxu0 0.0
    %3795 = vmatprep.subr.mxu0 0.0
    %3796 = vmatpush1.xpose.msra.mxu0 0.0
    %3797 = vmatprep.subr.mxu0 0.0
    %3798 = vmatpush1.xpose.msra.mxu0 0.0
    %3799 = vmatprep.subr.mxu0 0.0
    %3800 = vmatpush1.xpose.msra.mxu0 0.0
    %3801 = vmatprep.subr.mxu0 0.0
    %3802 = vmatpush1.xpose.msra.mxu0 0.0
    %3803 = vmatprep.subr.mxu0 0.0
    %3804 = vmatpush1.xpose.msra.mxu0 0.0
    %3805 = vmatprep.subr.mxu0 0.0
    %3806 = vmatpush1.xpose.msra.mxu0 0.0
    %3807 = vmatprep.subr.mxu0 0.0
    %3808 = vmatpush1.xpose.msra.mxu0 0.0
    %3809 = vmatprep.subr.mxu0 0.0
    %3810 = vmatpush1.xpose.msra.mxu0 %v3777
    %3811 = vmatprep.subr.mxu0 0.0
    %3812 = vmatpush2.xpose.msra.mxu0 0.0
    %3813 = vmatprep.subr.mxu0 0.0
    %3814 = vmatpush2.xpose.msra.mxu0 0.0
    %3815 = vmatprep.subr.mxu0 0.0
    %3816 = vmatpush2.xpose.msra.mxu0 0.0
    %3817 = vmatprep.subr.mxu0 0.0
    %3818 = vmatpush2.xpose.msra.mxu0 0.0
    %3819 = vmatprep.subr.mxu0 0.0
    %3820 = vmatpush2.xpose.msra.mxu0 0.0
    %3821 = vmatprep.subr.mxu0 0.0
    %3822 = vmatpush2.xpose.msra.mxu0 0.0
    %3823 = vmatprep.subr.mxu0 0.0
    %3824 = vmatpush2.xpose.msra.mxu0 0.0
    %3825 = vmatprep.subr.mxu0 0.0
    %3826 = vmatpush2.xpose.msra.mxu0 0.0
    %3827 = vmatprep.subr.mxu0 0.0
    %3828 = vmatpush2.xpose.msra.mxu0 0.0
    %3829 = vmatprep.subr.mxu0 0.0
    %3830 = vmatpush2.xpose.msra.mxu0 0.0
    %3831 = vmatprep.subr.mxu0 0.0
    %3832 = vmatpush2.xpose.msra.mxu0 0.0
    %3833 = vmatprep.subr.mxu0 0.0
    %3834 = vmatpush2.xpose.msra.mxu0 0.0
    %3835 = vmatprep.subr.mxu0 0.0
    %3836 = vmatpush2.xpose.msra.mxu0 0.0
    %3837 = vmatprep.subr.mxu0 0.0
    %3838 = vmatpush2.xpose.msra.mxu0 0.0
    %3839 = vmatprep.subr.mxu0 0.0
    %3840 = vmatpush2.xpose.msra.mxu0 0.0
    %3841 = vmatprep.subr.mxu0 0.0
    %3842 = vmatpush2.xpose.msra.mxu0 0.0
    %3843 = vmatprep.mubr.f32.mxu0 0.0
    %3844 = vmatmul.mubr.f32.gmra.mxu0 %v3775
    %v3845 = vpop.f32.mrf.mxu0
    %v3846 = vadd.f32 %v2560, %v3845
    %v3847 = vpop.f32.mrf.mxu0
    %3848 = vdwg.mxu0
    %3849 = vrot.lane.b32.xlu0 %v3694, 96
    %v3850 = vpop.permute.xlu0 %3849
    %v3851 = vsel %vm207, %v3694, 0
    %v3853 = vsel %vm207, %v3850, 0
    %3855 = vmatprep.subr.mxu0 0.0
    %3856 = vmatpush1.xpose.msra.mxu0 0.0
    %3857 = vmatprep.subr.mxu0 0.0
    %3858 = vmatpush1.xpose.msra.mxu0 0.0
    %3859 = vmatprep.subr.mxu0 0.0
    %3860 = vmatpush1.xpose.msra.mxu0 0.0
    %3861 = vmatprep.subr.mxu0 0.0
    %3862 = vmatpush1.xpose.msra.mxu0 0.0
    %3863 = vmatprep.subr.mxu0 0.0
    %3864 = vmatpush1.xpose.msra.mxu0 0.0
    %3865 = vmatprep.subr.mxu0 0.0
    %3866 = vmatpush1.xpose.msra.mxu0 0.0
    %3867 = vmatprep.subr.mxu0 0.0
    %3868 = vmatpush1.xpose.msra.mxu0 0.0
    %3869 = vmatprep.subr.mxu0 0.0
    %3870 = vmatpush1.xpose.msra.mxu0 0.0
    %3871 = vmatprep.subr.mxu0 0.0
    %3872 = vmatpush1.xpose.msra.mxu0 0.0
    %3873 = vmatprep.subr.mxu0 0.0
    %3874 = vmatpush1.xpose.msra.mxu0 0.0
    %3875 = vmatprep.subr.mxu0 0.0
    %3876 = vmatpush1.xpose.msra.mxu0 0.0
    %3877 = vmatprep.subr.mxu0 0.0
    %3878 = vmatpush1.xpose.msra.mxu0 0.0
    %3879 = vmatprep.subr.mxu0 0.0
    %3880 = vmatpush1.xpose.msra.mxu0 0.0
    %3881 = vmatprep.subr.mxu0 0.0
    %3882 = vmatpush1.xpose.msra.mxu0 0.0
    %3883 = vmatprep.subr.mxu0 0.0
    %3884 = vmatpush1.xpose.msra.mxu0 0.0
    %3885 = vmatprep.subr.mxu0 0.0
    %3886 = vmatpush1.xpose.msra.mxu0 %v3853
    %3887 = vmatprep.subr.mxu0 0.0
    %3888 = vmatpush2.xpose.msra.mxu0 0.0
    %3889 = vmatprep.subr.mxu0 0.0
    %3890 = vmatpush2.xpose.msra.mxu0 0.0
    %3891 = vmatprep.subr.mxu0 0.0
    %3892 = vmatpush2.xpose.msra.mxu0 0.0
    %3893 = vmatprep.subr.mxu0 0.0
    %3894 = vmatpush2.xpose.msra.mxu0 0.0
    %3895 = vmatprep.subr.mxu0 0.0
    %3896 = vmatpush2.xpose.msra.mxu0 0.0
    %3897 = vmatprep.subr.mxu0 0.0
    %3898 = vmatpush2.xpose.msra.mxu0 0.0
    %3899 = vmatprep.subr.mxu0 0.0
    %3900 = vmatpush2.xpose.msra.mxu0 0.0
    %3901 = vmatprep.subr.mxu0 0.0
    %3902 = vmatpush2.xpose.msra.mxu0 0.0
    %3903 = vmatprep.subr.mxu0 0.0
    %3904 = vmatpush2.xpose.msra.mxu0 0.0
    %3905 = vmatprep.subr.mxu0 0.0
    %3906 = vmatpush2.xpose.msra.mxu0 0.0
    %3907 = vmatprep.subr.mxu0 0.0
    %3908 = vmatpush2.xpose.msra.mxu0 0.0
    %3909 = vmatprep.subr.mxu0 0.0
    %3910 = vmatpush2.xpose.msra.mxu0 0.0
    %3911 = vmatprep.subr.mxu0 0.0
    %3912 = vmatpush2.xpose.msra.mxu0 0.0
    %3913 = vmatprep.subr.mxu0 0.0
    %3914 = vmatpush2.xpose.msra.mxu0 0.0
    %3915 = vmatprep.subr.mxu0 0.0
    %3916 = vmatpush2.xpose.msra.mxu0 0.0
    %3917 = vmatprep.subr.mxu0 0.0
    %3918 = vmatpush2.xpose.msra.mxu0 0.0
    %3919 = vmatprep.mubr.f32.mxu0 0.0
    %3920 = vmatmul.mubr.f32.gmra.mxu0 %v3851
    %v3921 = vpop.f32.mrf.mxu0
    %v3922 = vadd.f32 %v2556, %v3921
    %v3923 = vpop.f32.mrf.mxu0
    %3924 = vdwg.mxu0
    %3925 = vrot.lane.b32.xlu0 %v3696, 96
    %v3926 = vpop.permute.xlu0 %3925
    %v3927 = vsel %vm207, %v3696, 0
    %v3929 = vsel %vm207, %v3926, 0
    %3931 = vmatprep.subr.mxu0 0.0
    %3932 = vmatpush1.xpose.msra.mxu0 0.0
    %3933 = vmatprep.subr.mxu0 0.0
    %3934 = vmatpush1.xpose.msra.mxu0 0.0
    %3935 = vmatprep.subr.mxu0 0.0
    %3936 = vmatpush1.xpose.msra.mxu0 0.0
    %3937 = vmatprep.subr.mxu0 0.0
    %3938 = vmatpush1.xpose.msra.mxu0 0.0
    %3939 = vmatprep.subr.mxu0 0.0
    %3940 = vmatpush1.xpose.msra.mxu0 0.0
    %3941 = vmatprep.subr.mxu0 0.0
    %3942 = vmatpush1.xpose.msra.mxu0 0.0
    %3943 = vmatprep.subr.mxu0 0.0
    %3944 = vmatpush1.xpose.msra.mxu0 0.0
    %3945 = vmatprep.subr.mxu0 0.0
    %3946 = vmatpush1.xpose.msra.mxu0 0.0
    %3947 = vmatprep.subr.mxu0 0.0
    %3948 = vmatpush1.xpose.msra.mxu0 0.0
    %3949 = vmatprep.subr.mxu0 0.0
    %3950 = vmatpush1.xpose.msra.mxu0 0.0
    %3951 = vmatprep.subr.mxu0 0.0
    %3952 = vmatpush1.xpose.msra.mxu0 0.0
    %3953 = vmatprep.subr.mxu0 0.0
    %3954 = vmatpush1.xpose.msra.mxu0 0.0
    %3955 = vmatprep.subr.mxu0 0.0
    %3956 = vmatpush1.xpose.msra.mxu0 0.0
    %3957 = vmatprep.subr.mxu0 0.0
    %3958 = vmatpush1.xpose.msra.mxu0 0.0
    %3959 = vmatprep.subr.mxu0 0.0
    %3960 = vmatpush1.xpose.msra.mxu0 0.0
    %3961 = vmatprep.subr.mxu0 0.0
    %3962 = vmatpush1.xpose.msra.mxu0 %v3929
    %3963 = vmatprep.subr.mxu0 0.0
    %3964 = vmatpush2.xpose.msra.mxu0 0.0
    %3965 = vmatprep.subr.mxu0 0.0
    %3966 = vmatpush2.xpose.msra.mxu0 0.0
    %3967 = vmatprep.subr.mxu0 0.0
    %3968 = vmatpush2.xpose.msra.mxu0 0.0
    %3969 = vmatprep.subr.mxu0 0.0
    %3970 = vmatpush2.xpose.msra.mxu0 0.0
    %3971 = vmatprep.subr.mxu0 0.0
    %3972 = vmatpush2.xpose.msra.mxu0 0.0
    %3973 = vmatprep.subr.mxu0 0.0
    %3974 = vmatpush2.xpose.msra.mxu0 0.0
    %3975 = vmatprep.subr.mxu0 0.0
    %3976 = vmatpush2.xpose.msra.mxu0 0.0
    %3977 = vmatprep.subr.mxu0 0.0
    %3978 = vmatpush2.xpose.msra.mxu0 0.0
    %3979 = vmatprep.subr.mxu0 0.0
    %3980 = vmatpush2.xpose.msra.mxu0 0.0
    %3981 = vmatprep.subr.mxu0 0.0
    %3982 = vmatpush2.xpose.msra.mxu0 0.0
    %3983 = vmatprep.subr.mxu0 0.0
    %3984 = vmatpush2.xpose.msra.mxu0 0.0
    %3985 = vmatprep.subr.mxu0 0.0
    %3986 = vmatpush2.xpose.msra.mxu0 0.0
    %3987 = vmatprep.subr.mxu0 0.0
    %3988 = vmatpush2.xpose.msra.mxu0 0.0
    %3989 = vmatprep.subr.mxu0 0.0
    %3990 = vmatpush2.xpose.msra.mxu0 0.0
    %3991 = vmatprep.subr.mxu0 0.0
    %3992 = vmatpush2.xpose.msra.mxu0 0.0
    %3993 = vmatprep.subr.mxu0 0.0
    %3994 = vmatpush2.xpose.msra.mxu0 0.0
    %3995 = vmatprep.mubr.f32.mxu0 0.0
    %3996 = vmatmul.mubr.f32.gmra.mxu0 %v3927
    %v3997 = vpop.f32.mrf.mxu0
    %v3998 = vadd.f32 %v2560, %v3997
    %v3999 = vpop.f32.mrf.mxu0
    %4000 = vdwg.mxu0
    %v4001 = vsel %vm510, %v3770, -inf
    %4002 = vmax.xlane.f32.xlu0 %v4001
    %v4003 = vpop.xlane.xlu0 %4002
    %v4004 = vsel %vm510, %v3846, -inf
    %4005 = vmax.xlane.f32.xlu0 %v4004
    %v4006 = vpop.xlane.xlu0 %4005
    %v4007 = vsel %vm510, %v3922, -inf
    %4008 = vmax.xlane.f32.xlu0 %v4007
    %v4009 = vpop.xlane.xlu0 %4008
    %v4010 = vsel %vm510, %v3998, -inf
    %4011 = vmax.xlane.f32.xlu0 %v4010
    %v4012 = vpop.xlane.xlu0 %4011
    %v4013 = vsub.f32 %v3770, %v4003
    %v4014 = vsub.f32 %v3846, %v4006
    %v4015 = vsub.f32 %v3922, %v4009
    %v4016 = vsub.f32 %v3998, %v4012
    %v4017 = vmul.f32 %v4013, 1.442695
    %v4018 = vpow.pop %v4017
    %v4019 = vmul.f32 %v4014, 1.442695
    %v4020 = vpow.pop %v4019
    %v4021 = vmul.f32 %v4015, 1.442695
    %v4022 = vpow.pop %v4021
    %v4023 = vmul.f32 %v4016, 1.442695
    %v4024 = vpow.pop %v4023
    %v4025 = vsel %vm510, %v4018, 0.0
    %4026 = vadd.xlane.f32.xlu0 %v4025
    %v4027 = vpop.xlane.xlu0 %4026
    %v4028 = vsel %vm510, %v4020, 0.0
    %4029 = vadd.xlane.f32.xlu0 %v4028
    %v4030 = vpop.xlane.xlu0 %4029
    %v4031 = vsel %vm510, %v4022, 0.0
    %4032 = vadd.xlane.f32.xlu0 %v4031
    %v4033 = vpop.xlane.xlu0 %4032
    %v4034 = vsel %vm510, %v4024, 0.0
    %4035 = vadd.xlane.f32.xlu0 %v4034
    %v4036 = vpop.xlane.xlu0 %4035
    %v4037 = vrcp.pop %v4027
    %v4038 = vmul.f32 %v4018, %v4037
    %v4039 = vrcp.pop %v4030
    %v4040 = vmul.f32 %v4020, %v4039
    %v4041 = vrcp.pop %v4033
    %v4042 = vmul.f32 %v4022, %v4041
    %v4043 = vrcp.pop %v4036
    %v4044 = vmul.f32 %v4024, %v4043
    %4045 = vrot.lane.b32.xlu0 %v3683, 64
    %v4046 = vpop.permute.xlu0 %4045
    %v4049 = vsel %vm510, %v4038, 0
    %4051 = vmatprep.subr.mxu0 0.0
    %4052 = vmatpush1.msra.mxu0 0.0
    %4053 = vmatprep.subr.mxu0 0.0
    %4054 = vmatpush1.msra.mxu0 0.0
    %4055 = vmatprep.subr.mxu0 0.0
    %4056 = vmatpush1.msra.mxu0 0.0
    %4057 = vmatprep.subr.mxu0 0.0
    %4058 = vmatpush1.msra.mxu0 0.0
    %4059 = vmatprep.subr.mxu0 0.0
    %4060 = vmatpush1.msra.mxu0 0.0
    %4061 = vmatprep.subr.mxu0 0.0
    %4062 = vmatpush1.msra.mxu0 0.0
    %4063 = vmatprep.subr.mxu0 0.0
    %4064 = vmatpush1.msra.mxu0 0.0
    %4065 = vmatprep.subr.mxu0 0.0
    %4066 = vmatpush1.msra.mxu0 0.0
    %4067 = vmatprep.subr.mxu0 0.0
    %4068 = vmatpush1.msra.mxu0 0.0
    %4069 = vmatprep.subr.mxu0 0.0
    %4070 = vmatpush1.msra.mxu0 0.0
    %4071 = vmatprep.subr.mxu0 0.0
    %4072 = vmatpush1.msra.mxu0 0.0
    %4073 = vmatprep.subr.mxu0 0.0
    %4074 = vmatpush1.msra.mxu0 0.0
    %4075 = vmatprep.subr.mxu0 0.0
    %4076 = vmatpush1.msra.mxu0 0.0
    %4077 = vmatprep.subr.mxu0 0.0
    %4078 = vmatpush1.msra.mxu0 0.0
    %4079 = vmatprep.subr.mxu0 0.0
    %4080 = vmatpush1.msra.mxu0 0.0
    %4081 = vmatprep.subr.mxu0 0.0
    %4082 = vmatpush1.msra.mxu0 %v4046
    %4083 = vmatprep.subr.mxu0 0.0
    %4084 = vmatpush2.msra.mxu0 0.0
    %4085 = vmatprep.subr.mxu0 0.0
    %4086 = vmatpush2.msra.mxu0 0.0
    %4087 = vmatprep.subr.mxu0 0.0
    %4088 = vmatpush2.msra.mxu0 0.0
    %4089 = vmatprep.subr.mxu0 0.0
    %4090 = vmatpush2.msra.mxu0 0.0
    %4091 = vmatprep.subr.mxu0 0.0
    %4092 = vmatpush2.msra.mxu0 0.0
    %4093 = vmatprep.subr.mxu0 0.0
    %4094 = vmatpush2.msra.mxu0 0.0
    %4095 = vmatprep.subr.mxu0 0.0
    %4096 = vmatpush2.msra.mxu0 0.0
    %4097 = vmatprep.subr.mxu0 0.0
    %4098 = vmatpush2.msra.mxu0 0.0
    %4099 = vmatprep.subr.mxu0 0.0
    %4100 = vmatpush2.msra.mxu0 0.0
    %4101 = vmatprep.subr.mxu0 0.0
    %4102 = vmatpush2.msra.mxu0 0.0
    %4103 = vmatprep.subr.mxu0 0.0
    %4104 = vmatpush2.msra.mxu0 0.0
    %4105 = vmatprep.subr.mxu0 0.0
    %4106 = vmatpush2.msra.mxu0 0.0
    %4107 = vmatprep.subr.mxu0 0.0
    %4108 = vmatpush2.msra.mxu0 0.0
    %4109 = vmatprep.subr.mxu0 0.0
    %4110 = vmatpush2.msra.mxu0 0.0
    %4111 = vmatprep.subr.mxu0 0.0
    %4112 = vmatpush2.msra.mxu0 0.0
    %4113 = vmatprep.subr.mxu0 0.0
    %4114 = vmatpush2.msra.mxu0 0.0
    %4115 = vmatprep.mubr.f32.mxu0 0.0
    %4116 = vmatmul.mubr.f32.gmra.mxu0 %v4049
    %v4117 = vpop.f32.mrf.mxu0
    %v4118 = vadd.f32 0.0, %v4117
    %v4119 = vpop.f32.mrf.mxu0
    %4120 = vdwg.mxu0
    %4121 = vrot.lane.b32.xlu0 %v3688, 64
    %v4122 = vpop.permute.xlu0 %4121
    %v4125 = vsel %vm510, %v4040, 0
    %4127 = vmatprep.subr.mxu0 0.0
    %4128 = vmatpush1.msra.mxu0 0.0
    %4129 = vmatprep.subr.mxu0 0.0
    %4130 = vmatpush1.msra.mxu0 0.0
    %4131 = vmatprep.subr.mxu0 0.0
    %4132 = vmatpush1.msra.mxu0 0.0
    %4133 = vmatprep.subr.mxu0 0.0
    %4134 = vmatpush1.msra.mxu0 0.0
    %4135 = vmatprep.subr.mxu0 0.0
    %4136 = vmatpush1.msra.mxu0 0.0
    %4137 = vmatprep.subr.mxu0 0.0
    %4138 = vmatpush1.msra.mxu0 0.0
    %4139 = vmatprep.subr.mxu0 0.0
    %4140 = vmatpush1.msra.mxu0 0.0
    %4141 = vmatprep.subr.mxu0 0.0
    %4142 = vmatpush1.msra.mxu0 0.0
    %4143 = vmatprep.subr.mxu0 0.0
    %4144 = vmatpush1.msra.mxu0 0.0
    %4145 = vmatprep.subr.mxu0 0.0
    %4146 = vmatpush1.msra.mxu0 0.0
    %4147 = vmatprep.subr.mxu0 0.0
    %4148 = vmatpush1.msra.mxu0 0.0
    %4149 = vmatprep.subr.mxu0 0.0
    %4150 = vmatpush1.msra.mxu0 0.0
    %4151 = vmatprep.subr.mxu0 0.0
    %4152 = vmatpush1.msra.mxu0 0.0
    %4153 = vmatprep.subr.mxu0 0.0
    %4154 = vmatpush1.msra.mxu0 0.0
    %4155 = vmatprep.subr.mxu0 0.0
    %4156 = vmatpush1.msra.mxu0 0.0
    %4157 = vmatprep.subr.mxu0 0.0
    %4158 = vmatpush1.msra.mxu0 %v4122
    %4159 = vmatprep.subr.mxu0 0.0
    %4160 = vmatpush2.msra.mxu0 0.0
    %4161 = vmatprep.subr.mxu0 0.0
    %4162 = vmatpush2.msra.mxu0 0.0
    %4163 = vmatprep.subr.mxu0 0.0
    %4164 = vmatpush2.msra.mxu0 0.0
    %4165 = vmatprep.subr.mxu0 0.0
    %4166 = vmatpush2.msra.mxu0 0.0
    %4167 = vmatprep.subr.mxu0 0.0
    %4168 = vmatpush2.msra.mxu0 0.0
    %4169 = vmatprep.subr.mxu0 0.0
    %4170 = vmatpush2.msra.mxu0 0.0
    %4171 = vmatprep.subr.mxu0 0.0
    %4172 = vmatpush2.msra.mxu0 0.0
    %4173 = vmatprep.subr.mxu0 0.0
    %4174 = vmatpush2.msra.mxu0 0.0
    %4175 = vmatprep.subr.mxu0 0.0
    %4176 = vmatpush2.msra.mxu0 0.0
    %4177 = vmatprep.subr.mxu0 0.0
    %4178 = vmatpush2.msra.mxu0 0.0
    %4179 = vmatprep.subr.mxu0 0.0
    %4180 = vmatpush2.msra.mxu0 0.0
    %4181 = vmatprep.subr.mxu0 0.0
    %4182 = vmatpush2.msra.mxu0 0.0
    %4183 = vmatprep.subr.mxu0 0.0
    %4184 = vmatpush2.msra.mxu0 0.0
    %4185 = vmatprep.subr.mxu0 0.0
    %4186 = vmatpush2.msra.mxu0 0.0
    %4187 = vmatprep.subr.mxu0 0.0
    %4188 = vmatpush2.msra.mxu0 0.0
    %4189 = vmatprep.subr.mxu0 0.0
    %4190 = vmatpush2.msra.mxu0 0.0
    %4191 = vmatprep.mubr.f32.mxu0 0.0
    %4192 = vmatmul.mubr.f32.gmra.mxu0 %v4125
    %v4193 = vpop.f32.mrf.mxu0
    %v4194 = vadd.f32 0.0, %v4193
    %v4195 = vpop.f32.mrf.mxu0
    %4196 = vdwg.mxu0
    %4197 = vrot.lane.b32.xlu0 %v3694, 64
    %v4198 = vpop.permute.xlu0 %4197
    %v4201 = vsel %vm510, %v4042, 0
    %4203 = vmatprep.subr.mxu0 0.0
    %4204 = vmatpush1.msra.mxu0 0.0
    %4205 = vmatprep.subr.mxu0 0.0
    %4206 = vmatpush1.msra.mxu0 0.0
    %4207 = vmatprep.subr.mxu0 0.0
    %4208 = vmatpush1.msra.mxu0 0.0
    %4209 = vmatprep.subr.mxu0 0.0
    %4210 = vmatpush1.msra.mxu0 0.0
    %4211 = vmatprep.subr.mxu0 0.0
    %4212 = vmatpush1.msra.mxu0 0.0
    %4213 = vmatprep.subr.mxu0 0.0
    %4214 = vmatpush1.msra.mxu0 0.0
    %4215 = vmatprep.subr.mxu0 0.0
    %4216 = vmatpush1.msra.mxu0 0.0
    %4217 = vmatprep.subr.mxu0 0.0
    %4218 = vmatpush1.msra.mxu0 0.0
    %4219 = vmatprep.subr.mxu0 0.0
    %4220 = vmatpush1.msra.mxu0 0.0
    %4221 = vmatprep.subr.mxu0 0.0
    %4222 = vmatpush1.msra.mxu0 0.0
    %4223 = vmatprep.subr.mxu0 0.0
    %4224 = vmatpush1.msra.mxu0 0.0
    %4225 = vmatprep.subr.mxu0 0.0
    %4226 = vmatpush1.msra.mxu0 0.0
    %4227 = vmatprep.subr.mxu0 0.0
    %4228 = vmatpush1.msra.mxu0 0.0
    %4229 = vmatprep.subr.mxu0 0.0
    %4230 = vmatpush1.msra.mxu0 0.0
    %4231 = vmatprep.subr.mxu0 0.0
    %4232 = vmatpush1.msra.mxu0 0.0
    %4233 = vmatprep.subr.mxu0 0.0
    %4234 = vmatpush1.msra.mxu0 %v4198
    %4235 = vmatprep.subr.mxu0 0.0
    %4236 = vmatpush2.msra.mxu0 0.0
    %4237 = vmatprep.subr.mxu0 0.0
    %4238 = vmatpush2.msra.mxu0 0.0
    %4239 = vmatprep.subr.mxu0 0.0
    %4240 = vmatpush2.msra.mxu0 0.0
    %4241 = vmatprep.subr.mxu0 0.0
    %4242 = vmatpush2.msra.mxu0 0.0
    %4243 = vmatprep.subr.mxu0 0.0
    %4244 = vmatpush2.msra.mxu0 0.0
    %4245 = vmatprep.subr.mxu0 0.0
    %4246 = vmatpush2.msra.mxu0 0.0
    %4247 = vmatprep.subr.mxu0 0.0
    %4248 = vmatpush2.msra.mxu0 0.0
    %4249 = vmatprep.subr.mxu0 0.0
    %4250 = vmatpush2.msra.mxu0 0.0
    %4251 = vmatprep.subr.mxu0 0.0
    %4252 = vmatpush2.msra.mxu0 0.0
    %4253 = vmatprep.subr.mxu0 0.0
    %4254 = vmatpush2.msra.mxu0 0.0
    %4255 = vmatprep.subr.mxu0 0.0
    %4256 = vmatpush2.msra.mxu0 0.0
    %4257 = vmatprep.subr.mxu0 0.0
    %4258 = vmatpush2.msra.mxu0 0.0
    %4259 = vmatprep.subr.mxu0 0.0
    %4260 = vmatpush2.msra.mxu0 0.0
    %4261 = vmatprep.subr.mxu0 0.0
    %4262 = vmatpush2.msra.mxu0 0.0
    %4263 = vmatprep.subr.mxu0 0.0
    %4264 = vmatpush2.msra.mxu0 0.0
    %4265 = vmatprep.subr.mxu0 0.0
    %4266 = vmatpush2.msra.mxu0 0.0
    %4267 = vmatprep.mubr.f32.mxu0 0.0
    %4268 = vmatmul.mubr.f32.gmra.mxu0 %v4201
    %v4269 = vpop.f32.mrf.mxu0
    %v4270 = vadd.f32 0.0, %v4269
    %v4271 = vpop.f32.mrf.mxu0
    %4272 = vdwg.mxu0
    %4273 = vrot.lane.b32.xlu0 %v3696, 64
    %v4274 = vpop.permute.xlu0 %4273
    %v4277 = vsel %vm510, %v4044, 0
    %4279 = vmatprep.subr.mxu0 0.0
    %4280 = vmatpush1.msra.mxu0 0.0
    %4281 = vmatprep.subr.mxu0 0.0
    %4282 = vmatpush1.msra.mxu0 0.0
    %4283 = vmatprep.subr.mxu0 0.0
    %4284 = vmatpush1.msra.mxu0 0.0
    %4285 = vmatprep.subr.mxu0 0.0
    %4286 = vmatpush1.msra.mxu0 0.0
    %4287 = vmatprep.subr.mxu0 0.0
    %4288 = vmatpush1.msra.mxu0 0.0
    %4289 = vmatprep.subr.mxu0 0.0
    %4290 = vmatpush1.msra.mxu0 0.0
    %4291 = vmatprep.subr.mxu0 0.0
    %4292 = vmatpush1.msra.mxu0 0.0
    %4293 = vmatprep.subr.mxu0 0.0
    %4294 = vmatpush1.msra.mxu0 0.0
    %4295 = vmatprep.subr.mxu0 0.0
    %4296 = vmatpush1.msra.mxu0 0.0
    %4297 = vmatprep.subr.mxu0 0.0
    %4298 = vmatpush1.msra.mxu0 0.0
    %4299 = vmatprep.subr.mxu0 0.0
    %4300 = vmatpush1.msra.mxu0 0.0
    %4301 = vmatprep.subr.mxu0 0.0
    %4302 = vmatpush1.msra.mxu0 0.0
    %4303 = vmatprep.subr.mxu0 0.0
    %4304 = vmatpush1.msra.mxu0 0.0
    %4305 = vmatprep.subr.mxu0 0.0
    %4306 = vmatpush1.msra.mxu0 0.0
    %4307 = vmatprep.subr.mxu0 0.0
    %4308 = vmatpush1.msra.mxu0 0.0
    %4309 = vmatprep.subr.mxu0 0.0
    %4310 = vmatpush1.msra.mxu0 %v4274
    %4311 = vmatprep.subr.mxu0 0.0
    %4312 = vmatpush2.msra.mxu0 0.0
    %4313 = vmatprep.subr.mxu0 0.0
    %4314 = vmatpush2.msra.mxu0 0.0
    %4315 = vmatprep.subr.mxu0 0.0
    %4316 = vmatpush2.msra.mxu0 0.0
    %4317 = vmatprep.subr.mxu0 0.0
    %4318 = vmatpush2.msra.mxu0 0.0
    %4319 = vmatprep.subr.mxu0 0.0
    %4320 = vmatpush2.msra.mxu0 0.0
    %4321 = vmatprep.subr.mxu0 0.0
    %4322 = vmatpush2.msra.mxu0 0.0
    %4323 = vmatprep.subr.mxu0 0.0
    %4324 = vmatpush2.msra.mxu0 0.0
    %4325 = vmatprep.subr.mxu0 0.0
    %4326 = vmatpush2.msra.mxu0 0.0
    %4327 = vmatprep.subr.mxu0 0.0
    %4328 = vmatpush2.msra.mxu0 0.0
    %4329 = vmatprep.subr.mxu0 0.0
    %4330 = vmatpush2.msra.mxu0 0.0
    %4331 = vmatprep.subr.mxu0 0.0
    %4332 = vmatpush2.msra.mxu0 0.0
    %4333 = vmatprep.subr.mxu0 0.0
    %4334 = vmatpush2.msra.mxu0 0.0
    %4335 = vmatprep.subr.mxu0 0.0
    %4336 = vmatpush2.msra.mxu0 0.0
    %4337 = vmatprep.subr.mxu0 0.0
    %4338 = vmatpush2.msra.mxu0 0.0
    %4339 = vmatprep.subr.mxu0 0.0
    %4340 = vmatpush2.msra.mxu0 0.0
    %4341 = vmatprep.subr.mxu0 0.0
    %4342 = vmatpush2.msra.mxu0 0.0
    %4343 = vmatprep.mubr.f32.mxu0 0.0
    %4344 = vmatmul.mubr.f32.gmra.mxu0 %v4277
    %v4345 = vpop.f32.mrf.mxu0
    %v4346 = vadd.f32 0.0, %v4345
    %v4347 = vpop.f32.mrf.mxu0
    %4348 = vdwg.mxu0
    %4351 = vrot.lane.b32.xlu0 %v4270, 16
    %v4352 = vpop.permute.xlu0 %4351
    %4353 = vrot.lane.b32.xlu0 %v4346, 16
    %v4354 = vpop.permute.xlu0 %4353
    %v4357 = vsel %vm207, %v4118, %v4352
    %v4358 = vsel %vm207, %v4194, %v4354
    %v4359 = vld [vmem:[%s2400 + $0x14b] sm:$0x1]
    %v4360 = vlaneseq
    %v4361 = vshrl.u32 %v4360, 7
    %v4362 = vsub.s32 0, %v4361
    %v4363 = vrot.slane %v4359, %v4362
    %v4365 = vsel %vm43, %v4357, 0
    %v4368 = vsel %vm43, %v4358, 0
    %4370 = vmatprep.subr.mxu0 0.0
    %4371 = vmatpush1.msra.mxu0 0.0
    %4372 = vmatprep.subr.mxu0 0.0
    %4373 = vmatpush1.msra.mxu0 0.0
    %4374 = vmatprep.subr.mxu0 0.0
    %4375 = vmatpush1.msra.mxu0 0.0
    %4376 = vmatprep.subr.mxu0 0.0
    %4377 = vmatpush1.msra.mxu0 0.0
    %4378 = vmatprep.subr.mxu0 0.0
    %4379 = vmatpush1.msra.mxu0 0.0
    %4380 = vmatprep.subr.mxu0 0.0
    %4381 = vmatpush1.msra.mxu0 0.0
    %4382 = vmatprep.subr.mxu0 0.0
    %4383 = vmatpush1.msra.mxu0 0.0
    %4384 = vmatprep.subr.mxu0 0.0
    %4385 = vmatpush1.msra.mxu0 0.0
    %4386 = vmatprep.subr.mxu0 0.0
    %4387 = vmatpush1.msra.mxu0 0.0
    %4388 = vmatprep.subr.mxu0 0.0
    %4389 = vmatpush1.msra.mxu0 0.0
    %4390 = vmatprep.subr.mxu0 0.0
    %4391 = vmatpush1.msra.mxu0 0.0
    %4392 = vmatprep.subr.mxu0 0.0
    %4393 = vmatpush1.msra.mxu0 0.0
    %4394 = vmatprep.subr.mxu0 0.0
    %4395 = vmatpush1.msra.mxu0 %v3592
    %4396 = vmatprep.subr.mxu0 0.0
    %4397 = vmatpush1.msra.mxu0 %v3591
    %4398 = vmatprep.subr.mxu0 0.0
    %4399 = vmatpush1.msra.mxu0 %v3590
    %4400 = vmatprep.subr.mxu0 0.0
    %4401 = vmatpush1.msra.mxu0 %v3589
    %4402 = vmatprep.subr.mxu0 0.0
    %4403 = vmatpush2.msra.mxu0 0.0
    %4404 = vmatprep.subr.mxu0 0.0
    %4405 = vmatpush2.msra.mxu0 0.0
    %4406 = vmatprep.subr.mxu0 0.0
    %4407 = vmatpush2.msra.mxu0 0.0
    %4408 = vmatprep.subr.mxu0 0.0
    %4409 = vmatpush2.msra.mxu0 0.0
    %4410 = vmatprep.subr.mxu0 0.0
    %4411 = vmatpush2.msra.mxu0 0.0
    %4412 = vmatprep.subr.mxu0 0.0
    %4413 = vmatpush2.msra.mxu0 0.0
    %4414 = vmatprep.subr.mxu0 0.0
    %4415 = vmatpush2.msra.mxu0 0.0
    %4416 = vmatprep.subr.mxu0 0.0
    %4417 = vmatpush2.msra.mxu0 0.0
    %4418 = vmatprep.subr.mxu0 0.0
    %4419 = vmatpush2.msra.mxu0 0.0
    %4420 = vmatprep.subr.mxu0 0.0
    %4421 = vmatpush2.msra.mxu0 0.0
    %4422 = vmatprep.subr.mxu0 0.0
    %4423 = vmatpush2.msra.mxu0 0.0
    %4424 = vmatprep.subr.mxu0 0.0
    %4425 = vmatpush2.msra.mxu0 0.0
    %4426 = vmatprep.subr.mxu0 0.0
    %4427 = vmatpush2.msra.mxu0 0.0
    %4428 = vmatprep.subr.mxu0 0.0
    %4429 = vmatpush2.msra.mxu0 0.0
    %4430 = vmatprep.subr.mxu0 0.0
    %4431 = vmatpush2.msra.mxu0 0.0
    %4432 = vmatprep.subr.mxu0 0.0
    %4433 = vmatpush2.msra.mxu0 0.0
    %4434 = vmatprep.mubr.f32.mxu0 0.0
    %4435 = vmatmul.mubr.f32.gmra.mxu0 %v4365
    %v4436 = vpop.f32.mrf.mxu0
    %v4437 = vadd.f32 %v4363, %v4436
    %v4438 = vpop.f32.mrf.mxu0
    %4439 = vmatprep.mubr.f32.mxu0 0.0
    %4440 = vmatmul.mubr.f32.gmra.mxu0 %v4368
    %v4441 = vpop.f32.mrf.mxu0
    %v4442 = vadd.f32 %v4363, %v4441
    %v4443 = vpop.f32.mrf.mxu0
    %4444 = vdwg.mxu0
    %v4445 = vadd.f32 %v3583, %v4437
    %v4446 = vadd.f32 %v3584, %v4442
    %v4447 = vld [vmem:[%s2400 + $0x14c] sm:$0x1]
    %v4448 = vld [vmem:[%s2400 + $0x14d] sm:$0x1]
    %v4449 = vsel %vm43, %v4445, 0.0
    %4450 = vadd.xlane.f32.xlu0 %v4449
    %v4451 = vpop.xlane.xlu0 %4450
    %v4452 = vsel %vm43, %v4446, 0.0
    %4453 = vadd.xlane.f32.xlu0 %v4452
    %v4454 = vpop.xlane.xlu0 %4453
    %v4455 = vmul.f32 %v4451, %v50
    %v4456 = vmul.f32 %v4454, %v50
    %v4457 = vsub.f32 %v4445, %v4455
    %v4458 = vsub.f32 %v4446, %v4456
    %v4459 = vmul.f32 %v4457, %v4457
    %v4460 = vmul.f32 %v4458, %v4458
    %v4461 = vsel %vm43, %v4459, 0.0
    %4462 = vadd.xlane.f32.xlu0 %v4461
    %v4463 = vpop.xlane.xlu0 %4462
    %v4464 = vsel %vm43, %v4460, 0.0
    %4465 = vadd.xlane.f32.xlu0 %v4464
    %v4466 = vpop.xlane.xlu0 %4465
    %v4467 = vmul.f32 %v4463, %v50
    %v4468 = vmul.f32 %v4466, %v50
    %v4469 = vadd.f32 %v4467, 1e-12
    %v4470 = vadd.f32 %v4468, 1e-12
    %v4471 = vrsqrt.pop %v4469
    %v4472 = vrsqrt.pop %v4470
    %v4473 = vmul.f32 %v4457, %v4471
    %v4474 = vmul.f32 %v4458, %v4472
    %v4475 = vlaneseq
    %v4476 = vshrl.u32 %v4475, 7
    %v4477 = vsub.s32 0, %v4476
    %v4478 = vrot.slane %v4447, %v4477
    %v4479 = vmul.f32 %v4473, %v4478
    %v4480 = vmul.f32 %v4474, %v4478
    %v4481 = vlaneseq
    %v4482 = vshrl.u32 %v4481, 7
    %v4483 = vsub.s32 0, %v4482
    %v4484 = vrot.slane %v4448, %v4483
    %v4485 = vadd.f32 %v4479, %v4484
    %v4486 = vadd.f32 %v4480, %v4484
    %v4487 = vld [vmem:[%s2400 + $0x14e] sm:$0x1]
    %v4488 = vlaneseq
    %v4489 = vshrl.u32 %v4488, 7
    %v4490 = vsub.s32 0, %v4489
    %v4491 = vrot.slane %v4487, %v4490
    %v4493 = vsel %vm43, %v4485, 0
    %v4496 = vsel %vm43, %v4486, 0
    %4498 = vmatprep.subr.mxu0 0.0
    %4499 = vmatpush1.msra.mxu0 0.0
    %4500 = vmatprep.subr.mxu0 0.0
    %4501 = vmatpush1.msra.mxu0 0.0
    %4502 = vmatprep.subr.mxu0 0.0
    %4503 = vmatpush1.msra.mxu0 0.0
    %4504 = vmatprep.subr.mxu0 0.0
    %4505 = vmatpush1.msra.mxu0 0.0
    %4506 = vmatprep.subr.mxu0 0.0
    %4507 = vmatpush1.msra.mxu0 0.0
    %4508 = vmatprep.subr.mxu0 0.0
    %4509 = vmatpush1.msra.mxu0 0.0
    %4510 = vmatprep.subr.mxu0 0.0
    %4511 = vmatpush1.msra.mxu0 0.0
    %4512 = vmatprep.subr.mxu0 0.0
    %4513 = vmatpush1.msra.mxu0 0.0
    %4514 = vmatprep.subr.mxu0 0.0
    %4515 = vmatpush1.msra.mxu0 0.0
    %4516 = vmatprep.subr.mxu0 0.0
    %4517 = vmatpush1.msra.mxu0 0.0
    %4518 = vmatprep.subr.mxu0 0.0
    %4519 = vmatpush1.msra.mxu0 0.0
    %4520 = vmatprep.subr.mxu0 0.0
    %4521 = vmatpush1.msra.mxu0 0.0
    %4522 = vmatprep.subr.mxu0 0.0
    %4523 = vmatpush1.msra.mxu0 %v3596
    %4524 = vmatprep.subr.mxu0 0.0
    %4525 = vmatpush1.msra.mxu0 %v3595
    %4526 = vmatprep.subr.mxu0 0.0
    %4527 = vmatpush1.msra.mxu0 %v3594
    %4528 = vmatprep.subr.mxu0 0.0
    %4529 = vmatpush1.msra.mxu0 %v3593
    %4530 = vmatprep.subr.mxu0 0.0
    %4531 = vmatpush2.msra.mxu0 0.0
    %4532 = vmatprep.subr.mxu0 0.0
    %4533 = vmatpush2.msra.mxu0 0.0
    %4534 = vmatprep.subr.mxu0 0.0
    %4535 = vmatpush2.msra.mxu0 0.0
    %4536 = vmatprep.subr.mxu0 0.0
    %4537 = vmatpush2.msra.mxu0 0.0
    %4538 = vmatprep.subr.mxu0 0.0
    %4539 = vmatpush2.msra.mxu0 0.0
    %4540 = vmatprep.subr.mxu0 0.0
    %4541 = vmatpush2.msra.mxu0 0.0
    %4542 = vmatprep.subr.mxu0 0.0
    %4543 = vmatpush2.msra.mxu0 0.0
    %4544 = vmatprep.subr.mxu0 0.0
    %4545 = vmatpush2.msra.mxu0 0.0
    %4546 = vmatprep.subr.mxu0 0.0
    %4547 = vmatpush2.msra.mxu0 0.0
    %4548 = vmatprep.subr.mxu0 0.0
    %4549 = vmatpush2.msra.mxu0 0.0
    %4550 = vmatprep.subr.mxu0 0.0
    %4551 = vmatpush2.msra.mxu0 0.0
    %4552 = vmatprep.subr.mxu0 0.0
    %4553 = vmatpush2.msra.mxu0 0.0
    %4554 = vmatprep.subr.mxu0 0.0
    %4555 = vmatpush2.msra.mxu0 0.0
    %4556 = vmatprep.subr.mxu0 0.0
    %4557 = vmatpush2.msra.mxu0 0.0
    %4558 = vmatprep.subr.mxu0 0.0
    %4559 = vmatpush2.msra.mxu0 0.0
    %4560 = vmatprep.subr.mxu0 0.0
    %4561 = vmatpush2.msra.mxu0 0.0
    %4562 = vmatprep.mubr.f32.mxu0 0.0
    %4563 = vmatmul.mubr.f32.gmra.mxu0 %v4493
    %v4564 = vpop.f32.mrf.mxu0
    %v4565 = vadd.f32 %v4491, %v4564
    %v4566 = vpop.f32.mrf.mxu0
    %4567 = vmatprep.mubr.f32.mxu0 0.0
    %4568 = vmatmul.mubr.f32.gmra.mxu0 %v4496
    %v4569 = vpop.f32.mrf.mxu0
    %v4570 = vadd.f32 %v4491, %v4569
    %v4571 = vpop.f32.mrf.mxu0
    %4572 = vdwg.mxu0
    %v4573 = vmul.f32 %v4565, %v4565
    %v4574 = vmul.f32 %v4570, %v4570
    %v4575 = vmul.f32 %v4565, %v4573
    %v4576 = vmul.f32 %v4570, %v4574
    %v4577 = vmul.f32 %v4575, 0.044715
    %v4578 = vmul.f32 %v4576, 0.044715
    %v4579 = vadd.f32 %v4565, %v4577
    %v4580 = vadd.f32 %v4570, %v4578
    %v4581 = vmul.f32 %v4579, 0.7978846
    %v4582 = vmul.f32 %v4580, 0.7978846
    %v4583 = vtanh.pop %v4581
    %v4584 = vtanh.pop %v4582
    %v4585 = vadd.f32 %v4583, 1.0
    %v4586 = vadd.f32 %v4584, 1.0
    %v4587 = vmul.f32 %v4585, 0.5
    %v4588 = vmul.f32 %v4586, 0.5
    %v4589 = vmul.f32 %v4565, %v4587
    %v4590 = vmul.f32 %v4570, %v4588
    %v4591 = vld [vmem:[%s2400 + $0x14f] sm:$0x1]
    %v4592 = vlaneseq
    %v4593 = vshrl.u32 %v4592, 7
    %v4594 = vsub.s32 0, %v4593
    %v4595 = vrot.slane %v4591, %v4594
    %v4597 = vsel %vm1106, %v4589, 0
    %v4600 = vsel %vm1106, %v4590, 0
    %4602 = vmatprep.subr.mxu0 0.0
    %4603 = vmatpush1.msra.mxu0 0.0
    %4604 = vmatprep.subr.mxu0 0.0
    %4605 = vmatpush1.msra.mxu0 0.0
    %4606 = vmatprep.subr.mxu0 0.0
    %4607 = vmatpush1.msra.mxu0 0.0
    %4608 = vmatprep.subr.mxu0 0.0
    %4609 = vmatpush1.msra.mxu0 0.0
    %4610 = vmatprep.subr.mxu0 0.0
    %4611 = vmatpush1.msra.mxu0 0.0
    %4612 = vmatprep.subr.mxu0 0.0
    %4613 = vmatpush1.msra.mxu0 0.0
    %4614 = vmatprep.subr.mxu0 0.0
    %4615 = vmatpush1.msra.mxu0 0.0
    %4616 = vmatprep.subr.mxu0 0.0
    %4617 = vmatpush1.msra.mxu0 0.0
    %4618 = vmatprep.subr.mxu0 0.0
    %4619 = vmatpush1.msra.mxu0 %v3604
    %4620 = vmatprep.subr.mxu0 0.0
    %4621 = vmatpush1.msra.mxu0 %v3603
    %4622 = vmatprep.subr.mxu0 0.0
    %4623 = vmatpush1.msra.mxu0 %v3602
    %4624 = vmatprep.subr.mxu0 0.0
    %4625 = vmatpush1.msra.mxu0 %v3601
    %4626 = vmatprep.subr.mxu0 0.0
    %4627 = vmatpush1.msra.mxu0 %v3600
    %4628 = vmatprep.subr.mxu0 0.0
    %4629 = vmatpush1.msra.mxu0 %v3599
    %4630 = vmatprep.subr.mxu0 0.0
    %4631 = vmatpush1.msra.mxu0 %v3598
    %4632 = vmatprep.subr.mxu0 0.0
    %4633 = vmatpush1.msra.mxu0 %v3597
    %4634 = vmatprep.subr.mxu0 0.0
    %4635 = vmatpush2.msra.mxu0 0.0
    %4636 = vmatprep.subr.mxu0 0.0
    %4637 = vmatpush2.msra.mxu0 0.0
    %4638 = vmatprep.subr.mxu0 0.0
    %4639 = vmatpush2.msra.mxu0 0.0
    %4640 = vmatprep.subr.mxu0 0.0
    %4641 = vmatpush2.msra.mxu0 0.0
    %4642 = vmatprep.subr.mxu0 0.0
    %4643 = vmatpush2.msra.mxu0 0.0
    %4644 = vmatprep.subr.mxu0 0.0
    %4645 = vmatpush2.msra.mxu0 0.0
    %4646 = vmatprep.subr.mxu0 0.0
    %4647 = vmatpush2.msra.mxu0 0.0
    %4648 = vmatprep.subr.mxu0 0.0
    %4649 = vmatpush2.msra.mxu0 0.0
    %4650 = vmatprep.subr.mxu0 0.0
    %4651 = vmatpush2.msra.mxu0 0.0
    %4652 = vmatprep.subr.mxu0 0.0
    %4653 = vmatpush2.msra.mxu0 0.0
    %4654 = vmatprep.subr.mxu0 0.0
    %4655 = vmatpush2.msra.mxu0 0.0
    %4656 = vmatprep.subr.mxu0 0.0
    %4657 = vmatpush2.msra.mxu0 0.0
    %4658 = vmatprep.subr.mxu0 0.0
    %4659 = vmatpush2.msra.mxu0 0.0
    %4660 = vmatprep.subr.mxu0 0.0
    %4661 = vmatpush2.msra.mxu0 0.0
    %4662 = vmatprep.subr.mxu0 0.0
    %4663 = vmatpush2.msra.mxu0 0.0
    %4664 = vmatprep.subr.mxu0 0.0
    %4665 = vmatpush2.msra.mxu0 0.0
    %4666 = vmatprep.mubr.f32.mxu0 0.0
    %4667 = vmatmul.mubr.f32.gmra.mxu0 %v4597
    %v4668 = vpop.f32.mrf.mxu0
    %v4669 = vadd.f32 %v4595, %v4668
    %v4670 = vpop.f32.mrf.mxu0
    %4671 = vmatprep.mubr.f32.mxu0 0.0
    %4672 = vmatmul.mubr.f32.gmra.mxu0 %v4600
    %v4673 = vpop.f32.mrf.mxu0
    %v4674 = vadd.f32 %v4595, %v4673
    %v4675 = vpop.f32.mrf.mxu0
    %4676 = vdwg.mxu0
    %v4677 = vadd.f32 %v4485, %v4669
    %v4678 = vadd.f32 %v4486, %v4674
    %v4679 = vld [vmem:[%s2400 + $0x150] sm:$0x1]
    %v4680 = vld [vmem:[%s2400 + $0x151] sm:$0x1]
    %v4681 = vsel %vm43, %v4677, 0.0
    %4682 = vadd.xlane.f32.xlu0 %v4681
    %v4683 = vpop.xlane.xlu0 %4682
    %v4684 = vsel %vm43, %v4678, 0.0
    %4685 = vadd.xlane.f32.xlu0 %v4684
    %v4686 = vpop.xlane.xlu0 %4685
    %v4687 = vmul.f32 %v4683, %v50
    %v4688 = vmul.f32 %v4686, %v50
    %v4689 = vsub.f32 %v4677, %v4687
    %v4690 = vsub.f32 %v4678, %v4688
    %v4691 = vmul.f32 %v4689, %v4689
    %v4692 = vmul.f32 %v4690, %v4690
    %v4693 = vsel %vm43, %v4691, 0.0
    %4694 = vadd.xlane.f32.xlu0 %v4693
    %v4695 = vpop.xlane.xlu0 %4694
    %v4696 = vsel %vm43, %v4692, 0.0
    %4697 = vadd.xlane.f32.xlu0 %v4696
    %v4698 = vpop.xlane.xlu0 %4697
    %v4699 = vmul.f32 %v4695, %v50
    %v4700 = vmul.f32 %v4698, %v50
    %v4701 = vadd.f32 %v4699, 1e-12
    %v4702 = vadd.f32 %v4700, 1e-12
    %v4703 = vrsqrt.pop %v4701
    %v4704 = vrsqrt.pop %v4702
    %v4705 = vmul.f32 %v4689, %v4703
    %v4706 = vmul.f32 %v4690, %v4704
    %v4707 = vlaneseq
    %v4708 = vshrl.u32 %v4707, 7
    %v4709 = vsub.s32 0, %v4708
    %v4710 = vrot.slane %v4679, %v4709
    %v4711 = vmul.f32 %v4705, %v4710
    %v4712 = vmul.f32 %v4706, %v4710
    %v4713 = vlaneseq
    %v4714 = vshrl.u32 %v4713, 7
    %v4715 = vsub.s32 0, %v4714
    %v4716 = vrot.slane %v4680, %v4715
    %v4717 = vadd.f32 %v4711, %v4716
    %v4718 = vadd.f32 %v4712, %v4716
    %v4721 = vrot.slane %v4718, 7
    %v4722 = vsel %vm2367, %v4721, %v4717
    %s4724 = scalar_lea.vmem [#allocation2], 2
    %4725 = vst.msk [vmem:[%s4724] sm:$0x3] %vm2370, %v4722
    // Predicated region
    $region14: #{tpu_custom_call.1} parent=1 // pred_check
      _
    $region15: #{tpu_custom_call.1} parent=1 // pred_check_branch
      %4727 = sbr.rel (0) target = $region17
    $region16: #{tpu_custom_call.1} parent=1 // pred_region
      %s4729 = ssub.s32 64, 64
      %4730 = vsyncadd [#allocation3], %s4729
      %s4731 = sshll.u32 [#allocation2], 4
      %s4732 = int_to_ptr.vmem [resolvable:$true] %s4731
      %4737 = dma.vmem_to_hbm [thread:$0]  %s4732, 64, %s3, [#allocation3], 32, 32, 2
    $region17: #{tpu_custom_call.1} parent=1 // pred_fallthru
      _
    // Predicated region
    $region18: #{tpu_custom_call.1} parent=1 // pred_check
      _
    $region19: #{tpu_custom_call.1} parent=1 // pred_check_branch
      %4739 = sbr.rel (0) target = $region21
    $region20: #{tpu_custom_call.1} parent=1 // pred_region
      %4740 = dma.done [#allocation3], 64
    $region21: #{tpu_custom_call.1} parent=1 // pred_fallthru
      _
    %4741 = vsyncpa [#allocation3], 1

</llo_original>
